<compile_context>
chip_gen: v5e
topology: v5e:2x2
jax: 0.10.0
libtpu: 0.0.40
codegen_flags: <defaults>
</compile_context>

<pallas_src>
import functools

import jax
import jax.numpy as jnp
from jax.experimental import pallas as pl
from jax.experimental.pallas import tpu as pltpu


def _conv3x3_bn(pad_ref, w_ref, scale, bias, h_out, w_out, stride, mm_dtype):
    """3x3 conv + folded BatchNorm over the zero-halo scratch `pad_ref`
    ((H+2, W+2, C) float32), evaluated at `stride`-spaced output positions.

    The 9 taps are concatenated along channels and contracted in a single MXU
    matmul with K = 9*C; `w_ref` is the pre-reshaped (9*C, Cout) weight whose
    row order is (kh-major, kw, cin), matching the tap concatenation order.
    Returns a float32 (h_out, w_out, Cout) array.
    """
    taps = []
    for kh in range(3):
        for kw in range(3):
            if stride == 1:
                t = pad_ref[pl.ds(kh, h_out), pl.ds(kw, w_out), :]
            else:
                t = pad_ref[pl.ds(kh, h_out, stride=stride),
                            pl.ds(kw, w_out, stride=stride), :]
            taps.append(t)
    patches = jnp.concatenate(taps, axis=-1).astype(mm_dtype)  # (h, w, 9C)
    y = jax.lax.dot_general(
        patches, w_ref[...],
        dimension_numbers=(((2,), (0,)), ((), ())),
        preferred_element_type=jnp.float32)                    # (h, w, Cout)
    return y * scale + bias


def conv3_kernel(x_ref, w2_ref, s2_ref, b2_ref, w3_ref, s3_ref, b3_ref,
                 w4_ref, s4_ref, b4_ref, o_ref, pad_ref,
                 *, H, W, C, stride, mm_dtype):
    f32 = jnp.float32
    Ho, Wo = H // stride, W // stride

    # Zero only the 1-pixel halo; the interior is fully overwritten before each
    # conv reads it.  Done every grid step (not under pl.when) so the kernel
    # stays correct when the "parallel" batch axis is split across TensorCores
    # (each core has its own, initially uninitialised, scratch).
    pad_ref[pl.ds(0, 1), :, :] = jnp.zeros((1, W + 2, C), f32)
    pad_ref[pl.ds(H + 1, 1), :, :] = jnp.zeros((1, W + 2, C), f32)
    pad_ref[:, pl.ds(0, 1), :] = jnp.zeros((H + 2, 1, C), f32)
    pad_ref[:, pl.ds(W + 1, 1), :] = jnp.zeros((H + 2, 1, C), f32)

    s2, b2 = s2_ref[...], b2_ref[...]
    s3, b3 = s3_ref[...], b3_ref[...]
    s4, b4 = s4_ref[...], b4_ref[...]

    # ---- k2(x), residual add, sigmoid --------------------------------------
    # k2 is stride-1 / pad-1 so it preserves spatial size and the
    # F.interpolate in the PyTorch reference is the identity.
    x0 = x_ref[0].astype(f32)                                   # (H, W, C)
    pad_ref[pl.ds(1, H), pl.ds(1, W), :] = x0
    y2 = _conv3x3_bn(pad_ref, w2_ref, s2, b2, H, W, 1, mm_dtype)
    out1 = jax.nn.sigmoid(x0 + y2)                              # f32 (H, W, C)

    # ---- k3(out1) * out1 ----------------------------------------------------
    pad_ref[pl.ds(1, H), pl.ds(1, W), :] = out1
    y3 = _conv3x3_bn(pad_ref, w3_ref, s3, b3, H, W, 1, mm_dtype)
    out2 = y3 * out1                                            # f32 (H, W, C)

    # ---- k4(out2), evaluated directly at the strided output positions ------
    pad_ref[pl.ds(1, H), pl.ds(1, W), :] = out2
    y4 = _conv3x3_bn(pad_ref, w4_ref, s4, b4, Ho, Wo, stride, mm_dtype)
    o_ref[0] = y4.astype(o_ref.dtype)


def _prep_conv_bn(w_oihw, scale, bias, mm_dtype):
    """PyTorch (Cout, Cin, 3, 3) weight -> (9*Cin, Cout) matmul weight whose row
    order (kh-major, kw, cin) matches the kernel's tap concatenation order."""
    cout, cin, kh, kw = w_oihw.shape
    w2d = jnp.transpose(w_oihw, (2, 3, 1, 0)).reshape(kh * kw * cin, cout)
    return (w2d.astype(mm_dtype),
            scale.reshape(1, cout).astype(jnp.float32),
            bias.reshape(1, cout).astype(jnp.float32))


def conv3_forward(x_nchw, params, *, stride, mm_dtype=jnp.bfloat16):
    """params = ((w2, scale2, bias2), (w3, ...), (w4, ...)) with w*: (C, C, 3, 3)
    (PyTorch OIHW layout) and scale*/bias*: (C,) folded eval-mode BatchNorm."""
    N, C, H, W = x_nchw.shape
    assert H % stride == 0 and W % stride == 0
    Ho, Wo = H // stride, W // stride

    # NCHW -> NHWC for the kernel.  (If the surrounding graph already produces
    # NHWC these transposes disappear.)  No jnp.pad pass: the halo lives in the
    # kernel's VMEM scratch.
    x = jnp.transpose(x_nchw, (0, 2, 3, 1))

    (w2, s2, b2), (w3, s3, b3), (w4, s4, b4) = (
        _prep_conv_bn(*p, mm_dtype) for p in params)

    kernel = functools.partial(conv3_kernel, H=H, W=W, C=C, stride=stride,
                               mm_dtype=mm_dtype)

    def bcast(shape):
        return pl.BlockSpec(shape, lambda n: (0,) * len(shape))

    y = pl.pallas_call(
        kernel,
        out_shape=jax.ShapeDtypeStruct((N, Ho, Wo, C), x.dtype),
        grid_spec=pltpu.PrefetchScalarGridSpec(
            num_scalar_prefetch=0,
            grid=(N,),
            in_specs=[
                pl.BlockSpec((1, H, W, C), lambda n: (n, 0, 0, 0)),
                bcast((9 * C, C)), bcast((1, C)), bcast((1, C)),
                bcast((9 * C, C)), bcast((1, C)), bcast((1, C)),
                bcast((9 * C, C)), bcast((1, C)), bcast((1, C)),
            ],
            out_specs=pl.BlockSpec((1, Ho, Wo, C), lambda n: (n, 0, 0, 0)),
            scratch_shapes=[pltpu.VMEM((H + 2, W + 2, C), jnp.float32)],
        ),
        compiler_params=pltpu.CompilerParams(
            dimension_semantics=("parallel",),
            # Raise the scoped-VMEM cap (defaults: 16 MiB v5e / 32 MiB v6e,v7x)
            # so larger H, W, C configurations of this block still compile.
            vmem_limit_bytes=64 * 1024 * 1024),
    )(x, w2, s2, b2, w3, s3, b3, w4, s4, b4)

    return jnp.transpose(y, (0, 3, 1, 2))                       # NHWC -> NCHW


def conv3_reference(x_nchw, params, *, stride):
    """Pure-XLA f32 reference of the PyTorch module (highest precision)."""
    def conv_bn(x, w, scale, bias, s):
        y = jax.lax.conv_general_dilated(
            x, w, window_strides=(s, s), padding=((1, 1), (1, 1)),
            dimension_numbers=("NCHW", "OIHW", "NCHW"),
            precision=jax.lax.Precision.HIGHEST)
        return y * scale.reshape(1, -1, 1, 1) + bias.reshape(1, -1, 1, 1)

    (w2, s2, b2), (w3, s3, b3), (w4, s4, b4) = params
    out1 = jax.nn.sigmoid(x_nchw + conv_bn(x_nchw, w2, s2, b2, 1))
    out2 = conv_bn(out1, w3, s3, b3, 1) * out1
    return conv_bn(out2, w4, s4, b4, stride)


def init_params(key, C):
    """Deterministic synthetic weights.  BatchNorm2d (eval mode) is folded:
    scale = gamma / sqrt(running_var + eps), bias = beta - running_mean*scale."""
    def conv_bn(k):
        k1, k2, k3, k4, k5 = jax.random.split(k, 5)
        w = 0.1 * jax.random.normal(k1, (C, C, 3, 3), jnp.float32)   # OIHW
        gamma = 1.0 + 0.1 * jax.random.normal(k2, (C,), jnp.float32)
        beta = 0.1 * jax.random.normal(k3, (C,), jnp.float32)
        mean = 0.1 * jax.random.normal(k4, (C,), jnp.float32)
        var = 1.0 + jnp.abs(jax.random.normal(k5, (C,), jnp.float32))
        scale = gamma / jnp.sqrt(var + 1e-5)
        bias = beta - mean * scale
        return w, scale, bias

    return tuple(conv_bn(k) for k in jax.random.split(key, 3))


if __name__ == "__main__":
    key = jax.random.PRNGKey(0)
    kx, kp = jax.random.split(key)

    N, C, H, W = 2, 4, 16, 16      # inplanes == planes (required by residual add)
    stride = 2                     # k4 stride

    x = jax.random.normal(kx, (N, C, H, W), jnp.float32)
    params = init_params(kp, C)

    fwd = jax.jit(functools.partial(conv3_forward, stride=stride))
    y = fwd(x, params)
    jax.block_until_ready(y)
    assert y.shape == (N, C, H // stride, W // stride), y.shape

    # Numerical check vs a plain-XLA reference (loose bounds: the kernel uses
    # bf16 MXU operands with f32 accumulation).
    y_ref = conv3_reference(x, params, stride=stride)
    diff = jnp.abs(y - y_ref)
    max_err = float(jnp.max(diff))
    mean_err = float(jnp.mean(diff))
    assert max_err < 0.3 and mean_err < 0.03, (max_err, mean_err)

    print("KERNEL_OK")
</pallas_src>

<mosaic_0001>
module attributes {stable_mosaic.version = 11 : i64} {
  func.func @conv3_kernel(%arg0: i32, %arg1: memref<1x16x16x4xf32, #tpu.memory_space<vmem>>, %arg2: memref<36x4xbf16, #tpu.memory_space<vmem>>, %arg3: memref<1x4xf32, #tpu.memory_space<vmem>>, %arg4: memref<1x4xf32, #tpu.memory_space<vmem>>, %arg5: memref<36x4xbf16, #tpu.memory_space<vmem>>, %arg6: memref<1x4xf32, #tpu.memory_space<vmem>>, %arg7: memref<1x4xf32, #tpu.memory_space<vmem>>, %arg8: memref<36x4xbf16, #tpu.memory_space<vmem>>, %arg9: memref<1x4xf32, #tpu.memory_space<vmem>>, %arg10: memref<1x4xf32, #tpu.memory_space<vmem>>, %arg11: memref<1x8x8x4xf32, #tpu.memory_space<vmem>>, %arg12: memref<18x18x4xf32, #tpu.memory_space<vmem>>) attributes {dimension_semantics = [#tpu.dimension_semantics<parallel>], iteration_bounds = array<i64: 2>, scalar_prefetch = 0 : i64, scratch_operands = 1 : i64, tpu.core_type = #tpu.core_type<tc>, window_params = [{transform_indices = @transform_0, window_bounds = array<i64: 1, 16, 16, 4>}, {pipeline_mode = #tpu.pipeline_mode<synchronous>, transform_indices = @transform_1, window_bounds = array<i64: 36, 4>}, {pipeline_mode = #tpu.pipeline_mode<synchronous>, transform_indices = @transform_2, window_bounds = array<i64: 1, 4>}, {pipeline_mode = #tpu.pipeline_mode<synchronous>, transform_indices = @transform_3, window_bounds = array<i64: 1, 4>}, {pipeline_mode = #tpu.pipeline_mode<synchronous>, transform_indices = @transform_4, window_bounds = array<i64: 36, 4>}, {pipeline_mode = #tpu.pipeline_mode<synchronous>, transform_indices = @transform_5, window_bounds = array<i64: 1, 4>}, {pipeline_mode = #tpu.pipeline_mode<synchronous>, transform_indices = @transform_6, window_bounds = array<i64: 1, 4>}, {pipeline_mode = #tpu.pipeline_mode<synchronous>, transform_indices = @transform_7, window_bounds = array<i64: 36, 4>}, {pipeline_mode = #tpu.pipeline_mode<synchronous>, transform_indices = @transform_8, window_bounds = array<i64: 1, 4>}, {pipeline_mode = #tpu.pipeline_mode<synchronous>, transform_indices = @transform_9, window_bounds = array<i64: 1, 4>}, {transform_indices = @transform_10, window_bounds = array<i64: 1, 8, 8, 4>}]} {
    %cst = arith.constant 0.000000e+00 : f32
    %0 = vector.broadcast %cst : f32 to vector<1x18x4xf32>
    %c0 = arith.constant 0 : index
    %c0_0 = arith.constant 0 : index
    %c0_1 = arith.constant 0 : index
    %1 = vector.load %arg12[%c0, %c0_0, %c0_1] : memref<18x18x4xf32, #tpu.memory_space<vmem>>, vector<1x18x4xf32>
    tpu.vector_store %arg12[%c0, %c0_0, %c0_1], %0 {strides = array<i32>} : memref<18x18x4xf32, #tpu.memory_space<vmem>>, vector<1x18x4xf32>,
    %cst_2 = arith.constant 0.000000e+00 : f32
    %2 = vector.broadcast %cst_2 : f32 to vector<1x18x4xf32>
    %c17 = arith.constant 17 : index
    %c0_3 = arith.constant 0 : index
    %c0_4 = arith.constant 0 : index
    %3 = vector.load %arg12[%c17, %c0_3, %c0_4] : memref<18x18x4xf32, #tpu.memory_space<vmem>>, vector<1x18x4xf32>
    tpu.vector_store %arg12[%c17, %c0_3, %c0_4], %2 {strides = array<i32>} : memref<18x18x4xf32, #tpu.memory_space<vmem>>, vector<1x18x4xf32>,
    %cst_5 = arith.constant 0.000000e+00 : f32
    %4 = vector.broadcast %cst_5 : f32 to vector<18x1x4xf32>
    %c0_6 = arith.constant 0 : index
    %c0_7 = arith.constant 0 : index
    %c0_8 = arith.constant 0 : index
    %5 = vector.load %arg12[%c0_6, %c0_7, %c0_8] : memref<18x18x4xf32, #tpu.memory_space<vmem>>, vector<18x1x4xf32>
    tpu.vector_store %arg12[%c0_6, %c0_7, %c0_8], %4 {strides = array<i32>} : memref<18x18x4xf32, #tpu.memory_space<vmem>>, vector<18x1x4xf32>,
    %cst_9 = arith.constant 0.000000e+00 : f32
    %6 = vector.broadcast %cst_9 : f32 to vector<18x1x4xf32>
    %c0_10 = arith.constant 0 : index
    %c17_11 = arith.constant 17 : index
    %c0_12 = arith.constant 0 : index
    %7 = vector.load %arg12[%c0_10, %c17_11, %c0_12] : memref<18x18x4xf32, #tpu.memory_space<vmem>>, vector<18x1x4xf32>
    tpu.vector_store %arg12[%c0_10, %c17_11, %c0_12], %6 {strides = array<i32>} : memref<18x18x4xf32, #tpu.memory_space<vmem>>, vector<18x1x4xf32>,
    %c0_13 = arith.constant 0 : index
    %c0_14 = arith.constant 0 : index
    %8 = vector.load %arg3[%c0_13, %c0_14] : memref<1x4xf32, #tpu.memory_space<vmem>>, vector<1x4xf32>
    %c0_15 = arith.constant 0 : index
    %c0_16 = arith.constant 0 : index
    %9 = vector.load %arg4[%c0_15, %c0_16] : memref<1x4xf32, #tpu.memory_space<vmem>>, vector<1x4xf32>
    %c0_17 = arith.constant 0 : index
    %c0_18 = arith.constant 0 : index
    %10 = vector.load %arg6[%c0_17, %c0_18] : memref<1x4xf32, #tpu.memory_space<vmem>>, vector<1x4xf32>
    %c0_19 = arith.constant 0 : index
    %c0_20 = arith.constant 0 : index
    %11 = vector.load %arg7[%c0_19, %c0_20] : memref<1x4xf32, #tpu.memory_space<vmem>>, vector<1x4xf32>
    %c0_21 = arith.constant 0 : index
    %c0_22 = arith.constant 0 : index
    %12 = vector.load %arg9[%c0_21, %c0_22] : memref<1x4xf32, #tpu.memory_space<vmem>>, vector<1x4xf32>
    %c0_23 = arith.constant 0 : index
    %c0_24 = arith.constant 0 : index
    %13 = vector.load %arg10[%c0_23, %c0_24] : memref<1x4xf32, #tpu.memory_space<vmem>>, vector<1x4xf32>
    %c0_25 = arith.constant 0 : index
    %c0_26 = arith.constant 0 : index
    %c0_27 = arith.constant 0 : index
    %c0_28 = arith.constant 0 : index
    %14 = vector.load %arg1[%c0_25, %c0_26, %c0_27, %c0_28] : memref<1x16x16x4xf32, #tpu.memory_space<vmem>>, vector<1x16x16x4xf32>
    %15 = vector.shape_cast %14 : vector<1x16x16x4xf32> to vector<16x16x4xf32>
    %c1 = arith.constant 1 : index
    %c1_29 = arith.constant 1 : index
    %c0_30 = arith.constant 0 : index
    %16 = vector.load %arg12[%c1, %c1_29, %c0_30] : memref<18x18x4xf32, #tpu.memory_space<vmem>>, vector<16x16x4xf32>
    tpu.vector_store %arg12[%c1, %c1_29, %c0_30], %15 {strides = array<i32>} : memref<18x18x4xf32, #tpu.memory_space<vmem>>, vector<16x16x4xf32>,
    %c0_31 = arith.constant 0 : index
    %c0_32 = arith.constant 0 : index
    %c0_33 = arith.constant 0 : index
    %17 = vector.load %arg12[%c0_31, %c0_32, %c0_33] : memref<18x18x4xf32, #tpu.memory_space<vmem>>, vector<16x16x4xf32>
    %c0_34 = arith.constant 0 : index
    %c1_35 = arith.constant 1 : index
    %c0_36 = arith.constant 0 : index
    %18 = vector.load %arg12[%c0_34, %c1_35, %c0_36] : memref<18x18x4xf32, #tpu.memory_space<vmem>>, vector<16x16x4xf32>
    %c0_37 = arith.constant 0 : index
    %c2 = arith.constant 2 : index
    %c0_38 = arith.constant 0 : index
    %19 = vector.load %arg12[%c0_37, %c2, %c0_38] : memref<18x18x4xf32, #tpu.memory_space<vmem>>, vector<16x16x4xf32>
    %c1_39 = arith.constant 1 : index
    %c0_40 = arith.constant 0 : index
    %c0_41 = arith.constant 0 : index
    %20 = vector.load %arg12[%c1_39, %c0_40, %c0_41] : memref<18x18x4xf32, #tpu.memory_space<vmem>>, vector<16x16x4xf32>
    %c1_42 = arith.constant 1 : index
    %c1_43 = arith.constant 1 : index
    %c0_44 = arith.constant 0 : index
    %21 = vector.load %arg12[%c1_42, %c1_43, %c0_44] : memref<18x18x4xf32, #tpu.memory_space<vmem>>, vector<16x16x4xf32>
    %c1_45 = arith.constant 1 : index
    %c2_46 = arith.constant 2 : index
    %c0_47 = arith.constant 0 : index
    %22 = vector.load %arg12[%c1_45, %c2_46, %c0_47] : memref<18x18x4xf32, #tpu.memory_space<vmem>>, vector<16x16x4xf32>
    %c2_48 = arith.constant 2 : index
    %c0_49 = arith.constant 0 : index
    %c0_50 = arith.constant 0 : index
    %23 = vector.load %arg12[%c2_48, %c0_49, %c0_50] : memref<18x18x4xf32, #tpu.memory_space<vmem>>, vector<16x16x4xf32>
    %c2_51 = arith.constant 2 : index
    %c1_52 = arith.constant 1 : index
    %c0_53 = arith.constant 0 : index
    %24 = vector.load %arg12[%c2_51, %c1_52, %c0_53] : memref<18x18x4xf32, #tpu.memory_space<vmem>>, vector<16x16x4xf32>
    %c2_54 = arith.constant 2 : index
    %c2_55 = arith.constant 2 : index
    %c0_56 = arith.constant 0 : index
    %25 = vector.load %arg12[%c2_54, %c2_55, %c0_56] : memref<18x18x4xf32, #tpu.memory_space<vmem>>, vector<16x16x4xf32>
    %26 = tpu.concatenate %17, %18, %19, %20, %21, %22, %23, %24, %25 in 2 : vector<16x16x4xf32>, vector<16x16x4xf32>, vector<16x16x4xf32>, vector<16x16x4xf32>, vector<16x16x4xf32>, vector<16x16x4xf32>, vector<16x16x4xf32>, vector<16x16x4xf32>, vector<16x16x4xf32> -> vector<16x16x36xf32>
    %27 = arith.truncf %26 : vector<16x16x36xf32> to vector<16x16x36xbf16>
    %c0_57 = arith.constant 0 : index
    %c0_58 = arith.constant 0 : index
    %28 = vector.load %arg2[%c0_57, %c0_58] : memref<36x4xbf16, #tpu.memory_space<vmem>>, vector<36x4xbf16>
    %cst_59 = arith.constant dense<0.000000e+00> : vector<16x16x4xf32>
    %29 = tpu.matmul %27, %28, %cst_59 {dimension_numbers = #tpu.dot_dimension_numbers<[2], [0], [0, 1], [1], [0, 0, 0, 1, 1, 1], [], []>} : vector<16x16x36xbf16>, vector<36x4xbf16>, vector<16x16x4xf32> -> vector<16x16x4xf32>
    %30 = vector.shape_cast %8 : vector<1x4xf32> to vector<1x1x4xf32>
    %31 = vector.broadcast %30 : vector<1x1x4xf32> to vector<16x16x4xf32>
    %32 = arith.mulf %29, %31 : vector<16x16x4xf32>
    %33 = vector.shape_cast %9 : vector<1x4xf32> to vector<1x1x4xf32>
    %34 = vector.broadcast %33 : vector<1x1x4xf32> to vector<16x16x4xf32>
    %35 = arith.addf %32, %34 : vector<16x16x4xf32>
    %36 = arith.addf %15, %35 : vector<16x16x4xf32>
    %37 = arith.negf %36 : vector<16x16x4xf32>
    %38 = math.exp %37 : vector<16x16x4xf32>
    %cst_60 = arith.constant 1.000000e+00 : f32
    %39 = vector.broadcast %cst_60 : f32 to vector<16x16x4xf32>
    %40 = arith.addf %39, %38 : vector<16x16x4xf32>
    %41 = arith.divf %39, %40 : vector<16x16x4xf32>
    %c1_61 = arith.constant 1 : index
    %c1_62 = arith.constant 1 : index
    %c0_63 = arith.constant 0 : index
    %42 = vector.load %arg12[%c1_61, %c1_62, %c0_63] : memref<18x18x4xf32, #tpu.memory_space<vmem>>, vector<16x16x4xf32>
    tpu.vector_store %arg12[%c1_61, %c1_62, %c0_63], %41 {strides = array<i32>} : memref<18x18x4xf32, #tpu.memory_space<vmem>>, vector<16x16x4xf32>,
    %c0_64 = arith.constant 0 : index
    %c0_65 = arith.constant 0 : index
    %c0_66 = arith.constant 0 : index
    %43 = vector.load %arg12[%c0_64, %c0_65, %c0_66] : memref<18x18x4xf32, #tpu.memory_space<vmem>>, vector<16x16x4xf32>
    %c0_67 = arith.constant 0 : index
    %c1_68 = arith.constant 1 : index
    %c0_69 = arith.constant 0 : index
    %44 = vector.load %arg12[%c0_67, %c1_68, %c0_69] : memref<18x18x4xf32, #tpu.memory_space<vmem>>, vector<16x16x4xf32>
    %c0_70 = arith.constant 0 : index
    %c2_71 = arith.constant 2 : index
    %c0_72 = arith.constant 0 : index
    %45 = vector.load %arg12[%c0_70, %c2_71, %c0_72] : memref<18x18x4xf32, #tpu.memory_space<vmem>>, vector<16x16x4xf32>
    %c1_73 = arith.constant 1 : index
    %c0_74 = arith.constant 0 : index
    %c0_75 = arith.constant 0 : index
    %46 = vector.load %arg12[%c1_73, %c0_74, %c0_75] : memref<18x18x4xf32, #tpu.memory_space<vmem>>, vector<16x16x4xf32>
    %c1_76 = arith.constant 1 : index
    %c1_77 = arith.constant 1 : index
    %c0_78 = arith.constant 0 : index
    %47 = vector.load %arg12[%c1_76, %c1_77, %c0_78] : memref<18x18x4xf32, #tpu.memory_space<vmem>>, vector<16x16x4xf32>
    %c1_79 = arith.constant 1 : index
    %c2_80 = arith.constant 2 : index
    %c0_81 = arith.constant 0 : index
    %48 = vector.load %arg12[%c1_79, %c2_80, %c0_81] : memref<18x18x4xf32, #tpu.memory_space<vmem>>, vector<16x16x4xf32>
    %c2_82 = arith.constant 2 : index
    %c0_83 = arith.constant 0 : index
    %c0_84 = arith.constant 0 : index
    %49 = vector.load %arg12[%c2_82, %c0_83, %c0_84] : memref<18x18x4xf32, #tpu.memory_space<vmem>>, vector<16x16x4xf32>
    %c2_85 = arith.constant 2 : index
    %c1_86 = arith.constant 1 : index
    %c0_87 = arith.constant 0 : index
    %50 = vector.load %arg12[%c2_85, %c1_86, %c0_87] : memref<18x18x4xf32, #tpu.memory_space<vmem>>, vector<16x16x4xf32>
    %c2_88 = arith.constant 2 : index
    %c2_89 = arith.constant 2 : index
    %c0_90 = arith.constant 0 : index
    %51 = vector.load %arg12[%c2_88, %c2_89, %c0_90] : memref<18x18x4xf32, #tpu.memory_space<vmem>>, vector<16x16x4xf32>
    %52 = tpu.concatenate %43, %44, %45, %46, %47, %48, %49, %50, %51 in 2 : vector<16x16x4xf32>, vector<16x16x4xf32>, vector<16x16x4xf32>, vector<16x16x4xf32>, vector<16x16x4xf32>, vector<16x16x4xf32>, vector<16x16x4xf32>, vector<16x16x4xf32>, vector<16x16x4xf32> -> vector<16x16x36xf32>
    %53 = arith.truncf %52 : vector<16x16x36xf32> to vector<16x16x36xbf16>
    %c0_91 = arith.constant 0 : index
    %c0_92 = arith.constant 0 : index
    %54 = vector.load %arg5[%c0_91, %c0_92] : memref<36x4xbf16, #tpu.memory_space<vmem>>, vector<36x4xbf16>
    %cst_93 = arith.constant dense<0.000000e+00> : vector<16x16x4xf32>
    %55 = tpu.matmul %53, %54, %cst_93 {dimension_numbers = #tpu.dot_dimension_numbers<[2], [0], [0, 1], [1], [0, 0, 0, 1, 1, 1], [], []>} : vector<16x16x36xbf16>, vector<36x4xbf16>, vector<16x16x4xf32> -> vector<16x16x4xf32>
    %56 = vector.shape_cast %10 : vector<1x4xf32> to vector<1x1x4xf32>
    %57 = vector.broadcast %56 : vector<1x1x4xf32> to vector<16x16x4xf32>
    %58 = arith.mulf %55, %57 : vector<16x16x4xf32>
    %59 = vector.shape_cast %11 : vector<1x4xf32> to vector<1x1x4xf32>
    %60 = vector.broadcast %59 : vector<1x1x4xf32> to vector<16x16x4xf32>
    %61 = arith.addf %58, %60 : vector<16x16x4xf32>
    %62 = arith.mulf %61, %41 : vector<16x16x4xf32>
    %c1_94 = arith.constant 1 : index
    %c1_95 = arith.constant 1 : index
    %c0_96 = arith.constant 0 : index
    %63 = vector.load %arg12[%c1_94, %c1_95, %c0_96] : memref<18x18x4xf32, #tpu.memory_space<vmem>>, vector<16x16x4xf32>
    tpu.vector_store %arg12[%c1_94, %c1_95, %c0_96], %62 {strides = array<i32>} : memref<18x18x4xf32, #tpu.memory_space<vmem>>, vector<16x16x4xf32>,
    %c0_97 = arith.constant 0 : index
    %c0_98 = arith.constant 0 : index
    %c0_99 = arith.constant 0 : index
    %64 = tpu.strided_load %arg12[%c0_97, %c0_98, %c0_99] {strides = array<i32: 2, 2, 1>} : memref<18x18x4xf32, #tpu.memory_space<vmem>>, vector<8x8x4xf32>
    %c0_100 = arith.constant 0 : index
    %c1_101 = arith.constant 1 : index
    %c0_102 = arith.constant 0 : index
    %65 = tpu.strided_load %arg12[%c0_100, %c1_101, %c0_102] {strides = array<i32: 2, 2, 1>} : memref<18x18x4xf32, #tpu.memory_space<vmem>>, vector<8x8x4xf32>
    %c0_103 = arith.constant 0 : index
    %c2_104 = arith.constant 2 : index
    %c0_105 = arith.constant 0 : index
    %66 = tpu.strided_load %arg12[%c0_103, %c2_104, %c0_105] {strides = array<i32: 2, 2, 1>} : memref<18x18x4xf32, #tpu.memory_space<vmem>>, vector<8x8x4xf32>
    %c1_106 = arith.constant 1 : index
    %c0_107 = arith.constant 0 : index
    %c0_108 = arith.constant 0 : index
    %67 = tpu.strided_load %arg12[%c1_106, %c0_107, %c0_108] {strides = array<i32: 2, 2, 1>} : memref<18x18x4xf32, #tpu.memory_space<vmem>>, vector<8x8x4xf32>
    %c1_109 = arith.constant 1 : index
    %c1_110 = arith.constant 1 : index
    %c0_111 = arith.constant 0 : index
    %68 = tpu.strided_load %arg12[%c1_109, %c1_110, %c0_111] {strides = array<i32: 2, 2, 1>} : memref<18x18x4xf32, #tpu.memory_space<vmem>>, vector<8x8x4xf32>
    %c1_112 = arith.constant 1 : index
    %c2_113 = arith.constant 2 : index
    %c0_114 = arith.constant 0 : index
    %69 = tpu.strided_load %arg12[%c1_112, %c2_113, %c0_114] {strides = array<i32: 2, 2, 1>} : memref<18x18x4xf32, #tpu.memory_space<vmem>>, vector<8x8x4xf32>
    %c2_115 = arith.constant 2 : index
    %c0_116 = arith.constant 0 : index
    %c0_117 = arith.constant 0 : index
    %70 = tpu.strided_load %arg12[%c2_115, %c0_116, %c0_117] {strides = array<i32: 2, 2, 1>} : memref<18x18x4xf32, #tpu.memory_space<vmem>>, vector<8x8x4xf32>
    %c2_118 = arith.constant 2 : index
    %c1_119 = arith.constant 1 : index
    %c0_120 = arith.constant 0 : index
    %71 = tpu.strided_load %arg12[%c2_118, %c1_119, %c0_120] {strides = array<i32: 2, 2, 1>} : memref<18x18x4xf32, #tpu.memory_space<vmem>>, vector<8x8x4xf32>
    %c2_121 = arith.constant 2 : index
    %c2_122 = arith.constant 2 : index
    %c0_123 = arith.constant 0 : index
    %72 = tpu.strided_load %arg12[%c2_121, %c2_122, %c0_123] {strides = array<i32: 2, 2, 1>} : memref<18x18x4xf32, #tpu.memory_space<vmem>>, vector<8x8x4xf32>
    %73 = tpu.concatenate %64, %65, %66, %67, %68, %69, %70, %71, %72 in 2 : vector<8x8x4xf32>, vector<8x8x4xf32>, vector<8x8x4xf32>, vector<8x8x4xf32>, vector<8x8x4xf32>, vector<8x8x4xf32>, vector<8x8x4xf32>, vector<8x8x4xf32>, vector<8x8x4xf32> -> vector<8x8x36xf32>
    %74 = arith.truncf %73 : vector<8x8x36xf32> to vector<8x8x36xbf16>
    %c0_124 = arith.constant 0 : index
    %c0_125 = arith.constant 0 : index
    %75 = vector.load %arg8[%c0_124, %c0_125] : memref<36x4xbf16, #tpu.memory_space<vmem>>, vector<36x4xbf16>
    %cst_126 = arith.constant dense<0.000000e+00> : vector<8x8x4xf32>
    %76 = tpu.matmul %74, %75, %cst_126 {dimension_numbers = #tpu.dot_dimension_numbers<[2], [0], [0, 1], [1], [0, 0, 0, 1, 1, 1], [], []>} : vector<8x8x36xbf16>, vector<36x4xbf16>, vector<8x8x4xf32> -> vector<8x8x4xf32>
    %77 = vector.shape_cast %12 : vector<1x4xf32> to vector<1x1x4xf32>
    %78 = vector.broadcast %77 : vector<1x1x4xf32> to vector<8x8x4xf32>
    %79 = arith.mulf %76, %78 : vector<8x8x4xf32>
    %80 = vector.shape_cast %13 : vector<1x4xf32> to vector<1x1x4xf32>
    %81 = vector.broadcast %80 : vector<1x1x4xf32> to vector<8x8x4xf32>
    %82 = arith.addf %79, %81 : vector<8x8x4xf32>
    %c0_127 = arith.constant 0 : index
    %c0_128 = arith.constant 0 : index
    %c0_129 = arith.constant 0 : index
    %c0_130 = arith.constant 0 : index
    %83 = vector.load %arg11[%c0_127, %c0_128, %c0_129, %c0_130] : memref<1x8x8x4xf32, #tpu.memory_space<vmem>>, vector<1x8x8x4xf32>
    %84 = vector.shape_cast %83 : vector<1x8x8x4xf32> to vector<8x8x4xf32>
    %85 = vector.shape_cast %82 : vector<8x8x4xf32> to vector<1x8x8x4xf32>
    tpu.vector_store %arg11[%c0_127, %c0_128, %c0_129, %c0_130], %85 {strides = array<i32>} : memref<1x8x8x4xf32, #tpu.memory_space<vmem>>, vector<1x8x8x4xf32>,
    return
  }
  func.func @transform_0(%arg0: i32) -> (i32, i32, i32, i32) {
    %c0_i32 = arith.constant 0 : i32
    %c0_i32_0 = arith.constant 0 : i32
    %c0_i32_1 = arith.constant 0 : i32
    %c0_i32_2 = arith.constant 0 : i32
    return %arg0, %c0_i32, %c0_i32_0, %c0_i32_1 : i32, i32, i32, i32
  }
  func.func @transform_1(%arg0: i32) -> (i32, i32) {
    %c0_i32 = arith.constant 0 : i32
    %c0_i32_0 = arith.constant 0 : i32
    %c0_i32_1 = arith.constant 0 : i32
    return %c0_i32, %c0_i32_0 : i32, i32
  }
  func.func @transform_2(%arg0: i32) -> (i32, i32) {
    %c0_i32 = arith.constant 0 : i32
    %c0_i32_0 = arith.constant 0 : i32
    %c0_i32_1 = arith.constant 0 : i32
    return %c0_i32, %c0_i32_0 : i32, i32
  }
  func.func @transform_3(%arg0: i32) -> (i32, i32) {
    %c0_i32 = arith.constant 0 : i32
    %c0_i32_0 = arith.constant 0 : i32
    %c0_i32_1 = arith.constant 0 : i32
    return %c0_i32, %c0_i32_0 : i32, i32
  }
  func.func @transform_4(%arg0: i32) -> (i32, i32) {
    %c0_i32 = arith.constant 0 : i32
    %c0_i32_0 = arith.constant 0 : i32
    %c0_i32_1 = arith.constant 0 : i32
    return %c0_i32, %c0_i32_0 : i32, i32
  }
  func.func @transform_5(%arg0: i32) -> (i32, i32) {
    %c0_i32 = arith.constant 0 : i32
    %c0_i32_0 = arith.constant 0 : i32
    %c0_i32_1 = arith.constant 0 : i32
    return %c0_i32, %c0_i32_0 : i32, i32
  }
  func.func @transform_6(%arg0: i32) -> (i32, i32) {
    %c0_i32 = arith.constant 0 : i32
    %c0_i32_0 = arith.constant 0 : i32
    %c0_i32_1 = arith.constant 0 : i32
    return %c0_i32, %c0_i32_0 : i32, i32
  }
  func.func @transform_7(%arg0: i32) -> (i32, i32) {
    %c0_i32 = arith.constant 0 : i32
    %c0_i32_0 = arith.constant 0 : i32
    %c0_i32_1 = arith.constant 0 : i32
    return %c0_i32, %c0_i32_0 : i32, i32
  }
  func.func @transform_8(%arg0: i32) -> (i32, i32) {
    %c0_i32 = arith.constant 0 : i32
    %c0_i32_0 = arith.constant 0 : i32
    %c0_i32_1 = arith.constant 0 : i32
    return %c0_i32, %c0_i32_0 : i32, i32
  }
  func.func @transform_9(%arg0: i32) -> (i32, i32) {
    %c0_i32 = arith.constant 0 : i32
    %c0_i32_0 = arith.constant 0 : i32
    %c0_i32_1 = arith.constant 0 : i32
    return %c0_i32, %c0_i32_0 : i32, i32
  }
  func.func @transform_10(%arg0: i32) -> (i32, i32, i32, i32) {
    %c0_i32 = arith.constant 0 : i32
    %c0_i32_0 = arith.constant 0 : i32
    %c0_i32_1 = arith.constant 0 : i32
    %c0_i32_2 = arith.constant 0 : i32
    return %arg0, %c0_i32, %c0_i32_0, %c0_i32_1 : i32, i32, i32, i32
  }
}

</mosaic_0001>

<llo_original>
// kernel: conv3_forward.1
$region0: #{conv3_forward.1}
  #allocation0 [shape = 'u32[]', space=smem, size = 0x4, offset = 0x4, fixed_abs, tag = 'smem constant byte address 0x4 - core index']
  #allocation1 [shape = 'u32[72,128]{1,0:T(1,128)}', space=vmem, size = 0x9000, scoped, tag = 'internal scratch']
  #allocation2 [shape = 'f32[18,18,4]{2,1,0:T(8,128)}', space=vmem, size = 0x36000, scoped, tag = 'scratch operand']
  %s0 = inlined_call_operand.vmem [shape: f32[2,16,16,4], index: 0, kind: input, shape index: {}]
  %s1 = inlined_call_operand.vmem [shape: bf16[36,4], index: 1, kind: input, shape index: {}]
  %s2 = inlined_call_operand.vmem [shape: f32[1,4], index: 2, kind: input, shape index: {}]
  %s3 = inlined_call_operand.vmem [shape: f32[1,4], index: 3, kind: input, shape index: {}]
  %s4 = inlined_call_operand.vmem [shape: bf16[36,4], index: 4, kind: input, shape index: {}]
  %s5 = inlined_call_operand.vmem [shape: f32[1,4], index: 5, kind: input, shape index: {}]
  %s6 = inlined_call_operand.vmem [shape: f32[1,4], index: 6, kind: input, shape index: {}]
  %s7 = inlined_call_operand.vmem [shape: bf16[36,4], index: 7, kind: input, shape index: {}]
  %s8 = inlined_call_operand.vmem [shape: f32[1,4], index: 8, kind: input, shape index: {}]
  %s9 = inlined_call_operand.vmem [shape: f32[1,4], index: 9, kind: input, shape index: {}]
  %s10 = inlined_call_operand.vmem [shape: f32[2,8,8,4], index: 10, kind: output, shape index: {}]
  %s11 = sld [smem:[#allocation0]]
  $region73: #{conv3_forward.1} parent=0
    _
  %s13 = ssub.s32 1, %s11
  %s14 = scalar_select 0, %s13, %s11
  loop: start=0, step=1, limit=4
  $region2: #{conv3_forward.1} parent=0 // loop_pre_header
    _
  $region3: #{conv3_forward.1} parent=0 // loop_header
    %s16 = sphi 0, %s20
    %p17 = scmp.ge.s32.totalorder %s16, 4
    %s26 = sphi 0, %s28
    %s29 = sphi 0, %s26
    %s30 = sphi 0, %s29
    %s46 = sphi 0, %s30
    %s50 = sphi 0, %s50
    %s52 = sphi 0, %s50
    %s53 = sphi 0, %s52
    %s67 = sphi 0, %s53
    %s71 = sphi 0, %s71
    %s73 = sphi 0, %s71
    %s74 = sphi 0, %s73
    %s88 = sphi 0, %s74
    %s92 = sphi 0, %s92
    %s94 = sphi 0, %s92
    %s95 = sphi 0, %s94
    %s109 = sphi 0, %s95
    %s113 = sphi 0, %s113
    %s115 = sphi 0, %s113
    %s116 = sphi 0, %s115
    %s130 = sphi 0, %s116
    %s134 = sphi 0, %s134
    %s136 = sphi 0, %s134
    %s137 = sphi 0, %s136
    %s151 = sphi 0, %s137
    %s155 = sphi 0, %s155
    %s157 = sphi 0, %s155
    %s158 = sphi 0, %s157
    %s172 = sphi 0, %s158
    %s176 = sphi 0, %s176
    %s178 = sphi 0, %s176
    %s179 = sphi 0, %s178
    %s193 = sphi 0, %s179
    %s197 = sphi 0, %s197
    %s199 = sphi 0, %s197
    %s200 = sphi 0, %s199
    %s214 = sphi 0, %s200
    %s218 = sphi 0, %s218
    %s220 = sphi 0, %s218
    %s221 = sphi 0, %s220
    %s235 = sphi 0, %s221
    %s241 = sphi 0, %s243
    %s244 = sphi 0, %s241
    %s245 = sphi 0, %s244
    %s261 = sphi 0, %s245
  $region4: #{conv3_forward.1} parent=0 // loop_header_branch
    %19 = sbr.rel (%p17) target = $region8
  $region5: #{conv3_forward.1} parent=0 // loop_body
    %s21 = ssub.s32 %s16, 1
    %s22 = ssub.s32 %s16, 2
    %s23 = sadd.s32 %s16, 1
    %s24 = ssub.s32 %s16, %s23
    %p25 = scmp.eq.s32.totalorder %s24, 0
    %s27 = sadd.s32 %s26, 1
    %s28 = scalar_select %p25, %s26, %s27
    %p31 = pneg %p25
    %p32 = scmp.eq.s32.totalorder %s16, 1
    %p33 = por %p31, %p32
    %p34 = scmp.ne.s32.totalorder %s26, %s29
    %p35 = scmp.eq.s32.totalorder %s16, 0
    %p36 = por %p34, %p35
    %p37 = scmp.ne.s32.totalorder %s26, %s29
    %p38 = scmp.eq.s32.totalorder %s21, 1
    %p39 = por %p37, %p38
    %p40 = scmp.ne.s32.totalorder %s29, %s30
    %p41 = scmp.eq.s32.totalorder %s21, 0
    %p42 = por %p40, %p41
    %p43 = scmp.ne.s32.totalorder %s29, %s30
    %p44 = scmp.eq.s32.totalorder %s22, 1
    %p45 = por %p43, %p44
    %p47 = scmp.ne.s32.totalorder %s30, %s46
    %p48 = scmp.eq.s32.totalorder %s22, 0
    %p49 = por %p47, %p48
    %s51 = sadd.s32 %s50, 1
    %p54 = scmp.eq.s32.totalorder %s16, 1
    %p55 = scmp.ne.s32.totalorder %s50, %s52
    %p56 = scmp.eq.s32.totalorder %s16, 0
    %p57 = por %p55, %p56
    %p58 = scmp.ne.s32.totalorder %s50, %s52
    %p59 = scmp.eq.s32.totalorder %s21, 1
    %p60 = por %p58, %p59
    %p61 = scmp.ne.s32.totalorder %s52, %s53
    %p62 = scmp.eq.s32.totalorder %s21, 0
    %p63 = por %p61, %p62
    %p64 = scmp.ne.s32.totalorder %s52, %s53
    %p65 = scmp.eq.s32.totalorder %s22, 1
    %p66 = por %p64, %p65
    %p68 = scmp.ne.s32.totalorder %s53, %s67
    %p69 = scmp.eq.s32.totalorder %s22, 0
    %p70 = por %p68, %p69
    %s72 = sadd.s32 %s71, 1
    %p75 = scmp.eq.s32.totalorder %s16, 1
    %p76 = scmp.ne.s32.totalorder %s71, %s73
    %p77 = scmp.eq.s32.totalorder %s16, 0
    %p78 = por %p76, %p77
    %p79 = scmp.ne.s32.totalorder %s71, %s73
    %p80 = scmp.eq.s32.totalorder %s21, 1
    %p81 = por %p79, %p80
    %p82 = scmp.ne.s32.totalorder %s73, %s74
    %p83 = scmp.eq.s32.totalorder %s21, 0
    %p84 = por %p82, %p83
    %p85 = scmp.ne.s32.totalorder %s73, %s74
    %p86 = scmp.eq.s32.totalorder %s22, 1
    %p87 = por %p85, %p86
    %p89 = scmp.ne.s32.totalorder %s74, %s88
    %p90 = scmp.eq.s32.totalorder %s22, 0
    %p91 = por %p89, %p90
    %s93 = sadd.s32 %s92, 1
    %p96 = scmp.eq.s32.totalorder %s16, 1
    %p97 = scmp.ne.s32.totalorder %s92, %s94
    %p98 = scmp.eq.s32.totalorder %s16, 0
    %p99 = por %p97, %p98
    %p100 = scmp.ne.s32.totalorder %s92, %s94
    %p101 = scmp.eq.s32.totalorder %s21, 1
    %p102 = por %p100, %p101
    %p103 = scmp.ne.s32.totalorder %s94, %s95
    %p104 = scmp.eq.s32.totalorder %s21, 0
    %p105 = por %p103, %p104
    %p106 = scmp.ne.s32.totalorder %s94, %s95
    %p107 = scmp.eq.s32.totalorder %s22, 1
    %p108 = por %p106, %p107
    %p110 = scmp.ne.s32.totalorder %s95, %s109
    %p111 = scmp.eq.s32.totalorder %s22, 0
    %p112 = por %p110, %p111
    %s114 = sadd.s32 %s113, 1
    %p117 = scmp.eq.s32.totalorder %s16, 1
    %p118 = scmp.ne.s32.totalorder %s113, %s115
    %p119 = scmp.eq.s32.totalorder %s16, 0
    %p120 = por %p118, %p119
    %p121 = scmp.ne.s32.totalorder %s113, %s115
    %p122 = scmp.eq.s32.totalorder %s21, 1
    %p123 = por %p121, %p122
    %p124 = scmp.ne.s32.totalorder %s115, %s116
    %p125 = scmp.eq.s32.totalorder %s21, 0
    %p126 = por %p124, %p125
    %p127 = scmp.ne.s32.totalorder %s115, %s116
    %p128 = scmp.eq.s32.totalorder %s22, 1
    %p129 = por %p127, %p128
    %p131 = scmp.ne.s32.totalorder %s116, %s130
    %p132 = scmp.eq.s32.totalorder %s22, 0
    %p133 = por %p131, %p132
    %s135 = sadd.s32 %s134, 1
    %p138 = scmp.eq.s32.totalorder %s16, 1
    %p139 = scmp.ne.s32.totalorder %s134, %s136
    %p140 = scmp.eq.s32.totalorder %s16, 0
    %p141 = por %p139, %p140
    %p142 = scmp.ne.s32.totalorder %s134, %s136
    %p143 = scmp.eq.s32.totalorder %s21, 1
    %p144 = por %p142, %p143
    %p145 = scmp.ne.s32.totalorder %s136, %s137
    %p146 = scmp.eq.s32.totalorder %s21, 0
    %p147 = por %p145, %p146
    %p148 = scmp.ne.s32.totalorder %s136, %s137
    %p149 = scmp.eq.s32.totalorder %s22, 1
    %p150 = por %p148, %p149
    %p152 = scmp.ne.s32.totalorder %s137, %s151
    %p153 = scmp.eq.s32.totalorder %s22, 0
    %p154 = por %p152, %p153
    %s156 = sadd.s32 %s155, 1
    %p159 = scmp.eq.s32.totalorder %s16, 1
    %p160 = scmp.ne.s32.totalorder %s155, %s157
    %p161 = scmp.eq.s32.totalorder %s16, 0
    %p162 = por %p160, %p161
    %p163 = scmp.ne.s32.totalorder %s155, %s157
    %p164 = scmp.eq.s32.totalorder %s21, 1
    %p165 = por %p163, %p164
    %p166 = scmp.ne.s32.totalorder %s157, %s158
    %p167 = scmp.eq.s32.totalorder %s21, 0
    %p168 = por %p166, %p167
    %p169 = scmp.ne.s32.totalorder %s157, %s158
    %p170 = scmp.eq.s32.totalorder %s22, 1
    %p171 = por %p169, %p170
    %p173 = scmp.ne.s32.totalorder %s158, %s172
    %p174 = scmp.eq.s32.totalorder %s22, 0
    %p175 = por %p173, %p174
    %s177 = sadd.s32 %s176, 1
    %p180 = scmp.eq.s32.totalorder %s16, 1
    %p181 = scmp.ne.s32.totalorder %s176, %s178
    %p182 = scmp.eq.s32.totalorder %s16, 0
    %p183 = por %p181, %p182
    %p184 = scmp.ne.s32.totalorder %s176, %s178
    %p185 = scmp.eq.s32.totalorder %s21, 1
    %p186 = por %p184, %p185
    %p187 = scmp.ne.s32.totalorder %s178, %s179
    %p188 = scmp.eq.s32.totalorder %s21, 0
    %p189 = por %p187, %p188
    %p190 = scmp.ne.s32.totalorder %s178, %s179
    %p191 = scmp.eq.s32.totalorder %s22, 1
    %p192 = por %p190, %p191
    %p194 = scmp.ne.s32.totalorder %s179, %s193
    %p195 = scmp.eq.s32.totalorder %s22, 0
    %p196 = por %p194, %p195
    %s198 = sadd.s32 %s197, 1
    %p201 = scmp.eq.s32.totalorder %s16, 1
    %p202 = scmp.ne.s32.totalorder %s197, %s199
    %p203 = scmp.eq.s32.totalorder %s16, 0
    %p204 = por %p202, %p203
    %p205 = scmp.ne.s32.totalorder %s197, %s199
    %p206 = scmp.eq.s32.totalorder %s21, 1
    %p207 = por %p205, %p206
    %p208 = scmp.ne.s32.totalorder %s199, %s200
    %p209 = scmp.eq.s32.totalorder %s21, 0
    %p210 = por %p208, %p209
    %p211 = scmp.ne.s32.totalorder %s199, %s200
    %p212 = scmp.eq.s32.totalorder %s22, 1
    %p213 = por %p211, %p212
    %p215 = scmp.ne.s32.totalorder %s200, %s214
    %p216 = scmp.eq.s32.totalorder %s22, 0
    %p217 = por %p215, %p216
    %s219 = sadd.s32 %s218, 1
    %p222 = scmp.eq.s32.totalorder %s16, 1
    %p223 = scmp.ne.s32.totalorder %s218, %s220
    %p224 = scmp.eq.s32.totalorder %s16, 0
    %p225 = por %p223, %p224
    %p226 = scmp.ne.s32.totalorder %s218, %s220
    %p227 = scmp.eq.s32.totalorder %s21, 1
    %p228 = por %p226, %p227
    %p229 = scmp.ne.s32.totalorder %s220, %s221
    %p230 = scmp.eq.s32.totalorder %s21, 0
    %p231 = por %p229, %p230
    %p232 = scmp.ne.s32.totalorder %s220, %s221
    %p233 = scmp.eq.s32.totalorder %s22, 1
    %p234 = por %p232, %p233
    %p236 = scmp.ne.s32.totalorder %s221, %s235
    %p237 = scmp.eq.s32.totalorder %s22, 0
    %p238 = por %p236, %p237
    %s239 = ssub.s32 %s16, %s23
    %p240 = scmp.eq.s32.totalorder %s239, 0
    %s242 = sadd.s32 %s241, 1
    %s243 = scalar_select %p240, %s241, %s242
    %p246 = pneg %p240
    %p247 = scmp.eq.s32.totalorder %s16, 1
    %p248 = por %p246, %p247
    %p249 = scmp.ne.s32.totalorder %s241, %s244
    %p250 = scmp.eq.s32.totalorder %s16, 0
    %p251 = por %p249, %p250
    %p252 = scmp.ne.s32.totalorder %s241, %s244
    %p253 = scmp.eq.s32.totalorder %s21, 1
    %p254 = por %p252, %p253
    %p255 = scmp.ne.s32.totalorder %s244, %s245
    %p256 = scmp.eq.s32.totalorder %s21, 0
    %p257 = por %p255, %p256
    %p258 = scmp.ne.s32.totalorder %s244, %s245
    %p259 = scmp.eq.s32.totalorder %s22, 1
    %p260 = por %p258, %p259
    %p262 = scmp.ne.s32.totalorder %s245, %s261
    %p263 = scmp.eq.s32.totalorder %s22, 0
    %p264 = por %p262, %p263
    %p265 = scmp.le.s32.totalorder 1, %s16
    %p266 = scmp.lt.s32.totalorder %s16, 3
    %p267 = pnand %p265, %p266
    %p268 = pneg %p267
    // Predicated region
    $region9: #{conv3_forward.1} parent=5 // pred_check
      _
    $region10: #{conv3_forward.1} parent=5 // pred_check_branch
      %270 = sbr.rel (%p267) target = $region12
    $region11: #{conv3_forward.1} parent=5 // pred_region
      %s271 = ssub.s32 %s16, 1
      // Predicated region
      $region13: #{conv3_forward.1} parent=11 // pred_check
        %p272 = pneg %p63
      $region14: #{conv3_forward.1} parent=11 // pred_check_branch
        %274 = sbr.rel (%p272) target = $region16
      $region15: #{conv3_forward.1} parent=11 // pred_region
        _
      $region16: #{conv3_forward.1} parent=11 // pred_fallthru
        _
      // Predicated region
      $region17: #{conv3_forward.1} parent=11 // pred_check
        %p275 = pneg %p84
      $region18: #{conv3_forward.1} parent=11 // pred_check_branch
        %277 = sbr.rel (%p275) target = $region20
      $region19: #{conv3_forward.1} parent=11 // pred_region
        _
      $region20: #{conv3_forward.1} parent=11 // pred_fallthru
        _
      // Predicated region
      $region21: #{conv3_forward.1} parent=11 // pred_check
        %p278 = pneg %p105
      $region22: #{conv3_forward.1} parent=11 // pred_check_branch
        %280 = sbr.rel (%p278) target = $region24
      $region23: #{conv3_forward.1} parent=11 // pred_region
        _
      $region24: #{conv3_forward.1} parent=11 // pred_fallthru
        _
      // Predicated region
      $region25: #{conv3_forward.1} parent=11 // pred_check
        %p281 = pneg %p126
      $region26: #{conv3_forward.1} parent=11 // pred_check_branch
        %283 = sbr.rel (%p281) target = $region28
      $region27: #{conv3_forward.1} parent=11 // pred_region
        _
      $region28: #{conv3_forward.1} parent=11 // pred_fallthru
        _
      // Predicated region
      $region29: #{conv3_forward.1} parent=11 // pred_check
        %p284 = pneg %p147
      $region30: #{conv3_forward.1} parent=11 // pred_check_branch
        %286 = sbr.rel (%p284) target = $region32
      $region31: #{conv3_forward.1} parent=11 // pred_region
        _
      $region32: #{conv3_forward.1} parent=11 // pred_fallthru
        _
      // Predicated region
      $region33: #{conv3_forward.1} parent=11 // pred_check
        %p287 = pneg %p168
      $region34: #{conv3_forward.1} parent=11 // pred_check_branch
        %289 = sbr.rel (%p287) target = $region36
      $region35: #{conv3_forward.1} parent=11 // pred_region
        _
      $region36: #{conv3_forward.1} parent=11 // pred_fallthru
        _
      // Predicated region
      $region37: #{conv3_forward.1} parent=11 // pred_check
        %p290 = pneg %p189
      $region38: #{conv3_forward.1} parent=11 // pred_check_branch
        %292 = sbr.rel (%p290) target = $region40
      $region39: #{conv3_forward.1} parent=11 // pred_region
        _
      $region40: #{conv3_forward.1} parent=11 // pred_fallthru
        _
      // Predicated region
      $region41: #{conv3_forward.1} parent=11 // pred_check
        %p293 = pneg %p210
      $region42: #{conv3_forward.1} parent=11 // pred_check_branch
        %295 = sbr.rel (%p293) target = $region44
      $region43: #{conv3_forward.1} parent=11 // pred_region
        _
      $region44: #{conv3_forward.1} parent=11 // pred_fallthru
        _
      // Predicated region
      $region45: #{conv3_forward.1} parent=11 // pred_check
        %p296 = pneg %p231
      $region46: #{conv3_forward.1} parent=11 // pred_check_branch
        %298 = sbr.rel (%p296) target = $region48
      $region47: #{conv3_forward.1} parent=11 // pred_region
        _
      $region48: #{conv3_forward.1} parent=11 // pred_fallthru
        _
    $region12: #{conv3_forward.1} parent=5 // pred_fallthru
      _
    %p299 = scmp.lt.s32.totalorder %s16, 2
    // Predicated region
    $region49: #{conv3_forward.1} parent=5 // pred_check
      %p300 = pneg %p299
    $region50: #{conv3_forward.1} parent=5 // pred_check_branch
      %302 = sbr.rel (%p300) target = $region52
    $region51: #{conv3_forward.1} parent=5 // pred_region
      // Predicated region
      $region53: #{conv3_forward.1} parent=51 // pred_check
        %p303 = pneg %p36
      $region54: #{conv3_forward.1} parent=51 // pred_check_branch
        %305 = sbr.rel (%p303) target = $region56
      $region55: #{conv3_forward.1} parent=51 // pred_region
        %p306 = scmp.lt.s32.totalorder %s16, 1
        %s307 = scalar_select %p306, %s16, 1
        %s308 = smul.addr %s307, 32
        %s309 = smul.addr %s308, 8
        %s310 = scalar_lea.vmem %s0, %s309
      $region56: #{conv3_forward.1} parent=51 // pred_fallthru
        _
    $region52: #{conv3_forward.1} parent=5 // pred_fallthru
      _
    %p311 = scmp.le.s32.totalorder 1, %s16
    %p312 = scmp.lt.s32.totalorder %s16, 3
    %p313 = pnand %p311, %p312
    %p314 = pneg %p313
    // Predicated region
    $region57: #{conv3_forward.1} parent=5 // pred_check
      _
    $region58: #{conv3_forward.1} parent=5 // pred_check_branch
      %316 = sbr.rel (%p313) target = $region60
    $region59: #{conv3_forward.1} parent=5 // pred_region
      %s317 = ssub.s32 %s16, 1
      %p318 = scmp.lt.s32.totalorder %s21, 1
      %s319 = scalar_select %p318, %s21, 1
      %s320 = smul.addr %s319, 32
      %s321 = smul.addr %s320, 8
      %s322 = scalar_lea.vmem %s0, %s321
      %p323 = pneg %p42
      %p324 = pneg %p39
      %p325 = pneg %p63
      %p326 = pneg %p60
      %p327 = pneg %p84
      %p328 = pneg %p81
      %p329 = pneg %p105
      %p330 = pneg %p102
      %p331 = pneg %p126
      %p332 = pneg %p123
      %p333 = pneg %p147
      %p334 = pneg %p144
      %p335 = pneg %p168
      %p336 = pneg %p165
      %p337 = pneg %p189
      %p338 = pneg %p186
      %p339 = pneg %p210
      %p340 = pneg %p207
      %p341 = pneg %p231
      %p342 = pneg %p228
      %p343 = pneg %p257
      %p344 = pneg %p254
      %p345 = scmp.lt.s32.totalorder %s21, 1
      %s346 = scalar_select %p345, %s21, 1
      %s347 = smul.addr %s346, 8
      %s348 = smul.addr %s347, 8
      %s349 = scalar_lea.vmem %s10, %s348
      %p350 = scmp.lt.s32.totalorder %s21, 1
      %s351 = scalar_select %p350, %s21, 1
      %s352 = smul.addr %s351, 32
      %s353 = smul.addr %s352, 8
      %s354 = scalar_lea.vmem %s0, %s353
      %p355 = scmp.lt.s32.totalorder %s21, 1
      %s356 = scalar_select %p355, %s21, 1
      %s357 = smul.addr %s356, 8
      %s358 = smul.addr %s357, 8
      %s359 = scalar_lea.vmem %s10, %s358
      %vm361 = vcmask 31744
      %362 = vst.msk [vmem:[#allocation2] sm:$0xff] %vm361, 0.0
      %363 = vst.msk [vmem:[#allocation2 + $0x8] sm:$0xff] %vm361, 0.0
      %vm364 = vcmask 25600
      %365 = vst.msk [vmem:[#allocation2 + $0x10] sm:$0x3] %vm364, 0.0
      %s366 = scalar_lea.vmem [#allocation2], 408
      %367 = vst.msk [vmem:[%s366] sm:$0xff] %vm361, 0.0
      %368 = vst.msk [vmem:[%s366 + $0x8] sm:$0xff] %vm361, 0.0
      %369 = vst.msk [vmem:[%s366 + $0x10] sm:$0x3] %vm364, 0.0
      %vm370 = vcmask 24576
      %371 = vst.msk [vmem:[#allocation2] sm:$0x1] %vm370, 0.0
      %372 = vst.msk [vmem:[#allocation2 + $0x18] sm:$0x1] %vm370, 0.0
      %373 = vst.msk [vmem:[#allocation2 + $0x30] sm:$0x1] %vm370, 0.0
      %374 = vst.msk [vmem:[#allocation2 + $0x48] sm:$0x1] %vm370, 0.0
      %375 = vst.msk [vmem:[#allocation2 + $0x60] sm:$0x1] %vm370, 0.0
      %376 = vst.msk [vmem:[#allocation2 + $0x78] sm:$0x1] %vm370, 0.0
      %377 = vst.msk [vmem:[#allocation2 + $0x90] sm:$0x1] %vm370, 0.0
      %378 = vst.msk [vmem:[#allocation2 + $0xa8] sm:$0x1] %vm370, 0.0
      %379 = vst.msk [vmem:[#allocation2 + $0xc0] sm:$0x1] %vm370, 0.0
      %380 = vst.msk [vmem:[#allocation2 + $0xd8] sm:$0x1] %vm370, 0.0
      %381 = vst.msk [vmem:[#allocation2 + $0xf0] sm:$0x1] %vm370, 0.0
      %382 = vst.msk [vmem:[#allocation2 + $0x108] sm:$0x1] %vm370, 0.0
      %383 = vst.msk [vmem:[#allocation2 + $0x120] sm:$0x1] %vm370, 0.0
      %384 = vst.msk [vmem:[#allocation2 + $0x138] sm:$0x1] %vm370, 0.0
      %385 = vst.msk [vmem:[#allocation2 + $0x150] sm:$0x1] %vm370, 0.0
      %386 = vst.msk [vmem:[#allocation2 + $0x168] sm:$0x1] %vm370, 0.0
      %387 = vst.msk [vmem:[#allocation2 + $0x180] sm:$0x1] %vm370, 0.0
      %388 = vst.msk [vmem:[#allocation2 + $0x198] sm:$0x1] %vm370, 0.0
      %389 = vst.msk [vmem:[#allocation2 + $0x11] sm:$0x1] %vm370, 0.0
      %390 = vst.msk [vmem:[#allocation2 + $0x29] sm:$0x1] %vm370, 0.0
      %391 = vst.msk [vmem:[#allocation2 + $0x41] sm:$0x1] %vm370, 0.0
      %392 = vst.msk [vmem:[#allocation2 + $0x59] sm:$0x1] %vm370, 0.0
      %393 = vst.msk [vmem:[#allocation2 + $0x71] sm:$0x1] %vm370, 0.0
      %394 = vst.msk [vmem:[#allocation2 + $0x89] sm:$0x1] %vm370, 0.0
      %395 = vst.msk [vmem:[#allocation2 + $0xa1] sm:$0x1] %vm370, 0.0
      %396 = vst.msk [vmem:[#allocation2 + $0xb9] sm:$0x1] %vm370, 0.0
      %397 = vst.msk [vmem:[#allocation2 + $0xd1] sm:$0x1] %vm370, 0.0
      %398 = vst.msk [vmem:[#allocation2 + $0xe9] sm:$0x1] %vm370, 0.0
      %399 = vst.msk [vmem:[#allocation2 + $0x101] sm:$0x1] %vm370, 0.0
      %400 = vst.msk [vmem:[#allocation2 + $0x119] sm:$0x1] %vm370, 0.0
      %401 = vst.msk [vmem:[#allocation2 + $0x131] sm:$0x1] %vm370, 0.0
      %402 = vst.msk [vmem:[#allocation2 + $0x149] sm:$0x1] %vm370, 0.0
      %403 = vst.msk [vmem:[#allocation2 + $0x161] sm:$0x1] %vm370, 0.0
      %404 = vst.msk [vmem:[#allocation2 + $0x179] sm:$0x1] %vm370, 0.0
      %405 = vst.msk [vmem:[#allocation2 + $0x191] sm:$0x1] %vm370, 0.0
      %406 = vst.msk [vmem:[#allocation2 + $0x1a9] sm:$0x1] %vm370, 0.0
      %v407 = vld [vmem:[%s2] sm:$0x1]
      %v408 = vld [vmem:[%s3] sm:$0x1]
      %v409 = vld [vmem:[%s5] sm:$0x1]
      %v410 = vld [vmem:[%s6] sm:$0x1]
      %v411 = vld [vmem:[%s8] sm:$0x1]
      %v412 = vld [vmem:[%s9] sm:$0x1]
      %v413 = vld [vmem:[%s354] sm:$0xff]
      %v414 = vld [vmem:[%s354 + $0x8] sm:$0xff]
      %v415 = vld [vmem:[%s354 + $0x10] sm:$0xff]
      %v416 = vld [vmem:[%s354 + $0x18] sm:$0xff]
      %v417 = vld [vmem:[%s354 + $0x20] sm:$0xff]
      %v418 = vld [vmem:[%s354 + $0x28] sm:$0xff]
      %v419 = vld [vmem:[%s354 + $0x30] sm:$0xff]
      %v420 = vld [vmem:[%s354 + $0x38] sm:$0xff]
      %v421 = vld [vmem:[%s354 + $0x40] sm:$0xff]
      %v422 = vld [vmem:[%s354 + $0x48] sm:$0xff]
      %v423 = vld [vmem:[%s354 + $0x50] sm:$0xff]
      %v424 = vld [vmem:[%s354 + $0x58] sm:$0xff]
      %v425 = vld [vmem:[%s354 + $0x60] sm:$0xff]
      %v426 = vld [vmem:[%s354 + $0x68] sm:$0xff]
      %v427 = vld [vmem:[%s354 + $0x70] sm:$0xff]
      %v428 = vld [vmem:[%s354 + $0x78] sm:$0xff]
      %v429 = vld [vmem:[%s354 + $0x80] sm:$0xff]
      %v430 = vld [vmem:[%s354 + $0x88] sm:$0xff]
      %v431 = vld [vmem:[%s354 + $0x90] sm:$0xff]
      %v432 = vld [vmem:[%s354 + $0x98] sm:$0xff]
      %v433 = vld [vmem:[%s354 + $0xa0] sm:$0xff]
      %v434 = vld [vmem:[%s354 + $0xa8] sm:$0xff]
      %v435 = vld [vmem:[%s354 + $0xb0] sm:$0xff]
      %v436 = vld [vmem:[%s354 + $0xb8] sm:$0xff]
      %v437 = vld [vmem:[%s354 + $0xc0] sm:$0xff]
      %v438 = vld [vmem:[%s354 + $0xc8] sm:$0xff]
      %v439 = vld [vmem:[%s354 + $0xd0] sm:$0xff]
      %v440 = vld [vmem:[%s354 + $0xd8] sm:$0xff]
      %v441 = vld [vmem:[%s354 + $0xe0] sm:$0xff]
      %v442 = vld [vmem:[%s354 + $0xe8] sm:$0xff]
      %v443 = vld [vmem:[%s354 + $0xf0] sm:$0xff]
      %v444 = vld [vmem:[%s354 + $0xf8] sm:$0xff]
      %s445 = scalar_lea.vmem [#allocation2], 24
      %446 = vst.msk [vmem:[%s445 + $0x1] sm:$0xff] %vm361, %v413
      %447 = vst.msk [vmem:[%s445 + $0x9] sm:$0xff] %vm361, %v414
      %448 = vst.msk [vmem:[%s445 + $0x19] sm:$0xff] %vm361, %v415
      %449 = vst.msk [vmem:[%s445 + $0x21] sm:$0xff] %vm361, %v416
      %450 = vst.msk [vmem:[%s445 + $0x31] sm:$0xff] %vm361, %v417
      %451 = vst.msk [vmem:[%s445 + $0x39] sm:$0xff] %vm361, %v418
      %452 = vst.msk [vmem:[%s445 + $0x49] sm:$0xff] %vm361, %v419
      %453 = vst.msk [vmem:[%s445 + $0x51] sm:$0xff] %vm361, %v420
      %454 = vst.msk [vmem:[%s445 + $0x61] sm:$0xff] %vm361, %v421
      %455 = vst.msk [vmem:[%s445 + $0x69] sm:$0xff] %vm361, %v422
      %456 = vst.msk [vmem:[%s445 + $0x79] sm:$0xff] %vm361, %v423
      %457 = vst.msk [vmem:[%s445 + $0x81] sm:$0xff] %vm361, %v424
      %458 = vst.msk [vmem:[%s445 + $0x91] sm:$0xff] %vm361, %v425
      %459 = vst.msk [vmem:[%s445 + $0x99] sm:$0xff] %vm361, %v426
      %460 = vst.msk [vmem:[%s445 + $0xa9] sm:$0xff] %vm361, %v427
      %461 = vst.msk [vmem:[%s445 + $0xb1] sm:$0xff] %vm361, %v428
      %462 = vst.msk [vmem:[%s445 + $0xc1] sm:$0xff] %vm361, %v429
      %463 = vst.msk [vmem:[%s445 + $0xc9] sm:$0xff] %vm361, %v430
      %464 = vst.msk [vmem:[%s445 + $0xd9] sm:$0xff] %vm361, %v431
      %465 = vst.msk [vmem:[%s445 + $0xe1] sm:$0xff] %vm361, %v432
      %466 = vst.msk [vmem:[%s445 + $0xf1] sm:$0xff] %vm361, %v433
      %467 = vst.msk [vmem:[%s445 + $0xf9] sm:$0xff] %vm361, %v434
      %468 = vst.msk [vmem:[%s445 + $0x109] sm:$0xff] %vm361, %v435
      %469 = vst.msk [vmem:[%s445 + $0x111] sm:$0xff] %vm361, %v436
      %470 = vst.msk [vmem:[%s445 + $0x121] sm:$0xff] %vm361, %v437
      %471 = vst.msk [vmem:[%s445 + $0x129] sm:$0xff] %vm361, %v438
      %472 = vst.msk [vmem:[%s445 + $0x139] sm:$0xff] %vm361, %v439
      %473 = vst.msk [vmem:[%s445 + $0x141] sm:$0xff] %vm361, %v440
      %474 = vst.msk [vmem:[%s445 + $0x151] sm:$0xff] %vm361, %v441
      %475 = vst.msk [vmem:[%s445 + $0x159] sm:$0xff] %vm361, %v442
      %476 = vst.msk [vmem:[%s445 + $0x169] sm:$0xff] %vm361, %v443
      %477 = vst.msk [vmem:[%s445 + $0x171] sm:$0xff] %vm361, %v444
      %v478 = vld [vmem:[#allocation2] sm:$0xff]
      %v479 = vld [vmem:[#allocation2 + $0x8] sm:$0xff]
      %v480 = vld [vmem:[#allocation2 + $0x18] sm:$0xff]
      %v481 = vld [vmem:[#allocation2 + $0x20] sm:$0xff]
      %v482 = vld [vmem:[#allocation2 + $0x30] sm:$0xff]
      %v483 = vld [vmem:[#allocation2 + $0x38] sm:$0xff]
      %v484 = vld [vmem:[#allocation2 + $0x48] sm:$0xff]
      %v485 = vld [vmem:[#allocation2 + $0x50] sm:$0xff]
      %v486 = vld [vmem:[#allocation2 + $0x60] sm:$0xff]
      %v487 = vld [vmem:[#allocation2 + $0x68] sm:$0xff]
      %v488 = vld [vmem:[#allocation2 + $0x78] sm:$0xff]
      %v489 = vld [vmem:[#allocation2 + $0x80] sm:$0xff]
      %v490 = vld [vmem:[#allocation2 + $0x90] sm:$0xff]
      %v491 = vld [vmem:[#allocation2 + $0x98] sm:$0xff]
      %v492 = vld [vmem:[#allocation2 + $0xa8] sm:$0xff]
      %v493 = vld [vmem:[#allocation2 + $0xb0] sm:$0xff]
      %v494 = vld [vmem:[#allocation2 + $0xc0] sm:$0xff]
      %v495 = vld [vmem:[#allocation2 + $0xc8] sm:$0xff]
      %v496 = vld [vmem:[#allocation2 + $0xd8] sm:$0xff]
      %v497 = vld [vmem:[#allocation2 + $0xe0] sm:$0xff]
      %v498 = vld [vmem:[#allocation2 + $0xf0] sm:$0xff]
      %v499 = vld [vmem:[#allocation2 + $0xf8] sm:$0xff]
      %v500 = vld [vmem:[#allocation2 + $0x108] sm:$0xff]
      %v501 = vld [vmem:[#allocation2 + $0x110] sm:$0xff]
      %v502 = vld [vmem:[#allocation2 + $0x120] sm:$0xff]
      %v503 = vld [vmem:[#allocation2 + $0x128] sm:$0xff]
      %v504 = vld [vmem:[#allocation2 + $0x138] sm:$0xff]
      %v505 = vld [vmem:[#allocation2 + $0x140] sm:$0xff]
      %v506 = vld [vmem:[#allocation2 + $0x150] sm:$0xff]
      %v507 = vld [vmem:[#allocation2 + $0x158] sm:$0xff]
      %v508 = vld [vmem:[#allocation2 + $0x168] sm:$0xff]
      %v509 = vld [vmem:[#allocation2 + $0x170] sm:$0xff]
      %v510 = vld [vmem:[#allocation2 + $0x1] sm:$0xff]
      %v511 = vld [vmem:[#allocation2 + $0x9] sm:$0xff]
      %v512 = vld [vmem:[#allocation2 + $0x19] sm:$0xff]
      %v513 = vld [vmem:[#allocation2 + $0x21] sm:$0xff]
      %v514 = vld [vmem:[#allocation2 + $0x31] sm:$0xff]
      %v515 = vld [vmem:[#allocation2 + $0x39] sm:$0xff]
      %v516 = vld [vmem:[#allocation2 + $0x49] sm:$0xff]
      %v517 = vld [vmem:[#allocation2 + $0x51] sm:$0xff]
      %v518 = vld [vmem:[#allocation2 + $0x61] sm:$0xff]
      %v519 = vld [vmem:[#allocation2 + $0x69] sm:$0xff]
      %v520 = vld [vmem:[#allocation2 + $0x79] sm:$0xff]
      %v521 = vld [vmem:[#allocation2 + $0x81] sm:$0xff]
      %v522 = vld [vmem:[#allocation2 + $0x91] sm:$0xff]
      %v523 = vld [vmem:[#allocation2 + $0x99] sm:$0xff]
      %v524 = vld [vmem:[#allocation2 + $0xa9] sm:$0xff]
      %v525 = vld [vmem:[#allocation2 + $0xb1] sm:$0xff]
      %v526 = vld [vmem:[#allocation2 + $0xc1] sm:$0xff]
      %v527 = vld [vmem:[#allocation2 + $0xc9] sm:$0xff]
      %v528 = vld [vmem:[#allocation2 + $0xd9] sm:$0xff]
      %v529 = vld [vmem:[#allocation2 + $0xe1] sm:$0xff]
      %v530 = vld [vmem:[#allocation2 + $0xf1] sm:$0xff]
      %v531 = vld [vmem:[#allocation2 + $0xf9] sm:$0xff]
      %v532 = vld [vmem:[#allocation2 + $0x109] sm:$0xff]
      %v533 = vld [vmem:[#allocation2 + $0x111] sm:$0xff]
      %v534 = vld [vmem:[#allocation2 + $0x121] sm:$0xff]
      %v535 = vld [vmem:[#allocation2 + $0x129] sm:$0xff]
      %v536 = vld [vmem:[#allocation2 + $0x139] sm:$0xff]
      %v537 = vld [vmem:[#allocation2 + $0x141] sm:$0xff]
      %v538 = vld [vmem:[#allocation2 + $0x151] sm:$0xff]
      %v539 = vld [vmem:[#allocation2 + $0x159] sm:$0xff]
      %v540 = vld [vmem:[#allocation2 + $0x169] sm:$0xff]
      %v541 = vld [vmem:[#allocation2 + $0x171] sm:$0xff]
      %v542 = vld [vmem:[#allocation2 + $0x2] sm:$0xff]
      %v543 = vld [vmem:[#allocation2 + $0xa] sm:$0xff]
      %v544 = vld [vmem:[#allocation2 + $0x1a] sm:$0xff]
      %v545 = vld [vmem:[#allocation2 + $0x22] sm:$0xff]
      %v546 = vld [vmem:[#allocation2 + $0x32] sm:$0xff]
      %v547 = vld [vmem:[#allocation2 + $0x3a] sm:$0xff]
      %v548 = vld [vmem:[#allocation2 + $0x4a] sm:$0xff]
      %v549 = vld [vmem:[#allocation2 + $0x52] sm:$0xff]
      %v550 = vld [vmem:[#allocation2 + $0x62] sm:$0xff]
      %v551 = vld [vmem:[#allocation2 + $0x6a] sm:$0xff]
      %v552 = vld [vmem:[#allocation2 + $0x7a] sm:$0xff]
      %v553 = vld [vmem:[#allocation2 + $0x82] sm:$0xff]
      %v554 = vld [vmem:[#allocation2 + $0x92] sm:$0xff]
      %v555 = vld [vmem:[#allocation2 + $0x9a] sm:$0xff]
      %v556 = vld [vmem:[#allocation2 + $0xaa] sm:$0xff]
      %v557 = vld [vmem:[#allocation2 + $0xb2] sm:$0xff]
      %v558 = vld [vmem:[#allocation2 + $0xc2] sm:$0xff]
      %v559 = vld [vmem:[#allocation2 + $0xca] sm:$0xff]
      %v560 = vld [vmem:[#allocation2 + $0xda] sm:$0xff]
      %v561 = vld [vmem:[#allocation2 + $0xe2] sm:$0xff]
      %v562 = vld [vmem:[#allocation2 + $0xf2] sm:$0xff]
      %v563 = vld [vmem:[#allocation2 + $0xfa] sm:$0xff]
      %v564 = vld [vmem:[#allocation2 + $0x10a] sm:$0xff]
      %v565 = vld [vmem:[#allocation2 + $0x112] sm:$0xff]
      %v566 = vld [vmem:[#allocation2 + $0x122] sm:$0xff]
      %v567 = vld [vmem:[#allocation2 + $0x12a] sm:$0xff]
      %v568 = vld [vmem:[#allocation2 + $0x13a] sm:$0xff]
      %v569 = vld [vmem:[#allocation2 + $0x142] sm:$0xff]
      %v570 = vld [vmem:[#allocation2 + $0x152] sm:$0xff]
      %v571 = vld [vmem:[#allocation2 + $0x15a] sm:$0xff]
      %v572 = vld [vmem:[#allocation2 + $0x16a] sm:$0xff]
      %v573 = vld [vmem:[#allocation2 + $0x172] sm:$0xff]
      %v574 = vld [vmem:[%s445] sm:$0xff]
      %v575 = vld [vmem:[%s445 + $0x8] sm:$0xff]
      %v576 = vld [vmem:[%s445 + $0x18] sm:$0xff]
      %v577 = vld [vmem:[%s445 + $0x20] sm:$0xff]
      %v578 = vld [vmem:[%s445 + $0x30] sm:$0xff]
      %v579 = vld [vmem:[%s445 + $0x38] sm:$0xff]
      %v580 = vld [vmem:[%s445 + $0x48] sm:$0xff]
      %v581 = vld [vmem:[%s445 + $0x50] sm:$0xff]
      %v582 = vld [vmem:[%s445 + $0x60] sm:$0xff]
      %v583 = vld [vmem:[%s445 + $0x68] sm:$0xff]
      %v584 = vld [vmem:[%s445 + $0x78] sm:$0xff]
      %v585 = vld [vmem:[%s445 + $0x80] sm:$0xff]
      %v586 = vld [vmem:[%s445 + $0x90] sm:$0xff]
      %v587 = vld [vmem:[%s445 + $0x98] sm:$0xff]
      %v588 = vld [vmem:[%s445 + $0xa8] sm:$0xff]
      %v589 = vld [vmem:[%s445 + $0xb0] sm:$0xff]
      %v590 = vld [vmem:[%s445 + $0xc0] sm:$0xff]
      %v591 = vld [vmem:[%s445 + $0xc8] sm:$0xff]
      %v592 = vld [vmem:[%s445 + $0xd8] sm:$0xff]
      %v593 = vld [vmem:[%s445 + $0xe0] sm:$0xff]
      %v594 = vld [vmem:[%s445 + $0xf0] sm:$0xff]
      %v595 = vld [vmem:[%s445 + $0xf8] sm:$0xff]
      %v596 = vld [vmem:[%s445 + $0x108] sm:$0xff]
      %v597 = vld [vmem:[%s445 + $0x110] sm:$0xff]
      %v598 = vld [vmem:[%s445 + $0x120] sm:$0xff]
      %v599 = vld [vmem:[%s445 + $0x128] sm:$0xff]
      %v600 = vld [vmem:[%s445 + $0x138] sm:$0xff]
      %v601 = vld [vmem:[%s445 + $0x140] sm:$0xff]
      %v602 = vld [vmem:[%s445 + $0x150] sm:$0xff]
      %v603 = vld [vmem:[%s445 + $0x158] sm:$0xff]
      %v604 = vld [vmem:[%s445 + $0x168] sm:$0xff]
      %v605 = vld [vmem:[%s445 + $0x170] sm:$0xff]
      %v606 = vld [vmem:[%s445 + $0x1] sm:$0xff]
      %v607 = vld [vmem:[%s445 + $0x9] sm:$0xff]
      %v608 = vld [vmem:[%s445 + $0x19] sm:$0xff]
      %v609 = vld [vmem:[%s445 + $0x21] sm:$0xff]
      %v610 = vld [vmem:[%s445 + $0x31] sm:$0xff]
      %v611 = vld [vmem:[%s445 + $0x39] sm:$0xff]
      %v612 = vld [vmem:[%s445 + $0x49] sm:$0xff]
      %v613 = vld [vmem:[%s445 + $0x51] sm:$0xff]
      %v614 = vld [vmem:[%s445 + $0x61] sm:$0xff]
      %v615 = vld [vmem:[%s445 + $0x69] sm:$0xff]
      %v616 = vld [vmem:[%s445 + $0x79] sm:$0xff]
      %v617 = vld [vmem:[%s445 + $0x81] sm:$0xff]
      %v618 = vld [vmem:[%s445 + $0x91] sm:$0xff]
      %v619 = vld [vmem:[%s445 + $0x99] sm:$0xff]
      %v620 = vld [vmem:[%s445 + $0xa9] sm:$0xff]
      %v621 = vld [vmem:[%s445 + $0xb1] sm:$0xff]
      %v622 = vld [vmem:[%s445 + $0xc1] sm:$0xff]
      %v623 = vld [vmem:[%s445 + $0xc9] sm:$0xff]
      %v624 = vld [vmem:[%s445 + $0xd9] sm:$0xff]
      %v625 = vld [vmem:[%s445 + $0xe1] sm:$0xff]
      %v626 = vld [vmem:[%s445 + $0xf1] sm:$0xff]
      %v627 = vld [vmem:[%s445 + $0xf9] sm:$0xff]
      %v628 = vld [vmem:[%s445 + $0x109] sm:$0xff]
      %v629 = vld [vmem:[%s445 + $0x111] sm:$0xff]
      %v630 = vld [vmem:[%s445 + $0x121] sm:$0xff]
      %v631 = vld [vmem:[%s445 + $0x129] sm:$0xff]
      %v632 = vld [vmem:[%s445 + $0x139] sm:$0xff]
      %v633 = vld [vmem:[%s445 + $0x141] sm:$0xff]
      %v634 = vld [vmem:[%s445 + $0x151] sm:$0xff]
      %v635 = vld [vmem:[%s445 + $0x159] sm:$0xff]
      %v636 = vld [vmem:[%s445 + $0x169] sm:$0xff]
      %v637 = vld [vmem:[%s445 + $0x171] sm:$0xff]
      %v638 = vld [vmem:[%s445 + $0x2] sm:$0xff]
      %v639 = vld [vmem:[%s445 + $0xa] sm:$0xff]
      %v640 = vld [vmem:[%s445 + $0x1a] sm:$0xff]
      %v641 = vld [vmem:[%s445 + $0x22] sm:$0xff]
      %v642 = vld [vmem:[%s445 + $0x32] sm:$0xff]
      %v643 = vld [vmem:[%s445 + $0x3a] sm:$0xff]
      %v644 = vld [vmem:[%s445 + $0x4a] sm:$0xff]
      %v645 = vld [vmem:[%s445 + $0x52] sm:$0xff]
      %v646 = vld [vmem:[%s445 + $0x62] sm:$0xff]
      %v647 = vld [vmem:[%s445 + $0x6a] sm:$0xff]
      %v648 = vld [vmem:[%s445 + $0x7a] sm:$0xff]
      %v649 = vld [vmem:[%s445 + $0x82] sm:$0xff]
      %v650 = vld [vmem:[%s445 + $0x92] sm:$0xff]
      %v651 = vld [vmem:[%s445 + $0x9a] sm:$0xff]
      %v652 = vld [vmem:[%s445 + $0xaa] sm:$0xff]
      %v653 = vld [vmem:[%s445 + $0xb2] sm:$0xff]
      %v654 = vld [vmem:[%s445 + $0xc2] sm:$0xff]
      %v655 = vld [vmem:[%s445 + $0xca] sm:$0xff]
      %v656 = vld [vmem:[%s445 + $0xda] sm:$0xff]
      %v657 = vld [vmem:[%s445 + $0xe2] sm:$0xff]
      %v658 = vld [vmem:[%s445 + $0xf2] sm:$0xff]
      %v659 = vld [vmem:[%s445 + $0xfa] sm:$0xff]
      %v660 = vld [vmem:[%s445 + $0x10a] sm:$0xff]
      %v661 = vld [vmem:[%s445 + $0x112] sm:$0xff]
      %v662 = vld [vmem:[%s445 + $0x122] sm:$0xff]
      %v663 = vld [vmem:[%s445 + $0x12a] sm:$0xff]
      %v664 = vld [vmem:[%s445 + $0x13a] sm:$0xff]
      %v665 = vld [vmem:[%s445 + $0x142] sm:$0xff]
      %v666 = vld [vmem:[%s445 + $0x152] sm:$0xff]
      %v667 = vld [vmem:[%s445 + $0x15a] sm:$0xff]
      %v668 = vld [vmem:[%s445 + $0x16a] sm:$0xff]
      %v669 = vld [vmem:[%s445 + $0x172] sm:$0xff]
      %s670 = scalar_lea.vmem [#allocation2], 48
      %v671 = vld [vmem:[%s670] sm:$0xff]
      %v672 = vld [vmem:[%s670 + $0x8] sm:$0xff]
      %v673 = vld [vmem:[%s670 + $0x18] sm:$0xff]
      %v674 = vld [vmem:[%s670 + $0x20] sm:$0xff]
      %v675 = vld [vmem:[%s670 + $0x30] sm:$0xff]
      %v676 = vld [vmem:[%s670 + $0x38] sm:$0xff]
      %v677 = vld [vmem:[%s670 + $0x48] sm:$0xff]
      %v678 = vld [vmem:[%s670 + $0x50] sm:$0xff]
      %v679 = vld [vmem:[%s670 + $0x60] sm:$0xff]
      %v680 = vld [vmem:[%s670 + $0x68] sm:$0xff]
      %v681 = vld [vmem:[%s670 + $0x78] sm:$0xff]
      %v682 = vld [vmem:[%s670 + $0x80] sm:$0xff]
      %v683 = vld [vmem:[%s670 + $0x90] sm:$0xff]
      %v684 = vld [vmem:[%s670 + $0x98] sm:$0xff]
      %v685 = vld [vmem:[%s670 + $0xa8] sm:$0xff]
      %v686 = vld [vmem:[%s670 + $0xb0] sm:$0xff]
      %v687 = vld [vmem:[%s670 + $0xc0] sm:$0xff]
      %v688 = vld [vmem:[%s670 + $0xc8] sm:$0xff]
      %v689 = vld [vmem:[%s670 + $0xd8] sm:$0xff]
      %v690 = vld [vmem:[%s670 + $0xe0] sm:$0xff]
      %v691 = vld [vmem:[%s670 + $0xf0] sm:$0xff]
      %v692 = vld [vmem:[%s670 + $0xf8] sm:$0xff]
      %v693 = vld [vmem:[%s670 + $0x108] sm:$0xff]
      %v694 = vld [vmem:[%s670 + $0x110] sm:$0xff]
      %v695 = vld [vmem:[%s670 + $0x120] sm:$0xff]
      %v696 = vld [vmem:[%s670 + $0x128] sm:$0xff]
      %v697 = vld [vmem:[%s670 + $0x138] sm:$0xff]
      %v698 = vld [vmem:[%s670 + $0x140] sm:$0xff]
      %v699 = vld [vmem:[%s670 + $0x150] sm:$0xff]
      %v700 = vld [vmem:[%s670 + $0x158] sm:$0xff]
      %v701 = vld [vmem:[%s670 + $0x168] sm:$0xff]
      %v702 = vld [vmem:[%s670 + $0x170] sm:$0xff]
      %v703 = vld [vmem:[%s670 + $0x1] sm:$0xff]
      %v704 = vld [vmem:[%s670 + $0x9] sm:$0xff]
      %v705 = vld [vmem:[%s670 + $0x19] sm:$0xff]
      %v706 = vld [vmem:[%s670 + $0x21] sm:$0xff]
      %v707 = vld [vmem:[%s670 + $0x31] sm:$0xff]
      %v708 = vld [vmem:[%s670 + $0x39] sm:$0xff]
      %v709 = vld [vmem:[%s670 + $0x49] sm:$0xff]
      %v710 = vld [vmem:[%s670 + $0x51] sm:$0xff]
      %v711 = vld [vmem:[%s670 + $0x61] sm:$0xff]
      %v712 = vld [vmem:[%s670 + $0x69] sm:$0xff]
      %v713 = vld [vmem:[%s670 + $0x79] sm:$0xff]
      %v714 = vld [vmem:[%s670 + $0x81] sm:$0xff]
      %v715 = vld [vmem:[%s670 + $0x91] sm:$0xff]
      %v716 = vld [vmem:[%s670 + $0x99] sm:$0xff]
      %v717 = vld [vmem:[%s670 + $0xa9] sm:$0xff]
      %v718 = vld [vmem:[%s670 + $0xb1] sm:$0xff]
      %v719 = vld [vmem:[%s670 + $0xc1] sm:$0xff]
      %v720 = vld [vmem:[%s670 + $0xc9] sm:$0xff]
      %v721 = vld [vmem:[%s670 + $0xd9] sm:$0xff]
      %v722 = vld [vmem:[%s670 + $0xe1] sm:$0xff]
      %v723 = vld [vmem:[%s670 + $0xf1] sm:$0xff]
      %v724 = vld [vmem:[%s670 + $0xf9] sm:$0xff]
      %v725 = vld [vmem:[%s670 + $0x109] sm:$0xff]
      %v726 = vld [vmem:[%s670 + $0x111] sm:$0xff]
      %v727 = vld [vmem:[%s670 + $0x121] sm:$0xff]
      %v728 = vld [vmem:[%s670 + $0x129] sm:$0xff]
      %v729 = vld [vmem:[%s670 + $0x139] sm:$0xff]
      %v730 = vld [vmem:[%s670 + $0x141] sm:$0xff]
      %v731 = vld [vmem:[%s670 + $0x151] sm:$0xff]
      %v732 = vld [vmem:[%s670 + $0x159] sm:$0xff]
      %v733 = vld [vmem:[%s670 + $0x169] sm:$0xff]
      %v734 = vld [vmem:[%s670 + $0x171] sm:$0xff]
      %v735 = vld [vmem:[%s670 + $0x2] sm:$0xff]
      %v736 = vld [vmem:[%s670 + $0xa] sm:$0xff]
      %v737 = vld [vmem:[%s670 + $0x1a] sm:$0xff]
      %v738 = vld [vmem:[%s670 + $0x22] sm:$0xff]
      %v739 = vld [vmem:[%s670 + $0x32] sm:$0xff]
      %v740 = vld [vmem:[%s670 + $0x3a] sm:$0xff]
      %v741 = vld [vmem:[%s670 + $0x4a] sm:$0xff]
      %v742 = vld [vmem:[%s670 + $0x52] sm:$0xff]
      %v743 = vld [vmem:[%s670 + $0x62] sm:$0xff]
      %v744 = vld [vmem:[%s670 + $0x6a] sm:$0xff]
      %v745 = vld [vmem:[%s670 + $0x7a] sm:$0xff]
      %v746 = vld [vmem:[%s670 + $0x82] sm:$0xff]
      %v747 = vld [vmem:[%s670 + $0x92] sm:$0xff]
      %v748 = vld [vmem:[%s670 + $0x9a] sm:$0xff]
      %v749 = vld [vmem:[%s670 + $0xaa] sm:$0xff]
      %v750 = vld [vmem:[%s670 + $0xb2] sm:$0xff]
      %v751 = vld [vmem:[%s670 + $0xc2] sm:$0xff]
      %v752 = vld [vmem:[%s670 + $0xca] sm:$0xff]
      %v753 = vld [vmem:[%s670 + $0xda] sm:$0xff]
      %v754 = vld [vmem:[%s670 + $0xe2] sm:$0xff]
      %v755 = vld [vmem:[%s670 + $0xf2] sm:$0xff]
      %v756 = vld [vmem:[%s670 + $0xfa] sm:$0xff]
      %v757 = vld [vmem:[%s670 + $0x10a] sm:$0xff]
      %v758 = vld [vmem:[%s670 + $0x112] sm:$0xff]
      %v759 = vld [vmem:[%s670 + $0x122] sm:$0xff]
      %v760 = vld [vmem:[%s670 + $0x12a] sm:$0xff]
      %v761 = vld [vmem:[%s670 + $0x13a] sm:$0xff]
      %v762 = vld [vmem:[%s670 + $0x142] sm:$0xff]
      %v763 = vld [vmem:[%s670 + $0x152] sm:$0xff]
      %v764 = vld [vmem:[%s670 + $0x15a] sm:$0xff]
      %v765 = vld [vmem:[%s670 + $0x16a] sm:$0xff]
      %v766 = vld [vmem:[%s670 + $0x172] sm:$0xff]
      %799 = vrot.lane.b32.xlu0 %v510, 4
      %v800 = vpop.permute.xlu0 %799
      %801 = vrot.lane.b32.xlu0 %v511, 4
      %v802 = vpop.permute.xlu0 %801
      %803 = vrot.lane.b32.xlu0 %v512, 4
      %v804 = vpop.permute.xlu0 %803
      %805 = vrot.lane.b32.xlu0 %v513, 4
      %v806 = vpop.permute.xlu0 %805
      %807 = vrot.lane.b32.xlu0 %v514, 4
      %v808 = vpop.permute.xlu0 %807
      %809 = vrot.lane.b32.xlu0 %v515, 4
      %v810 = vpop.permute.xlu0 %809
      %811 = vrot.lane.b32.xlu0 %v516, 4
      %v812 = vpop.permute.xlu0 %811
      %813 = vrot.lane.b32.xlu0 %v517, 4
      %v814 = vpop.permute.xlu0 %813
      %815 = vrot.lane.b32.xlu0 %v518, 4
      %v816 = vpop.permute.xlu0 %815
      %817 = vrot.lane.b32.xlu0 %v519, 4
      %v818 = vpop.permute.xlu0 %817
      %819 = vrot.lane.b32.xlu0 %v520, 4
      %v820 = vpop.permute.xlu0 %819
      %821 = vrot.lane.b32.xlu0 %v521, 4
      %v822 = vpop.permute.xlu0 %821
      %823 = vrot.lane.b32.xlu0 %v522, 4
      %v824 = vpop.permute.xlu0 %823
      %825 = vrot.lane.b32.xlu0 %v523, 4
      %v826 = vpop.permute.xlu0 %825
      %827 = vrot.lane.b32.xlu0 %v524, 4
      %v828 = vpop.permute.xlu0 %827
      %829 = vrot.lane.b32.xlu0 %v525, 4
      %v830 = vpop.permute.xlu0 %829
      %831 = vrot.lane.b32.xlu0 %v526, 4
      %v832 = vpop.permute.xlu0 %831
      %833 = vrot.lane.b32.xlu0 %v527, 4
      %v834 = vpop.permute.xlu0 %833
      %835 = vrot.lane.b32.xlu0 %v528, 4
      %v836 = vpop.permute.xlu0 %835
      %837 = vrot.lane.b32.xlu0 %v529, 4
      %v838 = vpop.permute.xlu0 %837
      %839 = vrot.lane.b32.xlu0 %v530, 4
      %v840 = vpop.permute.xlu0 %839
      %841 = vrot.lane.b32.xlu0 %v531, 4
      %v842 = vpop.permute.xlu0 %841
      %843 = vrot.lane.b32.xlu0 %v532, 4
      %v844 = vpop.permute.xlu0 %843
      %845 = vrot.lane.b32.xlu0 %v533, 4
      %v846 = vpop.permute.xlu0 %845
      %847 = vrot.lane.b32.xlu0 %v534, 4
      %v848 = vpop.permute.xlu0 %847
      %849 = vrot.lane.b32.xlu0 %v535, 4
      %v850 = vpop.permute.xlu0 %849
      %851 = vrot.lane.b32.xlu0 %v536, 4
      %v852 = vpop.permute.xlu0 %851
      %853 = vrot.lane.b32.xlu0 %v537, 4
      %v854 = vpop.permute.xlu0 %853
      %855 = vrot.lane.b32.xlu0 %v538, 4
      %v856 = vpop.permute.xlu0 %855
      %857 = vrot.lane.b32.xlu0 %v539, 4
      %v858 = vpop.permute.xlu0 %857
      %859 = vrot.lane.b32.xlu0 %v540, 4
      %v860 = vpop.permute.xlu0 %859
      %861 = vrot.lane.b32.xlu0 %v541, 4
      %v862 = vpop.permute.xlu0 %861
      %927 = vrot.lane.b32.xlu0 %v542, 8
      %v928 = vpop.permute.xlu0 %927
      %929 = vrot.lane.b32.xlu0 %v543, 8
      %v930 = vpop.permute.xlu0 %929
      %931 = vrot.lane.b32.xlu0 %v544, 8
      %v932 = vpop.permute.xlu0 %931
      %933 = vrot.lane.b32.xlu0 %v545, 8
      %v934 = vpop.permute.xlu0 %933
      %935 = vrot.lane.b32.xlu0 %v546, 8
      %v936 = vpop.permute.xlu0 %935
      %937 = vrot.lane.b32.xlu0 %v547, 8
      %v938 = vpop.permute.xlu0 %937
      %939 = vrot.lane.b32.xlu0 %v548, 8
      %v940 = vpop.permute.xlu0 %939
      %941 = vrot.lane.b32.xlu0 %v549, 8
      %v942 = vpop.permute.xlu0 %941
      %943 = vrot.lane.b32.xlu0 %v550, 8
      %v944 = vpop.permute.xlu0 %943
      %945 = vrot.lane.b32.xlu0 %v551, 8
      %v946 = vpop.permute.xlu0 %945
      %947 = vrot.lane.b32.xlu0 %v552, 8
      %v948 = vpop.permute.xlu0 %947
      %949 = vrot.lane.b32.xlu0 %v553, 8
      %v950 = vpop.permute.xlu0 %949
      %951 = vrot.lane.b32.xlu0 %v554, 8
      %v952 = vpop.permute.xlu0 %951
      %953 = vrot.lane.b32.xlu0 %v555, 8
      %v954 = vpop.permute.xlu0 %953
      %955 = vrot.lane.b32.xlu0 %v556, 8
      %v956 = vpop.permute.xlu0 %955
      %957 = vrot.lane.b32.xlu0 %v557, 8
      %v958 = vpop.permute.xlu0 %957
      %959 = vrot.lane.b32.xlu0 %v558, 8
      %v960 = vpop.permute.xlu0 %959
      %961 = vrot.lane.b32.xlu0 %v559, 8
      %v962 = vpop.permute.xlu0 %961
      %963 = vrot.lane.b32.xlu0 %v560, 8
      %v964 = vpop.permute.xlu0 %963
      %965 = vrot.lane.b32.xlu0 %v561, 8
      %v966 = vpop.permute.xlu0 %965
      %967 = vrot.lane.b32.xlu0 %v562, 8
      %v968 = vpop.permute.xlu0 %967
      %969 = vrot.lane.b32.xlu0 %v563, 8
      %v970 = vpop.permute.xlu0 %969
      %971 = vrot.lane.b32.xlu0 %v564, 8
      %v972 = vpop.permute.xlu0 %971
      %973 = vrot.lane.b32.xlu0 %v565, 8
      %v974 = vpop.permute.xlu0 %973
      %975 = vrot.lane.b32.xlu0 %v566, 8
      %v976 = vpop.permute.xlu0 %975
      %977 = vrot.lane.b32.xlu0 %v567, 8
      %v978 = vpop.permute.xlu0 %977
      %979 = vrot.lane.b32.xlu0 %v568, 8
      %v980 = vpop.permute.xlu0 %979
      %981 = vrot.lane.b32.xlu0 %v569, 8
      %v982 = vpop.permute.xlu0 %981
      %983 = vrot.lane.b32.xlu0 %v570, 8
      %v984 = vpop.permute.xlu0 %983
      %985 = vrot.lane.b32.xlu0 %v571, 8
      %v986 = vpop.permute.xlu0 %985
      %987 = vrot.lane.b32.xlu0 %v572, 8
      %v988 = vpop.permute.xlu0 %987
      %989 = vrot.lane.b32.xlu0 %v573, 8
      %v990 = vpop.permute.xlu0 %989
      %1055 = vrot.lane.b32.xlu0 %v574, 12
      %v1056 = vpop.permute.xlu0 %1055
      %1057 = vrot.lane.b32.xlu0 %v575, 12
      %v1058 = vpop.permute.xlu0 %1057
      %1059 = vrot.lane.b32.xlu0 %v576, 12
      %v1060 = vpop.permute.xlu0 %1059
      %1061 = vrot.lane.b32.xlu0 %v577, 12
      %v1062 = vpop.permute.xlu0 %1061
      %1063 = vrot.lane.b32.xlu0 %v578, 12
      %v1064 = vpop.permute.xlu0 %1063
      %1065 = vrot.lane.b32.xlu0 %v579, 12
      %v1066 = vpop.permute.xlu0 %1065
      %1067 = vrot.lane.b32.xlu0 %v580, 12
      %v1068 = vpop.permute.xlu0 %1067
      %1069 = vrot.lane.b32.xlu0 %v581, 12
      %v1070 = vpop.permute.xlu0 %1069
      %1071 = vrot.lane.b32.xlu0 %v582, 12
      %v1072 = vpop.permute.xlu0 %1071
      %1073 = vrot.lane.b32.xlu0 %v583, 12
      %v1074 = vpop.permute.xlu0 %1073
      %1075 = vrot.lane.b32.xlu0 %v584, 12
      %v1076 = vpop.permute.xlu0 %1075
      %1077 = vrot.lane.b32.xlu0 %v585, 12
      %v1078 = vpop.permute.xlu0 %1077
      %1079 = vrot.lane.b32.xlu0 %v586, 12
      %v1080 = vpop.permute.xlu0 %1079
      %1081 = vrot.lane.b32.xlu0 %v587, 12
      %v1082 = vpop.permute.xlu0 %1081
      %1083 = vrot.lane.b32.xlu0 %v588, 12
      %v1084 = vpop.permute.xlu0 %1083
      %1085 = vrot.lane.b32.xlu0 %v589, 12
      %v1086 = vpop.permute.xlu0 %1085
      %1087 = vrot.lane.b32.xlu0 %v590, 12
      %v1088 = vpop.permute.xlu0 %1087
      %1089 = vrot.lane.b32.xlu0 %v591, 12
      %v1090 = vpop.permute.xlu0 %1089
      %1091 = vrot.lane.b32.xlu0 %v592, 12
      %v1092 = vpop.permute.xlu0 %1091
      %1093 = vrot.lane.b32.xlu0 %v593, 12
      %v1094 = vpop.permute.xlu0 %1093
      %1095 = vrot.lane.b32.xlu0 %v594, 12
      %v1096 = vpop.permute.xlu0 %1095
      %1097 = vrot.lane.b32.xlu0 %v595, 12
      %v1098 = vpop.permute.xlu0 %1097
      %1099 = vrot.lane.b32.xlu0 %v596, 12
      %v1100 = vpop.permute.xlu0 %1099
      %1101 = vrot.lane.b32.xlu0 %v597, 12
      %v1102 = vpop.permute.xlu0 %1101
      %1103 = vrot.lane.b32.xlu0 %v598, 12
      %v1104 = vpop.permute.xlu0 %1103
      %1105 = vrot.lane.b32.xlu0 %v599, 12
      %v1106 = vpop.permute.xlu0 %1105
      %1107 = vrot.lane.b32.xlu0 %v600, 12
      %v1108 = vpop.permute.xlu0 %1107
      %1109 = vrot.lane.b32.xlu0 %v601, 12
      %v1110 = vpop.permute.xlu0 %1109
      %1111 = vrot.lane.b32.xlu0 %v602, 12
      %v1112 = vpop.permute.xlu0 %1111
      %1113 = vrot.lane.b32.xlu0 %v603, 12
      %v1114 = vpop.permute.xlu0 %1113
      %1115 = vrot.lane.b32.xlu0 %v604, 12
      %v1116 = vpop.permute.xlu0 %1115
      %1117 = vrot.lane.b32.xlu0 %v605, 12
      %v1118 = vpop.permute.xlu0 %1117
      %1183 = vrot.lane.b32.xlu0 %v606, 16
      %v1184 = vpop.permute.xlu0 %1183
      %1185 = vrot.lane.b32.xlu0 %v607, 16
      %v1186 = vpop.permute.xlu0 %1185
      %1187 = vrot.lane.b32.xlu0 %v608, 16
      %v1188 = vpop.permute.xlu0 %1187
      %1189 = vrot.lane.b32.xlu0 %v609, 16
      %v1190 = vpop.permute.xlu0 %1189
      %1191 = vrot.lane.b32.xlu0 %v610, 16
      %v1192 = vpop.permute.xlu0 %1191
      %1193 = vrot.lane.b32.xlu0 %v611, 16
      %v1194 = vpop.permute.xlu0 %1193
      %1195 = vrot.lane.b32.xlu0 %v612, 16
      %v1196 = vpop.permute.xlu0 %1195
      %1197 = vrot.lane.b32.xlu0 %v613, 16
      %v1198 = vpop.permute.xlu0 %1197
      %1199 = vrot.lane.b32.xlu0 %v614, 16
      %v1200 = vpop.permute.xlu0 %1199
      %1201 = vrot.lane.b32.xlu0 %v615, 16
      %v1202 = vpop.permute.xlu0 %1201
      %1203 = vrot.lane.b32.xlu0 %v616, 16
      %v1204 = vpop.permute.xlu0 %1203
      %1205 = vrot.lane.b32.xlu0 %v617, 16
      %v1206 = vpop.permute.xlu0 %1205
      %1207 = vrot.lane.b32.xlu0 %v618, 16
      %v1208 = vpop.permute.xlu0 %1207
      %1209 = vrot.lane.b32.xlu0 %v619, 16
      %v1210 = vpop.permute.xlu0 %1209
      %1211 = vrot.lane.b32.xlu0 %v620, 16
      %v1212 = vpop.permute.xlu0 %1211
      %1213 = vrot.lane.b32.xlu0 %v621, 16
      %v1214 = vpop.permute.xlu0 %1213
      %1215 = vrot.lane.b32.xlu0 %v622, 16
      %v1216 = vpop.permute.xlu0 %1215
      %1217 = vrot.lane.b32.xlu0 %v623, 16
      %v1218 = vpop.permute.xlu0 %1217
      %1219 = vrot.lane.b32.xlu0 %v624, 16
      %v1220 = vpop.permute.xlu0 %1219
      %1221 = vrot.lane.b32.xlu0 %v625, 16
      %v1222 = vpop.permute.xlu0 %1221
      %1223 = vrot.lane.b32.xlu0 %v626, 16
      %v1224 = vpop.permute.xlu0 %1223
      %1225 = vrot.lane.b32.xlu0 %v627, 16
      %v1226 = vpop.permute.xlu0 %1225
      %1227 = vrot.lane.b32.xlu0 %v628, 16
      %v1228 = vpop.permute.xlu0 %1227
      %1229 = vrot.lane.b32.xlu0 %v629, 16
      %v1230 = vpop.permute.xlu0 %1229
      %1231 = vrot.lane.b32.xlu0 %v630, 16
      %v1232 = vpop.permute.xlu0 %1231
      %1233 = vrot.lane.b32.xlu0 %v631, 16
      %v1234 = vpop.permute.xlu0 %1233
      %1235 = vrot.lane.b32.xlu0 %v632, 16
      %v1236 = vpop.permute.xlu0 %1235
      %1237 = vrot.lane.b32.xlu0 %v633, 16
      %v1238 = vpop.permute.xlu0 %1237
      %1239 = vrot.lane.b32.xlu0 %v634, 16
      %v1240 = vpop.permute.xlu0 %1239
      %1241 = vrot.lane.b32.xlu0 %v635, 16
      %v1242 = vpop.permute.xlu0 %1241
      %1243 = vrot.lane.b32.xlu0 %v636, 16
      %v1244 = vpop.permute.xlu0 %1243
      %1245 = vrot.lane.b32.xlu0 %v637, 16
      %v1246 = vpop.permute.xlu0 %1245
      %1311 = vrot.lane.b32.xlu0 %v638, 20
      %v1312 = vpop.permute.xlu0 %1311
      %1313 = vrot.lane.b32.xlu0 %v639, 20
      %v1314 = vpop.permute.xlu0 %1313
      %1315 = vrot.lane.b32.xlu0 %v640, 20
      %v1316 = vpop.permute.xlu0 %1315
      %1317 = vrot.lane.b32.xlu0 %v641, 20
      %v1318 = vpop.permute.xlu0 %1317
      %1319 = vrot.lane.b32.xlu0 %v642, 20
      %v1320 = vpop.permute.xlu0 %1319
      %1321 = vrot.lane.b32.xlu0 %v643, 20
      %v1322 = vpop.permute.xlu0 %1321
      %1323 = vrot.lane.b32.xlu0 %v644, 20
      %v1324 = vpop.permute.xlu0 %1323
      %1325 = vrot.lane.b32.xlu0 %v645, 20
      %v1326 = vpop.permute.xlu0 %1325
      %1327 = vrot.lane.b32.xlu0 %v646, 20
      %v1328 = vpop.permute.xlu0 %1327
      %1329 = vrot.lane.b32.xlu0 %v647, 20
      %v1330 = vpop.permute.xlu0 %1329
      %1331 = vrot.lane.b32.xlu0 %v648, 20
      %v1332 = vpop.permute.xlu0 %1331
      %1333 = vrot.lane.b32.xlu0 %v649, 20
      %v1334 = vpop.permute.xlu0 %1333
      %1335 = vrot.lane.b32.xlu0 %v650, 20
      %v1336 = vpop.permute.xlu0 %1335
      %1337 = vrot.lane.b32.xlu0 %v651, 20
      %v1338 = vpop.permute.xlu0 %1337
      %1339 = vrot.lane.b32.xlu0 %v652, 20
      %v1340 = vpop.permute.xlu0 %1339
      %1341 = vrot.lane.b32.xlu0 %v653, 20
      %v1342 = vpop.permute.xlu0 %1341
      %1343 = vrot.lane.b32.xlu0 %v654, 20
      %v1344 = vpop.permute.xlu0 %1343
      %1345 = vrot.lane.b32.xlu0 %v655, 20
      %v1346 = vpop.permute.xlu0 %1345
      %1347 = vrot.lane.b32.xlu0 %v656, 20
      %v1348 = vpop.permute.xlu0 %1347
      %1349 = vrot.lane.b32.xlu0 %v657, 20
      %v1350 = vpop.permute.xlu0 %1349
      %1351 = vrot.lane.b32.xlu0 %v658, 20
      %v1352 = vpop.permute.xlu0 %1351
      %1353 = vrot.lane.b32.xlu0 %v659, 20
      %v1354 = vpop.permute.xlu0 %1353
      %1355 = vrot.lane.b32.xlu0 %v660, 20
      %v1356 = vpop.permute.xlu0 %1355
      %1357 = vrot.lane.b32.xlu0 %v661, 20
      %v1358 = vpop.permute.xlu0 %1357
      %1359 = vrot.lane.b32.xlu0 %v662, 20
      %v1360 = vpop.permute.xlu0 %1359
      %1361 = vrot.lane.b32.xlu0 %v663, 20
      %v1362 = vpop.permute.xlu0 %1361
      %1363 = vrot.lane.b32.xlu0 %v664, 20
      %v1364 = vpop.permute.xlu0 %1363
      %1365 = vrot.lane.b32.xlu0 %v665, 20
      %v1366 = vpop.permute.xlu0 %1365
      %1367 = vrot.lane.b32.xlu0 %v666, 20
      %v1368 = vpop.permute.xlu0 %1367
      %1369 = vrot.lane.b32.xlu0 %v667, 20
      %v1370 = vpop.permute.xlu0 %1369
      %1371 = vrot.lane.b32.xlu0 %v668, 20
      %v1372 = vpop.permute.xlu0 %1371
      %1373 = vrot.lane.b32.xlu0 %v669, 20
      %v1374 = vpop.permute.xlu0 %1373
      %1439 = vrot.lane.b32.xlu0 %v671, 24
      %v1440 = vpop.permute.xlu0 %1439
      %1441 = vrot.lane.b32.xlu0 %v672, 24
      %v1442 = vpop.permute.xlu0 %1441
      %1443 = vrot.lane.b32.xlu0 %v673, 24
      %v1444 = vpop.permute.xlu0 %1443
      %1445 = vrot.lane.b32.xlu0 %v674, 24
      %v1446 = vpop.permute.xlu0 %1445
      %1447 = vrot.lane.b32.xlu0 %v675, 24
      %v1448 = vpop.permute.xlu0 %1447
      %1449 = vrot.lane.b32.xlu0 %v676, 24
      %v1450 = vpop.permute.xlu0 %1449
      %1451 = vrot.lane.b32.xlu0 %v677, 24
      %v1452 = vpop.permute.xlu0 %1451
      %1453 = vrot.lane.b32.xlu0 %v678, 24
      %v1454 = vpop.permute.xlu0 %1453
      %1455 = vrot.lane.b32.xlu0 %v679, 24
      %v1456 = vpop.permute.xlu0 %1455
      %1457 = vrot.lane.b32.xlu0 %v680, 24
      %v1458 = vpop.permute.xlu0 %1457
      %1459 = vrot.lane.b32.xlu0 %v681, 24
      %v1460 = vpop.permute.xlu0 %1459
      %1461 = vrot.lane.b32.xlu0 %v682, 24
      %v1462 = vpop.permute.xlu0 %1461
      %1463 = vrot.lane.b32.xlu0 %v683, 24
      %v1464 = vpop.permute.xlu0 %1463
      %1465 = vrot.lane.b32.xlu0 %v684, 24
      %v1466 = vpop.permute.xlu0 %1465
      %1467 = vrot.lane.b32.xlu0 %v685, 24
      %v1468 = vpop.permute.xlu0 %1467
      %1469 = vrot.lane.b32.xlu0 %v686, 24
      %v1470 = vpop.permute.xlu0 %1469
      %1471 = vrot.lane.b32.xlu0 %v687, 24
      %v1472 = vpop.permute.xlu0 %1471
      %1473 = vrot.lane.b32.xlu0 %v688, 24
      %v1474 = vpop.permute.xlu0 %1473
      %1475 = vrot.lane.b32.xlu0 %v689, 24
      %v1476 = vpop.permute.xlu0 %1475
      %1477 = vrot.lane.b32.xlu0 %v690, 24
      %v1478 = vpop.permute.xlu0 %1477
      %1479 = vrot.lane.b32.xlu0 %v691, 24
      %v1480 = vpop.permute.xlu0 %1479
      %1481 = vrot.lane.b32.xlu0 %v692, 24
      %v1482 = vpop.permute.xlu0 %1481
      %1483 = vrot.lane.b32.xlu0 %v693, 24
      %v1484 = vpop.permute.xlu0 %1483
      %1485 = vrot.lane.b32.xlu0 %v694, 24
      %v1486 = vpop.permute.xlu0 %1485
      %1487 = vrot.lane.b32.xlu0 %v695, 24
      %v1488 = vpop.permute.xlu0 %1487
      %1489 = vrot.lane.b32.xlu0 %v696, 24
      %v1490 = vpop.permute.xlu0 %1489
      %1491 = vrot.lane.b32.xlu0 %v697, 24
      %v1492 = vpop.permute.xlu0 %1491
      %1493 = vrot.lane.b32.xlu0 %v698, 24
      %v1494 = vpop.permute.xlu0 %1493
      %1495 = vrot.lane.b32.xlu0 %v699, 24
      %v1496 = vpop.permute.xlu0 %1495
      %1497 = vrot.lane.b32.xlu0 %v700, 24
      %v1498 = vpop.permute.xlu0 %1497
      %1499 = vrot.lane.b32.xlu0 %v701, 24
      %v1500 = vpop.permute.xlu0 %1499
      %1501 = vrot.lane.b32.xlu0 %v702, 24
      %v1502 = vpop.permute.xlu0 %1501
      %1567 = vrot.lane.b32.xlu0 %v703, 28
      %v1568 = vpop.permute.xlu0 %1567
      %1569 = vrot.lane.b32.xlu0 %v704, 28
      %v1570 = vpop.permute.xlu0 %1569
      %1571 = vrot.lane.b32.xlu0 %v705, 28
      %v1572 = vpop.permute.xlu0 %1571
      %1573 = vrot.lane.b32.xlu0 %v706, 28
      %v1574 = vpop.permute.xlu0 %1573
      %1575 = vrot.lane.b32.xlu0 %v707, 28
      %v1576 = vpop.permute.xlu0 %1575
      %1577 = vrot.lane.b32.xlu0 %v708, 28
      %v1578 = vpop.permute.xlu0 %1577
      %1579 = vrot.lane.b32.xlu0 %v709, 28
      %v1580 = vpop.permute.xlu0 %1579
      %1581 = vrot.lane.b32.xlu0 %v710, 28
      %v1582 = vpop.permute.xlu0 %1581
      %1583 = vrot.lane.b32.xlu0 %v711, 28
      %v1584 = vpop.permute.xlu0 %1583
      %1585 = vrot.lane.b32.xlu0 %v712, 28
      %v1586 = vpop.permute.xlu0 %1585
      %1587 = vrot.lane.b32.xlu0 %v713, 28
      %v1588 = vpop.permute.xlu0 %1587
      %1589 = vrot.lane.b32.xlu0 %v714, 28
      %v1590 = vpop.permute.xlu0 %1589
      %1591 = vrot.lane.b32.xlu0 %v715, 28
      %v1592 = vpop.permute.xlu0 %1591
      %1593 = vrot.lane.b32.xlu0 %v716, 28
      %v1594 = vpop.permute.xlu0 %1593
      %1595 = vrot.lane.b32.xlu0 %v717, 28
      %v1596 = vpop.permute.xlu0 %1595
      %1597 = vrot.lane.b32.xlu0 %v718, 28
      %v1598 = vpop.permute.xlu0 %1597
      %1599 = vrot.lane.b32.xlu0 %v719, 28
      %v1600 = vpop.permute.xlu0 %1599
      %1601 = vrot.lane.b32.xlu0 %v720, 28
      %v1602 = vpop.permute.xlu0 %1601
      %1603 = vrot.lane.b32.xlu0 %v721, 28
      %v1604 = vpop.permute.xlu0 %1603
      %1605 = vrot.lane.b32.xlu0 %v722, 28
      %v1606 = vpop.permute.xlu0 %1605
      %1607 = vrot.lane.b32.xlu0 %v723, 28
      %v1608 = vpop.permute.xlu0 %1607
      %1609 = vrot.lane.b32.xlu0 %v724, 28
      %v1610 = vpop.permute.xlu0 %1609
      %1611 = vrot.lane.b32.xlu0 %v725, 28
      %v1612 = vpop.permute.xlu0 %1611
      %1613 = vrot.lane.b32.xlu0 %v726, 28
      %v1614 = vpop.permute.xlu0 %1613
      %1615 = vrot.lane.b32.xlu0 %v727, 28
      %v1616 = vpop.permute.xlu0 %1615
      %1617 = vrot.lane.b32.xlu0 %v728, 28
      %v1618 = vpop.permute.xlu0 %1617
      %1619 = vrot.lane.b32.xlu0 %v729, 28
      %v1620 = vpop.permute.xlu0 %1619
      %1621 = vrot.lane.b32.xlu0 %v730, 28
      %v1622 = vpop.permute.xlu0 %1621
      %1623 = vrot.lane.b32.xlu0 %v731, 28
      %v1624 = vpop.permute.xlu0 %1623
      %1625 = vrot.lane.b32.xlu0 %v732, 28
      %v1626 = vpop.permute.xlu0 %1625
      %1627 = vrot.lane.b32.xlu0 %v733, 28
      %v1628 = vpop.permute.xlu0 %1627
      %1629 = vrot.lane.b32.xlu0 %v734, 28
      %v1630 = vpop.permute.xlu0 %1629
      %1695 = vrot.lane.b32.xlu0 %v735, 32
      %v1696 = vpop.permute.xlu0 %1695
      %1697 = vrot.lane.b32.xlu0 %v736, 32
      %v1698 = vpop.permute.xlu0 %1697
      %1699 = vrot.lane.b32.xlu0 %v737, 32
      %v1700 = vpop.permute.xlu0 %1699
      %1701 = vrot.lane.b32.xlu0 %v738, 32
      %v1702 = vpop.permute.xlu0 %1701
      %1703 = vrot.lane.b32.xlu0 %v739, 32
      %v1704 = vpop.permute.xlu0 %1703
      %1705 = vrot.lane.b32.xlu0 %v740, 32
      %v1706 = vpop.permute.xlu0 %1705
      %1707 = vrot.lane.b32.xlu0 %v741, 32
      %v1708 = vpop.permute.xlu0 %1707
      %1709 = vrot.lane.b32.xlu0 %v742, 32
      %v1710 = vpop.permute.xlu0 %1709
      %1711 = vrot.lane.b32.xlu0 %v743, 32
      %v1712 = vpop.permute.xlu0 %1711
      %1713 = vrot.lane.b32.xlu0 %v744, 32
      %v1714 = vpop.permute.xlu0 %1713
      %1715 = vrot.lane.b32.xlu0 %v745, 32
      %v1716 = vpop.permute.xlu0 %1715
      %1717 = vrot.lane.b32.xlu0 %v746, 32
      %v1718 = vpop.permute.xlu0 %1717
      %1719 = vrot.lane.b32.xlu0 %v747, 32
      %v1720 = vpop.permute.xlu0 %1719
      %1721 = vrot.lane.b32.xlu0 %v748, 32
      %v1722 = vpop.permute.xlu0 %1721
      %1723 = vrot.lane.b32.xlu0 %v749, 32
      %v1724 = vpop.permute.xlu0 %1723
      %1725 = vrot.lane.b32.xlu0 %v750, 32
      %v1726 = vpop.permute.xlu0 %1725
      %1727 = vrot.lane.b32.xlu0 %v751, 32
      %v1728 = vpop.permute.xlu0 %1727
      %1729 = vrot.lane.b32.xlu0 %v752, 32
      %v1730 = vpop.permute.xlu0 %1729
      %1731 = vrot.lane.b32.xlu0 %v753, 32
      %v1732 = vpop.permute.xlu0 %1731
      %1733 = vrot.lane.b32.xlu0 %v754, 32
      %v1734 = vpop.permute.xlu0 %1733
      %1735 = vrot.lane.b32.xlu0 %v755, 32
      %v1736 = vpop.permute.xlu0 %1735
      %1737 = vrot.lane.b32.xlu0 %v756, 32
      %v1738 = vpop.permute.xlu0 %1737
      %1739 = vrot.lane.b32.xlu0 %v757, 32
      %v1740 = vpop.permute.xlu0 %1739
      %1741 = vrot.lane.b32.xlu0 %v758, 32
      %v1742 = vpop.permute.xlu0 %1741
      %1743 = vrot.lane.b32.xlu0 %v759, 32
      %v1744 = vpop.permute.xlu0 %1743
      %1745 = vrot.lane.b32.xlu0 %v760, 32
      %v1746 = vpop.permute.xlu0 %1745
      %1747 = vrot.lane.b32.xlu0 %v761, 32
      %v1748 = vpop.permute.xlu0 %1747
      %1749 = vrot.lane.b32.xlu0 %v762, 32
      %v1750 = vpop.permute.xlu0 %1749
      %1751 = vrot.lane.b32.xlu0 %v763, 32
      %v1752 = vpop.permute.xlu0 %1751
      %1753 = vrot.lane.b32.xlu0 %v764, 32
      %v1754 = vpop.permute.xlu0 %1753
      %1755 = vrot.lane.b32.xlu0 %v765, 32
      %v1756 = vpop.permute.xlu0 %1755
      %1757 = vrot.lane.b32.xlu0 %v766, 32
      %v1758 = vpop.permute.xlu0 %1757
      %v1791 = vsel %vm361, %v478, %v800
      %v1792 = vsel %vm361, %v479, %v802
      %v1793 = vsel %vm361, %v480, %v804
      %v1794 = vsel %vm361, %v481, %v806
      %v1795 = vsel %vm361, %v482, %v808
      %v1796 = vsel %vm361, %v483, %v810
      %v1797 = vsel %vm361, %v484, %v812
      %v1798 = vsel %vm361, %v485, %v814
      %v1799 = vsel %vm361, %v486, %v816
      %v1800 = vsel %vm361, %v487, %v818
      %v1801 = vsel %vm361, %v488, %v820
      %v1802 = vsel %vm361, %v489, %v822
      %v1803 = vsel %vm361, %v490, %v824
      %v1804 = vsel %vm361, %v491, %v826
      %v1805 = vsel %vm361, %v492, %v828
      %v1806 = vsel %vm361, %v493, %v830
      %v1807 = vsel %vm361, %v494, %v832
      %v1808 = vsel %vm361, %v495, %v834
      %v1809 = vsel %vm361, %v496, %v836
      %v1810 = vsel %vm361, %v497, %v838
      %v1811 = vsel %vm361, %v498, %v840
      %v1812 = vsel %vm361, %v499, %v842
      %v1813 = vsel %vm361, %v500, %v844
      %v1814 = vsel %vm361, %v501, %v846
      %v1815 = vsel %vm361, %v502, %v848
      %v1816 = vsel %vm361, %v503, %v850
      %v1817 = vsel %vm361, %v504, %v852
      %v1818 = vsel %vm361, %v505, %v854
      %v1819 = vsel %vm361, %v506, %v856
      %v1820 = vsel %vm361, %v507, %v858
      %v1821 = vsel %vm361, %v508, %v860
      %v1822 = vsel %vm361, %v509, %v862
      %vm1823 = vcmask 64512
      %v1824 = vsel %vm1823, %v1791, %v928
      %v1825 = vsel %vm1823, %v1792, %v930
      %v1826 = vsel %vm1823, %v1793, %v932
      %v1827 = vsel %vm1823, %v1794, %v934
      %v1828 = vsel %vm1823, %v1795, %v936
      %v1829 = vsel %vm1823, %v1796, %v938
      %v1830 = vsel %vm1823, %v1797, %v940
      %v1831 = vsel %vm1823, %v1798, %v942
      %v1832 = vsel %vm1823, %v1799, %v944
      %v1833 = vsel %vm1823, %v1800, %v946
      %v1834 = vsel %vm1823, %v1801, %v948
      %v1835 = vsel %vm1823, %v1802, %v950
      %v1836 = vsel %vm1823, %v1803, %v952
      %v1837 = vsel %vm1823, %v1804, %v954
      %v1838 = vsel %vm1823, %v1805, %v956
      %v1839 = vsel %vm1823, %v1806, %v958
      %v1840 = vsel %vm1823, %v1807, %v960
      %v1841 = vsel %vm1823, %v1808, %v962
      %v1842 = vsel %vm1823, %v1809, %v964
      %v1843 = vsel %vm1823, %v1810, %v966
      %v1844 = vsel %vm1823, %v1811, %v968
      %v1845 = vsel %vm1823, %v1812, %v970
      %v1846 = vsel %vm1823, %v1813, %v972
      %v1847 = vsel %vm1823, %v1814, %v974
      %v1848 = vsel %vm1823, %v1815, %v976
      %v1849 = vsel %vm1823, %v1816, %v978
      %v1850 = vsel %vm1823, %v1817, %v980
      %v1851 = vsel %vm1823, %v1818, %v982
      %v1852 = vsel %vm1823, %v1819, %v984
      %v1853 = vsel %vm1823, %v1820, %v986
      %v1854 = vsel %vm1823, %v1821, %v988
      %v1855 = vsel %vm1823, %v1822, %v990
      %vm1856 = vcmask 97280
      %v1857 = vsel %vm1856, %v1824, %v1056
      %v1858 = vsel %vm1856, %v1825, %v1058
      %v1859 = vsel %vm1856, %v1826, %v1060
      %v1860 = vsel %vm1856, %v1827, %v1062
      %v1861 = vsel %vm1856, %v1828, %v1064
      %v1862 = vsel %vm1856, %v1829, %v1066
      %v1863 = vsel %vm1856, %v1830, %v1068
      %v1864 = vsel %vm1856, %v1831, %v1070
      %v1865 = vsel %vm1856, %v1832, %v1072
      %v1866 = vsel %vm1856, %v1833, %v1074
      %v1867 = vsel %vm1856, %v1834, %v1076
      %v1868 = vsel %vm1856, %v1835, %v1078
      %v1869 = vsel %vm1856, %v1836, %v1080
      %v1870 = vsel %vm1856, %v1837, %v1082
      %v1871 = vsel %vm1856, %v1838, %v1084
      %v1872 = vsel %vm1856, %v1839, %v1086
      %v1873 = vsel %vm1856, %v1840, %v1088
      %v1874 = vsel %vm1856, %v1841, %v1090
      %v1875 = vsel %vm1856, %v1842, %v1092
      %v1876 = vsel %vm1856, %v1843, %v1094
      %v1877 = vsel %vm1856, %v1844, %v1096
      %v1878 = vsel %vm1856, %v1845, %v1098
      %v1879 = vsel %vm1856, %v1846, %v1100
      %v1880 = vsel %vm1856, %v1847, %v1102
      %v1881 = vsel %vm1856, %v1848, %v1104
      %v1882 = vsel %vm1856, %v1849, %v1106
      %v1883 = vsel %vm1856, %v1850, %v1108
      %v1884 = vsel %vm1856, %v1851, %v1110
      %v1885 = vsel %vm1856, %v1852, %v1112
      %v1886 = vsel %vm1856, %v1853, %v1114
      %v1887 = vsel %vm1856, %v1854, %v1116
      %v1888 = vsel %vm1856, %v1855, %v1118
      %vm1889 = vcmask 130048
      %v1890 = vsel %vm1889, %v1857, %v1184
      %v1891 = vsel %vm1889, %v1858, %v1186
      %v1892 = vsel %vm1889, %v1859, %v1188
      %v1893 = vsel %vm1889, %v1860, %v1190
      %v1894 = vsel %vm1889, %v1861, %v1192
      %v1895 = vsel %vm1889, %v1862, %v1194
      %v1896 = vsel %vm1889, %v1863, %v1196
      %v1897 = vsel %vm1889, %v1864, %v1198
      %v1898 = vsel %vm1889, %v1865, %v1200
      %v1899 = vsel %vm1889, %v1866, %v1202
      %v1900 = vsel %vm1889, %v1867, %v1204
      %v1901 = vsel %vm1889, %v1868, %v1206
      %v1902 = vsel %vm1889, %v1869, %v1208
      %v1903 = vsel %vm1889, %v1870, %v1210
      %v1904 = vsel %vm1889, %v1871, %v1212
      %v1905 = vsel %vm1889, %v1872, %v1214
      %v1906 = vsel %vm1889, %v1873, %v1216
      %v1907 = vsel %vm1889, %v1874, %v1218
      %v1908 = vsel %vm1889, %v1875, %v1220
      %v1909 = vsel %vm1889, %v1876, %v1222
      %v1910 = vsel %vm1889, %v1877, %v1224
      %v1911 = vsel %vm1889, %v1878, %v1226
      %v1912 = vsel %vm1889, %v1879, %v1228
      %v1913 = vsel %vm1889, %v1880, %v1230
      %v1914 = vsel %vm1889, %v1881, %v1232
      %v1915 = vsel %vm1889, %v1882, %v1234
      %v1916 = vsel %vm1889, %v1883, %v1236
      %v1917 = vsel %vm1889, %v1884, %v1238
      %v1918 = vsel %vm1889, %v1885, %v1240
      %v1919 = vsel %vm1889, %v1886, %v1242
      %v1920 = vsel %vm1889, %v1887, %v1244
      %v1921 = vsel %vm1889, %v1888, %v1246
      %vm1922 = vcmask 162816
      %v1923 = vsel %vm1922, %v1890, %v1312
      %v1924 = vsel %vm1922, %v1891, %v1314
      %v1925 = vsel %vm1922, %v1892, %v1316
      %v1926 = vsel %vm1922, %v1893, %v1318
      %v1927 = vsel %vm1922, %v1894, %v1320
      %v1928 = vsel %vm1922, %v1895, %v1322
      %v1929 = vsel %vm1922, %v1896, %v1324
      %v1930 = vsel %vm1922, %v1897, %v1326
      %v1931 = vsel %vm1922, %v1898, %v1328
      %v1932 = vsel %vm1922, %v1899, %v1330
      %v1933 = vsel %vm1922, %v1900, %v1332
      %v1934 = vsel %vm1922, %v1901, %v1334
      %v1935 = vsel %vm1922, %v1902, %v1336
      %v1936 = vsel %vm1922, %v1903, %v1338
      %v1937 = vsel %vm1922, %v1904, %v1340
      %v1938 = vsel %vm1922, %v1905, %v1342
      %v1939 = vsel %vm1922, %v1906, %v1344
      %v1940 = vsel %vm1922, %v1907, %v1346
      %v1941 = vsel %vm1922, %v1908, %v1348
      %v1942 = vsel %vm1922, %v1909, %v1350
      %v1943 = vsel %vm1922, %v1910, %v1352
      %v1944 = vsel %vm1922, %v1911, %v1354
      %v1945 = vsel %vm1922, %v1912, %v1356
      %v1946 = vsel %vm1922, %v1913, %v1358
      %v1947 = vsel %vm1922, %v1914, %v1360
      %v1948 = vsel %vm1922, %v1915, %v1362
      %v1949 = vsel %vm1922, %v1916, %v1364
      %v1950 = vsel %vm1922, %v1917, %v1366
      %v1951 = vsel %vm1922, %v1918, %v1368
      %v1952 = vsel %vm1922, %v1919, %v1370
      %v1953 = vsel %vm1922, %v1920, %v1372
      %v1954 = vsel %vm1922, %v1921, %v1374
      %vm1955 = vcmask 195584
      %v1956 = vsel %vm1955, %v1923, %v1440
      %v1957 = vsel %vm1955, %v1924, %v1442
      %v1958 = vsel %vm1955, %v1925, %v1444
      %v1959 = vsel %vm1955, %v1926, %v1446
      %v1960 = vsel %vm1955, %v1927, %v1448
      %v1961 = vsel %vm1955, %v1928, %v1450
      %v1962 = vsel %vm1955, %v1929, %v1452
      %v1963 = vsel %vm1955, %v1930, %v1454
      %v1964 = vsel %vm1955, %v1931, %v1456
      %v1965 = vsel %vm1955, %v1932, %v1458
      %v1966 = vsel %vm1955, %v1933, %v1460
      %v1967 = vsel %vm1955, %v1934, %v1462
      %v1968 = vsel %vm1955, %v1935, %v1464
      %v1969 = vsel %vm1955, %v1936, %v1466
      %v1970 = vsel %vm1955, %v1937, %v1468
      %v1971 = vsel %vm1955, %v1938, %v1470
      %v1972 = vsel %vm1955, %v1939, %v1472
      %v1973 = vsel %vm1955, %v1940, %v1474
      %v1974 = vsel %vm1955, %v1941, %v1476
      %v1975 = vsel %vm1955, %v1942, %v1478
      %v1976 = vsel %vm1955, %v1943, %v1480
      %v1977 = vsel %vm1955, %v1944, %v1482
      %v1978 = vsel %vm1955, %v1945, %v1484
      %v1979 = vsel %vm1955, %v1946, %v1486
      %v1980 = vsel %vm1955, %v1947, %v1488
      %v1981 = vsel %vm1955, %v1948, %v1490
      %v1982 = vsel %vm1955, %v1949, %v1492
      %v1983 = vsel %vm1955, %v1950, %v1494
      %v1984 = vsel %vm1955, %v1951, %v1496
      %v1985 = vsel %vm1955, %v1952, %v1498
      %v1986 = vsel %vm1955, %v1953, %v1500
      %v1987 = vsel %vm1955, %v1954, %v1502
      %vm1988 = vcmask 228352
      %v1989 = vsel %vm1988, %v1956, %v1568
      %v1990 = vsel %vm1988, %v1957, %v1570
      %v1991 = vsel %vm1988, %v1958, %v1572
      %v1992 = vsel %vm1988, %v1959, %v1574
      %v1993 = vsel %vm1988, %v1960, %v1576
      %v1994 = vsel %vm1988, %v1961, %v1578
      %v1995 = vsel %vm1988, %v1962, %v1580
      %v1996 = vsel %vm1988, %v1963, %v1582
      %v1997 = vsel %vm1988, %v1964, %v1584
      %v1998 = vsel %vm1988, %v1965, %v1586
      %v1999 = vsel %vm1988, %v1966, %v1588
      %v2000 = vsel %vm1988, %v1967, %v1590
      %v2001 = vsel %vm1988, %v1968, %v1592
      %v2002 = vsel %vm1988, %v1969, %v1594
      %v2003 = vsel %vm1988, %v1970, %v1596
      %v2004 = vsel %vm1988, %v1971, %v1598
      %v2005 = vsel %vm1988, %v1972, %v1600
      %v2006 = vsel %vm1988, %v1973, %v1602
      %v2007 = vsel %vm1988, %v1974, %v1604
      %v2008 = vsel %vm1988, %v1975, %v1606
      %v2009 = vsel %vm1988, %v1976, %v1608
      %v2010 = vsel %vm1988, %v1977, %v1610
      %v2011 = vsel %vm1988, %v1978, %v1612
      %v2012 = vsel %vm1988, %v1979, %v1614
      %v2013 = vsel %vm1988, %v1980, %v1616
      %v2014 = vsel %vm1988, %v1981, %v1618
      %v2015 = vsel %vm1988, %v1982, %v1620
      %v2016 = vsel %vm1988, %v1983, %v1622
      %v2017 = vsel %vm1988, %v1984, %v1624
      %v2018 = vsel %vm1988, %v1985, %v1626
      %v2019 = vsel %vm1988, %v1986, %v1628
      %v2020 = vsel %vm1988, %v1987, %v1630
      %vm2021 = vcmask 261120
      %v2022 = vsel %vm2021, %v1989, %v1696
      %v2023 = vsel %vm2021, %v1990, %v1698
      %v2024 = vsel %vm2021, %v1991, %v1700
      %v2025 = vsel %vm2021, %v1992, %v1702
      %v2026 = vsel %vm2021, %v1993, %v1704
      %v2027 = vsel %vm2021, %v1994, %v1706
      %v2028 = vsel %vm2021, %v1995, %v1708
      %v2029 = vsel %vm2021, %v1996, %v1710
      %v2030 = vsel %vm2021, %v1997, %v1712
      %v2031 = vsel %vm2021, %v1998, %v1714
      %v2032 = vsel %vm2021, %v1999, %v1716
      %v2033 = vsel %vm2021, %v2000, %v1718
      %v2034 = vsel %vm2021, %v2001, %v1720
      %v2035 = vsel %vm2021, %v2002, %v1722
      %v2036 = vsel %vm2021, %v2003, %v1724
      %v2037 = vsel %vm2021, %v2004, %v1726
      %v2038 = vsel %vm2021, %v2005, %v1728
      %v2039 = vsel %vm2021, %v2006, %v1730
      %v2040 = vsel %vm2021, %v2007, %v1732
      %v2041 = vsel %vm2021, %v2008, %v1734
      %v2042 = vsel %vm2021, %v2009, %v1736
      %v2043 = vsel %vm2021, %v2010, %v1738
      %v2044 = vsel %vm2021, %v2011, %v1740
      %v2045 = vsel %vm2021, %v2012, %v1742
      %v2046 = vsel %vm2021, %v2013, %v1744
      %v2047 = vsel %vm2021, %v2014, %v1746
      %v2048 = vsel %vm2021, %v2015, %v1748
      %v2049 = vsel %vm2021, %v2016, %v1750
      %v2050 = vsel %vm2021, %v2017, %v1752
      %v2051 = vsel %vm2021, %v2018, %v1754
      %v2052 = vsel %vm2021, %v2019, %v1756
      %v2053 = vsel %vm2021, %v2020, %v1758
      %v2054 = vpack.c.bf16 %v2022, %v2022
      %v2055 = vpack.c.bf16 %v2023, %v2023
      %v2056 = vpack.c.bf16 %v2024, %v2024
      %v2057 = vpack.c.bf16 %v2025, %v2025
      %v2058 = vpack.c.bf16 %v2026, %v2026
      %v2059 = vpack.c.bf16 %v2027, %v2027
      %v2060 = vpack.c.bf16 %v2028, %v2028
      %v2061 = vpack.c.bf16 %v2029, %v2029
      %v2062 = vpack.c.bf16 %v2030, %v2030
      %v2063 = vpack.c.bf16 %v2031, %v2031
      %v2064 = vpack.c.bf16 %v2032, %v2032
      %v2065 = vpack.c.bf16 %v2033, %v2033
      %v2066 = vpack.c.bf16 %v2034, %v2034
      %v2067 = vpack.c.bf16 %v2035, %v2035
      %v2068 = vpack.c.bf16 %v2036, %v2036
      %v2069 = vpack.c.bf16 %v2037, %v2037
      %v2070 = vpack.c.bf16 %v2038, %v2038
      %v2071 = vpack.c.bf16 %v2039, %v2039
      %v2072 = vpack.c.bf16 %v2040, %v2040
      %v2073 = vpack.c.bf16 %v2041, %v2041
      %v2074 = vpack.c.bf16 %v2042, %v2042
      %v2075 = vpack.c.bf16 %v2043, %v2043
      %v2076 = vpack.c.bf16 %v2044, %v2044
      %v2077 = vpack.c.bf16 %v2045, %v2045
      %v2078 = vpack.c.bf16 %v2046, %v2046
      %v2079 = vpack.c.bf16 %v2047, %v2047
      %v2080 = vpack.c.bf16 %v2048, %v2048
      %v2081 = vpack.c.bf16 %v2049, %v2049
      %v2082 = vpack.c.bf16 %v2050, %v2050
      %v2083 = vpack.c.bf16 %v2051, %v2051
      %v2084 = vpack.c.bf16 %v2052, %v2052
      %v2085 = vpack.c.bf16 %v2053, %v2053
      %v2086 = vld [vmem:[%s1] sm:$0xf]
      %v2087 = vld [vmem:[%s1 + $0x4] sm:$0xf]
      %v2088 = vld [vmem:[%s1 + $0x8] sm:$0xf]
      %v2089 = vld [vmem:[%s1 + $0xc] sm:$0xf]
      %v2090 = vld [vmem:[%s1 + $0x10] sm:$0x3]
      %v2123 = vunpack.c.l.b16 %v2054
      %v2124 = vunpack.c.l.b16 %v2055
      %v2125 = vunpack.c.l.b16 %v2056
      %v2126 = vunpack.c.l.b16 %v2057
      %v2127 = vunpack.c.l.b16 %v2058
      %v2128 = vunpack.c.l.b16 %v2059
      %v2129 = vunpack.c.l.b16 %v2060
      %v2130 = vunpack.c.l.b16 %v2061
      %v2131 = vunpack.c.l.b16 %v2062
      %v2132 = vunpack.c.l.b16 %v2063
      %v2133 = vunpack.c.l.b16 %v2064
      %v2134 = vunpack.c.l.b16 %v2065
      %v2135 = vunpack.c.l.b16 %v2066
      %v2136 = vunpack.c.l.b16 %v2067
      %v2137 = vunpack.c.l.b16 %v2068
      %v2138 = vunpack.c.l.b16 %v2069
      %v2139 = vunpack.c.l.b16 %v2070
      %v2140 = vunpack.c.l.b16 %v2071
      %v2141 = vunpack.c.l.b16 %v2072
      %v2142 = vunpack.c.l.b16 %v2073
      %v2143 = vunpack.c.l.b16 %v2074
      %v2144 = vunpack.c.l.b16 %v2075
      %v2145 = vunpack.c.l.b16 %v2076
      %v2146 = vunpack.c.l.b16 %v2077
      %v2147 = vunpack.c.l.b16 %v2078
      %v2148 = vunpack.c.l.b16 %v2079
      %v2149 = vunpack.c.l.b16 %v2080
      %v2150 = vunpack.c.l.b16 %v2081
      %v2151 = vunpack.c.l.b16 %v2082
      %v2152 = vunpack.c.l.b16 %v2083
      %v2153 = vunpack.c.l.b16 %v2084
      %v2154 = vunpack.c.l.b16 %v2085
      %v2155 = vpack.c.b16 %v2124, %v2123
      %v2156 = vpack.c.b16 %v2126, %v2125
      %v2157 = vpack.c.b16 %v2128, %v2127
      %v2158 = vpack.c.b16 %v2130, %v2129
      %v2159 = vpack.c.b16 %v2132, %v2131
      %v2160 = vpack.c.b16 %v2134, %v2133
      %v2161 = vpack.c.b16 %v2136, %v2135
      %v2162 = vpack.c.b16 %v2138, %v2137
      %v2163 = vpack.c.b16 %v2140, %v2139
      %v2164 = vpack.c.b16 %v2142, %v2141
      %v2165 = vpack.c.b16 %v2144, %v2143
      %v2166 = vpack.c.b16 %v2146, %v2145
      %v2167 = vpack.c.b16 %v2148, %v2147
      %v2168 = vpack.c.b16 %v2150, %v2149
      %v2169 = vpack.c.b16 %v2152, %v2151
      %v2170 = vpack.c.b16 %v2154, %v2153
      %v2176 = vunpack.c.l.b16 %v2086
      %v2177 = vunpack.c.l.b16 %v2087
      %v2178 = vunpack.c.l.b16 %v2088
      %v2179 = vunpack.c.l.b16 %v2089
      %v2180 = vunpack.c.l.b16 %v2090
      %v2181 = vpack.c.b16 %v2177, %v2176
      %v2182 = vpack.c.b16 %v2179, %v2178
      %v2183 = vpack.c.b16 %v2180, %v2180
      %vm2186 = vcmask 293888
      %v2188 = vsel %vm2186, %v2155, 0
      %v2191 = vsel %vm2186, %v2156, 0
      %v2194 = vsel %vm2186, %v2157, 0
      %v2197 = vsel %vm2186, %v2158, 0
      %v2200 = vsel %vm2186, %v2159, 0
      %v2203 = vsel %vm2186, %v2160, 0
      %v2206 = vsel %vm2186, %v2161, 0
      %v2209 = vsel %vm2186, %v2162, 0
      %v2212 = vsel %vm2186, %v2163, 0
      %v2215 = vsel %vm2186, %v2164, 0
      %v2218 = vsel %vm2186, %v2165, 0
      %v2221 = vsel %vm2186, %v2166, 0
      %v2224 = vsel %vm2186, %v2167, 0
      %v2227 = vsel %vm2186, %v2168, 0
      %v2230 = vsel %vm2186, %v2169, 0
      %v2233 = vsel %vm2186, %v2170, 0
      %vm2235 = vcmask 1041408
      %v2237 = vsel %vm2235, %v2183, 0
      %2239 = vmatpush.bf16.msra.mxu0 0
      %2240 = vmatpush.bf16.msra.mxu0 0
      %2241 = vmatpush.bf16.msra.mxu0 0
      %2242 = vmatpush.bf16.msra.mxu0 0
      %2243 = vmatpush.bf16.msra.mxu0 0
      %2244 = vmatpush.bf16.msra.mxu0 %v2237
      %2245 = vmatpush.bf16.msra.mxu0 %v2182
      %2246 = vmatpush.bf16.msra.mxu0 %v2181
      %2247 = vmatmul.bf16.gmra.mxu0 %v2188
      %v2248 = vpop.f32.mrf.mxu0
      %v2249 = vadd.f32 0.0, %v2248
      %v2250 = vpop.f32.mrf.mxu0
      %v2251 = vadd.f32 0.0, %v2250
      %2252 = vmatmul.bf16.gmra.mxu0 %v2191
      %v2253 = vpop.f32.mrf.mxu0
      %v2254 = vadd.f32 0.0, %v2253
      %v2255 = vpop.f32.mrf.mxu0
      %v2256 = vadd.f32 0.0, %v2255
      %2257 = vmatmul.bf16.gmra.mxu0 %v2194
      %v2258 = vpop.f32.mrf.mxu0
      %v2259 = vadd.f32 0.0, %v2258
      %v2260 = vpop.f32.mrf.mxu0
      %v2261 = vadd.f32 0.0, %v2260
      %2262 = vmatmul.bf16.gmra.mxu0 %v2197
      %v2263 = vpop.f32.mrf.mxu0
      %v2264 = vadd.f32 0.0, %v2263
      %v2265 = vpop.f32.mrf.mxu0
      %v2266 = vadd.f32 0.0, %v2265
      %2267 = vmatmul.bf16.gmra.mxu0 %v2200
      %v2268 = vpop.f32.mrf.mxu0
      %v2269 = vadd.f32 0.0, %v2268
      %v2270 = vpop.f32.mrf.mxu0
      %v2271 = vadd.f32 0.0, %v2270
      %2272 = vmatmul.bf16.gmra.mxu0 %v2203
      %v2273 = vpop.f32.mrf.mxu0
      %v2274 = vadd.f32 0.0, %v2273
      %v2275 = vpop.f32.mrf.mxu0
      %v2276 = vadd.f32 0.0, %v2275
      %2277 = vmatmul.bf16.gmra.mxu0 %v2206
      %v2278 = vpop.f32.mrf.mxu0
      %v2279 = vadd.f32 0.0, %v2278
      %v2280 = vpop.f32.mrf.mxu0
      %v2281 = vadd.f32 0.0, %v2280
      %2282 = vmatmul.bf16.gmra.mxu0 %v2209
      %v2283 = vpop.f32.mrf.mxu0
      %v2284 = vadd.f32 0.0, %v2283
      %v2285 = vpop.f32.mrf.mxu0
      %v2286 = vadd.f32 0.0, %v2285
      %2287 = vmatmul.bf16.gmra.mxu0 %v2212
      %v2288 = vpop.f32.mrf.mxu0
      %v2289 = vadd.f32 0.0, %v2288
      %v2290 = vpop.f32.mrf.mxu0
      %v2291 = vadd.f32 0.0, %v2290
      %2292 = vmatmul.bf16.gmra.mxu0 %v2215
      %v2293 = vpop.f32.mrf.mxu0
      %v2294 = vadd.f32 0.0, %v2293
      %v2295 = vpop.f32.mrf.mxu0
      %v2296 = vadd.f32 0.0, %v2295
      %2297 = vmatmul.bf16.gmra.mxu0 %v2218
      %v2298 = vpop.f32.mrf.mxu0
      %v2299 = vadd.f32 0.0, %v2298
      %v2300 = vpop.f32.mrf.mxu0
      %v2301 = vadd.f32 0.0, %v2300
      %2302 = vmatmul.bf16.gmra.mxu0 %v2221
      %v2303 = vpop.f32.mrf.mxu0
      %v2304 = vadd.f32 0.0, %v2303
      %v2305 = vpop.f32.mrf.mxu0
      %v2306 = vadd.f32 0.0, %v2305
      %2307 = vmatmul.bf16.gmra.mxu0 %v2224
      %v2308 = vpop.f32.mrf.mxu0
      %v2309 = vadd.f32 0.0, %v2308
      %v2310 = vpop.f32.mrf.mxu0
      %v2311 = vadd.f32 0.0, %v2310
      %2312 = vmatmul.bf16.gmra.mxu0 %v2227
      %v2313 = vpop.f32.mrf.mxu0
      %v2314 = vadd.f32 0.0, %v2313
      %v2315 = vpop.f32.mrf.mxu0
      %v2316 = vadd.f32 0.0, %v2315
      %2317 = vmatmul.bf16.gmra.mxu0 %v2230
      %v2318 = vpop.f32.mrf.mxu0
      %v2319 = vadd.f32 0.0, %v2318
      %v2320 = vpop.f32.mrf.mxu0
      %v2321 = vadd.f32 0.0, %v2320
      %2322 = vmatmul.bf16.gmra.mxu0 %v2233
      %v2323 = vpop.f32.mrf.mxu0
      %v2324 = vadd.f32 0.0, %v2323
      %v2325 = vpop.f32.mrf.mxu0
      %v2326 = vadd.f32 0.0, %v2325
      %2327 = vdwg.mxu0
      %v2329 = vperm.slane %v407, 0
      %v2331 = vmul.f32 %v2249, %v2329
      %v2332 = vmul.f32 %v2251, %v2329
      %v2333 = vmul.f32 %v2254, %v2329
      %v2334 = vmul.f32 %v2256, %v2329
      %v2335 = vmul.f32 %v2259, %v2329
      %v2336 = vmul.f32 %v2261, %v2329
      %v2337 = vmul.f32 %v2264, %v2329
      %v2338 = vmul.f32 %v2266, %v2329
      %v2339 = vmul.f32 %v2269, %v2329
      %v2340 = vmul.f32 %v2271, %v2329
      %v2341 = vmul.f32 %v2274, %v2329
      %v2342 = vmul.f32 %v2276, %v2329
      %v2343 = vmul.f32 %v2279, %v2329
      %v2344 = vmul.f32 %v2281, %v2329
      %v2345 = vmul.f32 %v2284, %v2329
      %v2346 = vmul.f32 %v2286, %v2329
      %v2347 = vmul.f32 %v2289, %v2329
      %v2348 = vmul.f32 %v2291, %v2329
      %v2349 = vmul.f32 %v2294, %v2329
      %v2350 = vmul.f32 %v2296, %v2329
      %v2351 = vmul.f32 %v2299, %v2329
      %v2352 = vmul.f32 %v2301, %v2329
      %v2353 = vmul.f32 %v2304, %v2329
      %v2354 = vmul.f32 %v2306, %v2329
      %v2355 = vmul.f32 %v2309, %v2329
      %v2356 = vmul.f32 %v2311, %v2329
      %v2357 = vmul.f32 %v2314, %v2329
      %v2358 = vmul.f32 %v2316, %v2329
      %v2359 = vmul.f32 %v2319, %v2329
      %v2360 = vmul.f32 %v2321, %v2329
      %v2361 = vmul.f32 %v2324, %v2329
      %v2362 = vmul.f32 %v2326, %v2329
      %v2364 = vperm.slane %v408, 0
      %v2366 = vadd.f32 %v2331, %v2364
      %v2367 = vadd.f32 %v2332, %v2364
      %v2368 = vadd.f32 %v2333, %v2364
      %v2369 = vadd.f32 %v2334, %v2364
      %v2370 = vadd.f32 %v2335, %v2364
      %v2371 = vadd.f32 %v2336, %v2364
      %v2372 = vadd.f32 %v2337, %v2364
      %v2373 = vadd.f32 %v2338, %v2364
      %v2374 = vadd.f32 %v2339, %v2364
      %v2375 = vadd.f32 %v2340, %v2364
      %v2376 = vadd.f32 %v2341, %v2364
      %v2377 = vadd.f32 %v2342, %v2364
      %v2378 = vadd.f32 %v2343, %v2364
      %v2379 = vadd.f32 %v2344, %v2364
      %v2380 = vadd.f32 %v2345, %v2364
      %v2381 = vadd.f32 %v2346, %v2364
      %v2382 = vadd.f32 %v2347, %v2364
      %v2383 = vadd.f32 %v2348, %v2364
      %v2384 = vadd.f32 %v2349, %v2364
      %v2385 = vadd.f32 %v2350, %v2364
      %v2386 = vadd.f32 %v2351, %v2364
      %v2387 = vadd.f32 %v2352, %v2364
      %v2388 = vadd.f32 %v2353, %v2364
      %v2389 = vadd.f32 %v2354, %v2364
      %v2390 = vadd.f32 %v2355, %v2364
      %v2391 = vadd.f32 %v2356, %v2364
      %v2392 = vadd.f32 %v2357, %v2364
      %v2393 = vadd.f32 %v2358, %v2364
      %v2394 = vadd.f32 %v2359, %v2364
      %v2395 = vadd.f32 %v2360, %v2364
      %v2396 = vadd.f32 %v2361, %v2364
      %v2397 = vadd.f32 %v2362, %v2364
      %v2398 = vadd.f32 %v413, %v2366
      %v2399 = vadd.f32 %v414, %v2367
      %v2400 = vadd.f32 %v415, %v2368
      %v2401 = vadd.f32 %v416, %v2369
      %v2402 = vadd.f32 %v417, %v2370
      %v2403 = vadd.f32 %v418, %v2371
      %v2404 = vadd.f32 %v419, %v2372
      %v2405 = vadd.f32 %v420, %v2373
      %v2406 = vadd.f32 %v421, %v2374
      %v2407 = vadd.f32 %v422, %v2375
      %v2408 = vadd.f32 %v423, %v2376
      %v2409 = vadd.f32 %v424, %v2377
      %v2410 = vadd.f32 %v425, %v2378
      %v2411 = vadd.f32 %v426, %v2379
      %v2412 = vadd.f32 %v427, %v2380
      %v2413 = vadd.f32 %v428, %v2381
      %v2414 = vadd.f32 %v429, %v2382
      %v2415 = vadd.f32 %v430, %v2383
      %v2416 = vadd.f32 %v431, %v2384
      %v2417 = vadd.f32 %v432, %v2385
      %v2418 = vadd.f32 %v433, %v2386
      %v2419 = vadd.f32 %v434, %v2387
      %v2420 = vadd.f32 %v435, %v2388
      %v2421 = vadd.f32 %v436, %v2389
      %v2422 = vadd.f32 %v437, %v2390
      %v2423 = vadd.f32 %v438, %v2391
      %v2424 = vadd.f32 %v439, %v2392
      %v2425 = vadd.f32 %v440, %v2393
      %v2426 = vadd.f32 %v441, %v2394
      %v2427 = vadd.f32 %v442, %v2395
      %v2428 = vadd.f32 %v443, %v2396
      %v2429 = vadd.f32 %v444, %v2397
      %v2430 = vxor.u32 %v2398, 2147483648
      %v2431 = vxor.u32 %v2399, 2147483648
      %v2432 = vxor.u32 %v2400, 2147483648
      %v2433 = vxor.u32 %v2401, 2147483648
      %v2434 = vxor.u32 %v2402, 2147483648
      %v2435 = vxor.u32 %v2403, 2147483648
      %v2436 = vxor.u32 %v2404, 2147483648
      %v2437 = vxor.u32 %v2405, 2147483648
      %v2438 = vxor.u32 %v2406, 2147483648
      %v2439 = vxor.u32 %v2407, 2147483648
      %v2440 = vxor.u32 %v2408, 2147483648
      %v2441 = vxor.u32 %v2409, 2147483648
      %v2442 = vxor.u32 %v2410, 2147483648
      %v2443 = vxor.u32 %v2411, 2147483648
      %v2444 = vxor.u32 %v2412, 2147483648
      %v2445 = vxor.u32 %v2413, 2147483648
      %v2446 = vxor.u32 %v2414, 2147483648
      %v2447 = vxor.u32 %v2415, 2147483648
      %v2448 = vxor.u32 %v2416, 2147483648
      %v2449 = vxor.u32 %v2417, 2147483648
      %v2450 = vxor.u32 %v2418, 2147483648
      %v2451 = vxor.u32 %v2419, 2147483648
      %v2452 = vxor.u32 %v2420, 2147483648
      %v2453 = vxor.u32 %v2421, 2147483648
      %v2454 = vxor.u32 %v2422, 2147483648
      %v2455 = vxor.u32 %v2423, 2147483648
      %v2456 = vxor.u32 %v2424, 2147483648
      %v2457 = vxor.u32 %v2425, 2147483648
      %v2458 = vxor.u32 %v2426, 2147483648
      %v2459 = vxor.u32 %v2427, 2147483648
      %v2460 = vxor.u32 %v2428, 2147483648
      %v2461 = vxor.u32 %v2429, 2147483648
      %v2462 = vmul.f32 %v2430, 1.442695
      %v2463 = vpow.pop %v2462
      %v2464 = vmul.f32 %v2431, 1.442695
      %v2465 = vpow.pop %v2464
      %v2466 = vmul.f32 %v2432, 1.442695
      %v2467 = vpow.pop %v2466
      %v2468 = vmul.f32 %v2433, 1.442695
      %v2469 = vpow.pop %v2468
      %v2470 = vmul.f32 %v2434, 1.442695
      %v2471 = vpow.pop %v2470
      %v2472 = vmul.f32 %v2435, 1.442695
      %v2473 = vpow.pop %v2472
      %v2474 = vmul.f32 %v2436, 1.442695
      %v2475 = vpow.pop %v2474
      %v2476 = vmul.f32 %v2437, 1.442695
      %v2477 = vpow.pop %v2476
      %v2478 = vmul.f32 %v2438, 1.442695
      %v2479 = vpow.pop %v2478
      %v2480 = vmul.f32 %v2439, 1.442695
      %v2481 = vpow.pop %v2480
      %v2482 = vmul.f32 %v2440, 1.442695
      %v2483 = vpow.pop %v2482
      %v2484 = vmul.f32 %v2441, 1.442695
      %v2485 = vpow.pop %v2484
      %v2486 = vmul.f32 %v2442, 1.442695
      %v2487 = vpow.pop %v2486
      %v2488 = vmul.f32 %v2443, 1.442695
      %v2489 = vpow.pop %v2488
      %v2490 = vmul.f32 %v2444, 1.442695
      %v2491 = vpow.pop %v2490
      %v2492 = vmul.f32 %v2445, 1.442695
      %v2493 = vpow.pop %v2492
      %v2494 = vmul.f32 %v2446, 1.442695
      %v2495 = vpow.pop %v2494
      %v2496 = vmul.f32 %v2447, 1.442695
      %v2497 = vpow.pop %v2496
      %v2498 = vmul.f32 %v2448, 1.442695
      %v2499 = vpow.pop %v2498
      %v2500 = vmul.f32 %v2449, 1.442695
      %v2501 = vpow.pop %v2500
      %v2502 = vmul.f32 %v2450, 1.442695
      %v2503 = vpow.pop %v2502
      %v2504 = vmul.f32 %v2451, 1.442695
      %v2505 = vpow.pop %v2504
      %v2506 = vmul.f32 %v2452, 1.442695
      %v2507 = vpow.pop %v2506
      %v2508 = vmul.f32 %v2453, 1.442695
      %v2509 = vpow.pop %v2508
      %v2510 = vmul.f32 %v2454, 1.442695
      %v2511 = vpow.pop %v2510
      %v2512 = vmul.f32 %v2455, 1.442695
      %v2513 = vpow.pop %v2512
      %v2514 = vmul.f32 %v2456, 1.442695
      %v2515 = vpow.pop %v2514
      %v2516 = vmul.f32 %v2457, 1.442695
      %v2517 = vpow.pop %v2516
      %v2518 = vmul.f32 %v2458, 1.442695
      %v2519 = vpow.pop %v2518
      %v2520 = vmul.f32 %v2459, 1.442695
      %v2521 = vpow.pop %v2520
      %v2522 = vmul.f32 %v2460, 1.442695
      %v2523 = vpow.pop %v2522
      %v2524 = vmul.f32 %v2461, 1.442695
      %v2525 = vpow.pop %v2524
      %v2526 = vadd.f32 %v2463, 1.0
      %v2527 = vadd.f32 %v2465, 1.0
      %v2528 = vadd.f32 %v2467, 1.0
      %v2529 = vadd.f32 %v2469, 1.0
      %v2530 = vadd.f32 %v2471, 1.0
      %v2531 = vadd.f32 %v2473, 1.0
      %v2532 = vadd.f32 %v2475, 1.0
      %v2533 = vadd.f32 %v2477, 1.0
      %v2534 = vadd.f32 %v2479, 1.0
      %v2535 = vadd.f32 %v2481, 1.0
      %v2536 = vadd.f32 %v2483, 1.0
      %v2537 = vadd.f32 %v2485, 1.0
      %v2538 = vadd.f32 %v2487, 1.0
      %v2539 = vadd.f32 %v2489, 1.0
      %v2540 = vadd.f32 %v2491, 1.0
      %v2541 = vadd.f32 %v2493, 1.0
      %v2542 = vadd.f32 %v2495, 1.0
      %v2543 = vadd.f32 %v2497, 1.0
      %v2544 = vadd.f32 %v2499, 1.0
      %v2545 = vadd.f32 %v2501, 1.0
      %v2546 = vadd.f32 %v2503, 1.0
      %v2547 = vadd.f32 %v2505, 1.0
      %v2548 = vadd.f32 %v2507, 1.0
      %v2549 = vadd.f32 %v2509, 1.0
      %v2550 = vadd.f32 %v2511, 1.0
      %v2551 = vadd.f32 %v2513, 1.0
      %v2552 = vadd.f32 %v2515, 1.0
      %v2553 = vadd.f32 %v2517, 1.0
      %v2554 = vadd.f32 %v2519, 1.0
      %v2555 = vadd.f32 %v2521, 1.0
      %v2556 = vadd.f32 %v2523, 1.0
      %v2557 = vadd.f32 %v2525, 1.0
      %v2558 = vrcp.pop %v2526
      %v2559 = vmul.f32 %v2526, %v2558
      %v2560 = vsub.f32 1.0, %v2559
      %v2561 = vmul.f32 %v2558, %v2560
      %v2562 = vadd.f32 %v2558, %v2561
      %vm2563 = vweird.f32 %v2526
      %vm2564 = vweird.f32 %v2558
      %vm2565 = vmor %vm2563, %vm2564
      %v2566 = vsel %vm2565, %v2558, %v2562
      %v2567 = vand.u32 2147483647, %v2526
      %vm2568 = vcmp.eq.f32.partialorder %v2567, 8.507059e+37
      %v2569 = vand.u32 %v2526, 2147483648
      %v2570 = vor.u32 1.1754944e-38, %v2569
      %v2571 = vsel %vm2568, %v2570, %v2566
      %v2572 = vmul.f32 1.0, %v2571
      %v2573 = vrcp.pop %v2527
      %v2574 = vmul.f32 %v2527, %v2573
      %v2575 = vsub.f32 1.0, %v2574
      %v2576 = vmul.f32 %v2573, %v2575
      %v2577 = vadd.f32 %v2573, %v2576
      %vm2578 = vweird.f32 %v2527
      %vm2579 = vweird.f32 %v2573
      %vm2580 = vmor %vm2578, %vm2579
      %v2581 = vsel %vm2580, %v2573, %v2577
      %v2582 = vand.u32 2147483647, %v2527
      %vm2583 = vcmp.eq.f32.partialorder %v2582, 8.507059e+37
      %v2584 = vand.u32 %v2527, 2147483648
      %v2585 = vor.u32 1.1754944e-38, %v2584
      %v2586 = vsel %vm2583, %v2585, %v2581
      %v2587 = vmul.f32 1.0, %v2586
      %v2588 = vrcp.pop %v2528
      %v2589 = vmul.f32 %v2528, %v2588
      %v2590 = vsub.f32 1.0, %v2589
      %v2591 = vmul.f32 %v2588, %v2590
      %v2592 = vadd.f32 %v2588, %v2591
      %vm2593 = vweird.f32 %v2528
      %vm2594 = vweird.f32 %v2588
      %vm2595 = vmor %vm2593, %vm2594
      %v2596 = vsel %vm2595, %v2588, %v2592
      %v2597 = vand.u32 2147483647, %v2528
      %vm2598 = vcmp.eq.f32.partialorder %v2597, 8.507059e+37
      %v2599 = vand.u32 %v2528, 2147483648
      %v2600 = vor.u32 1.1754944e-38, %v2599
      %v2601 = vsel %vm2598, %v2600, %v2596
      %v2602 = vmul.f32 1.0, %v2601
      %v2603 = vrcp.pop %v2529
      %v2604 = vmul.f32 %v2529, %v2603
      %v2605 = vsub.f32 1.0, %v2604
      %v2606 = vmul.f32 %v2603, %v2605
      %v2607 = vadd.f32 %v2603, %v2606
      %vm2608 = vweird.f32 %v2529
      %vm2609 = vweird.f32 %v2603
      %vm2610 = vmor %vm2608, %vm2609
      %v2611 = vsel %vm2610, %v2603, %v2607
      %v2612 = vand.u32 2147483647, %v2529
      %vm2613 = vcmp.eq.f32.partialorder %v2612, 8.507059e+37
      %v2614 = vand.u32 %v2529, 2147483648
      %v2615 = vor.u32 1.1754944e-38, %v2614
      %v2616 = vsel %vm2613, %v2615, %v2611
      %v2617 = vmul.f32 1.0, %v2616
      %v2618 = vrcp.pop %v2530
      %v2619 = vmul.f32 %v2530, %v2618
      %v2620 = vsub.f32 1.0, %v2619
      %v2621 = vmul.f32 %v2618, %v2620
      %v2622 = vadd.f32 %v2618, %v2621
      %vm2623 = vweird.f32 %v2530
      %vm2624 = vweird.f32 %v2618
      %vm2625 = vmor %vm2623, %vm2624
      %v2626 = vsel %vm2625, %v2618, %v2622
      %v2627 = vand.u32 2147483647, %v2530
      %vm2628 = vcmp.eq.f32.partialorder %v2627, 8.507059e+37
      %v2629 = vand.u32 %v2530, 2147483648
      %v2630 = vor.u32 1.1754944e-38, %v2629
      %v2631 = vsel %vm2628, %v2630, %v2626
      %v2632 = vmul.f32 1.0, %v2631
      %v2633 = vrcp.pop %v2531
      %v2634 = vmul.f32 %v2531, %v2633
      %v2635 = vsub.f32 1.0, %v2634
      %v2636 = vmul.f32 %v2633, %v2635
      %v2637 = vadd.f32 %v2633, %v2636
      %vm2638 = vweird.f32 %v2531
      %vm2639 = vweird.f32 %v2633
      %vm2640 = vmor %vm2638, %vm2639
      %v2641 = vsel %vm2640, %v2633, %v2637
      %v2642 = vand.u32 2147483647, %v2531
      %vm2643 = vcmp.eq.f32.partialorder %v2642, 8.507059e+37
      %v2644 = vand.u32 %v2531, 2147483648
      %v2645 = vor.u32 1.1754944e-38, %v2644
      %v2646 = vsel %vm2643, %v2645, %v2641
      %v2647 = vmul.f32 1.0, %v2646
      %v2648 = vrcp.pop %v2532
      %v2649 = vmul.f32 %v2532, %v2648
      %v2650 = vsub.f32 1.0, %v2649
      %v2651 = vmul.f32 %v2648, %v2650
      %v2652 = vadd.f32 %v2648, %v2651
      %vm2653 = vweird.f32 %v2532
      %vm2654 = vweird.f32 %v2648
      %vm2655 = vmor %vm2653, %vm2654
      %v2656 = vsel %vm2655, %v2648, %v2652
      %v2657 = vand.u32 2147483647, %v2532
      %vm2658 = vcmp.eq.f32.partialorder %v2657, 8.507059e+37
      %v2659 = vand.u32 %v2532, 2147483648
      %v2660 = vor.u32 1.1754944e-38, %v2659
      %v2661 = vsel %vm2658, %v2660, %v2656
      %v2662 = vmul.f32 1.0, %v2661
      %v2663 = vrcp.pop %v2533
      %v2664 = vmul.f32 %v2533, %v2663
      %v2665 = vsub.f32 1.0, %v2664
      %v2666 = vmul.f32 %v2663, %v2665
      %v2667 = vadd.f32 %v2663, %v2666
      %vm2668 = vweird.f32 %v2533
      %vm2669 = vweird.f32 %v2663
      %vm2670 = vmor %vm2668, %vm2669
      %v2671 = vsel %vm2670, %v2663, %v2667
      %v2672 = vand.u32 2147483647, %v2533
      %vm2673 = vcmp.eq.f32.partialorder %v2672, 8.507059e+37
      %v2674 = vand.u32 %v2533, 2147483648
      %v2675 = vor.u32 1.1754944e-38, %v2674
      %v2676 = vsel %vm2673, %v2675, %v2671
      %v2677 = vmul.f32 1.0, %v2676
      %v2678 = vrcp.pop %v2534
      %v2679 = vmul.f32 %v2534, %v2678
      %v2680 = vsub.f32 1.0, %v2679
      %v2681 = vmul.f32 %v2678, %v2680
      %v2682 = vadd.f32 %v2678, %v2681
      %vm2683 = vweird.f32 %v2534
      %vm2684 = vweird.f32 %v2678
      %vm2685 = vmor %vm2683, %vm2684
      %v2686 = vsel %vm2685, %v2678, %v2682
      %v2687 = vand.u32 2147483647, %v2534
      %vm2688 = vcmp.eq.f32.partialorder %v2687, 8.507059e+37
      %v2689 = vand.u32 %v2534, 2147483648
      %v2690 = vor.u32 1.1754944e-38, %v2689
      %v2691 = vsel %vm2688, %v2690, %v2686
      %v2692 = vmul.f32 1.0, %v2691
      %v2693 = vrcp.pop %v2535
      %v2694 = vmul.f32 %v2535, %v2693
      %v2695 = vsub.f32 1.0, %v2694
      %v2696 = vmul.f32 %v2693, %v2695
      %v2697 = vadd.f32 %v2693, %v2696
      %vm2698 = vweird.f32 %v2535
      %vm2699 = vweird.f32 %v2693
      %vm2700 = vmor %vm2698, %vm2699
      %v2701 = vsel %vm2700, %v2693, %v2697
      %v2702 = vand.u32 2147483647, %v2535
      %vm2703 = vcmp.eq.f32.partialorder %v2702, 8.507059e+37
      %v2704 = vand.u32 %v2535, 2147483648
      %v2705 = vor.u32 1.1754944e-38, %v2704
      %v2706 = vsel %vm2703, %v2705, %v2701
      %v2707 = vmul.f32 1.0, %v2706
      %v2708 = vrcp.pop %v2536
      %v2709 = vmul.f32 %v2536, %v2708
      %v2710 = vsub.f32 1.0, %v2709
      %v2711 = vmul.f32 %v2708, %v2710
      %v2712 = vadd.f32 %v2708, %v2711
      %vm2713 = vweird.f32 %v2536
      %vm2714 = vweird.f32 %v2708
      %vm2715 = vmor %vm2713, %vm2714
      %v2716 = vsel %vm2715, %v2708, %v2712
      %v2717 = vand.u32 2147483647, %v2536
      %vm2718 = vcmp.eq.f32.partialorder %v2717, 8.507059e+37
      %v2719 = vand.u32 %v2536, 2147483648
      %v2720 = vor.u32 1.1754944e-38, %v2719
      %v2721 = vsel %vm2718, %v2720, %v2716
      %v2722 = vmul.f32 1.0, %v2721
      %v2723 = vrcp.pop %v2537
      %v2724 = vmul.f32 %v2537, %v2723
      %v2725 = vsub.f32 1.0, %v2724
      %v2726 = vmul.f32 %v2723, %v2725
      %v2727 = vadd.f32 %v2723, %v2726
      %vm2728 = vweird.f32 %v2537
      %vm2729 = vweird.f32 %v2723
      %vm2730 = vmor %vm2728, %vm2729
      %v2731 = vsel %vm2730, %v2723, %v2727
      %v2732 = vand.u32 2147483647, %v2537
      %vm2733 = vcmp.eq.f32.partialorder %v2732, 8.507059e+37
      %v2734 = vand.u32 %v2537, 2147483648
      %v2735 = vor.u32 1.1754944e-38, %v2734
      %v2736 = vsel %vm2733, %v2735, %v2731
      %v2737 = vmul.f32 1.0, %v2736
      %v2738 = vrcp.pop %v2538
      %v2739 = vmul.f32 %v2538, %v2738
      %v2740 = vsub.f32 1.0, %v2739
      %v2741 = vmul.f32 %v2738, %v2740
      %v2742 = vadd.f32 %v2738, %v2741
      %vm2743 = vweird.f32 %v2538
      %vm2744 = vweird.f32 %v2738
      %vm2745 = vmor %vm2743, %vm2744
      %v2746 = vsel %vm2745, %v2738, %v2742
      %v2747 = vand.u32 2147483647, %v2538
      %vm2748 = vcmp.eq.f32.partialorder %v2747, 8.507059e+37
      %v2749 = vand.u32 %v2538, 2147483648
      %v2750 = vor.u32 1.1754944e-38, %v2749
      %v2751 = vsel %vm2748, %v2750, %v2746
      %v2752 = vmul.f32 1.0, %v2751
      %v2753 = vrcp.pop %v2539
      %v2754 = vmul.f32 %v2539, %v2753
      %v2755 = vsub.f32 1.0, %v2754
      %v2756 = vmul.f32 %v2753, %v2755
      %v2757 = vadd.f32 %v2753, %v2756
      %vm2758 = vweird.f32 %v2539
      %vm2759 = vweird.f32 %v2753
      %vm2760 = vmor %vm2758, %vm2759
      %v2761 = vsel %vm2760, %v2753, %v2757
      %v2762 = vand.u32 2147483647, %v2539
      %vm2763 = vcmp.eq.f32.partialorder %v2762, 8.507059e+37
      %v2764 = vand.u32 %v2539, 2147483648
      %v2765 = vor.u32 1.1754944e-38, %v2764
      %v2766 = vsel %vm2763, %v2765, %v2761
      %v2767 = vmul.f32 1.0, %v2766
      %v2768 = vrcp.pop %v2540
      %v2769 = vmul.f32 %v2540, %v2768
      %v2770 = vsub.f32 1.0, %v2769
      %v2771 = vmul.f32 %v2768, %v2770
      %v2772 = vadd.f32 %v2768, %v2771
      %vm2773 = vweird.f32 %v2540
      %vm2774 = vweird.f32 %v2768
      %vm2775 = vmor %vm2773, %vm2774
      %v2776 = vsel %vm2775, %v2768, %v2772
      %v2777 = vand.u32 2147483647, %v2540
      %vm2778 = vcmp.eq.f32.partialorder %v2777, 8.507059e+37
      %v2779 = vand.u32 %v2540, 2147483648
      %v2780 = vor.u32 1.1754944e-38, %v2779
      %v2781 = vsel %vm2778, %v2780, %v2776
      %v2782 = vmul.f32 1.0, %v2781
      %v2783 = vrcp.pop %v2541
      %v2784 = vmul.f32 %v2541, %v2783
      %v2785 = vsub.f32 1.0, %v2784
      %v2786 = vmul.f32 %v2783, %v2785
      %v2787 = vadd.f32 %v2783, %v2786
      %vm2788 = vweird.f32 %v2541
      %vm2789 = vweird.f32 %v2783
      %vm2790 = vmor %vm2788, %vm2789
      %v2791 = vsel %vm2790, %v2783, %v2787
      %v2792 = vand.u32 2147483647, %v2541
      %vm2793 = vcmp.eq.f32.partialorder %v2792, 8.507059e+37
      %v2794 = vand.u32 %v2541, 2147483648
      %v2795 = vor.u32 1.1754944e-38, %v2794
      %v2796 = vsel %vm2793, %v2795, %v2791
      %v2797 = vmul.f32 1.0, %v2796
      %v2798 = vrcp.pop %v2542
      %v2799 = vmul.f32 %v2542, %v2798
      %v2800 = vsub.f32 1.0, %v2799
      %v2801 = vmul.f32 %v2798, %v2800
      %v2802 = vadd.f32 %v2798, %v2801
      %vm2803 = vweird.f32 %v2542
      %vm2804 = vweird.f32 %v2798
      %vm2805 = vmor %vm2803, %vm2804
      %v2806 = vsel %vm2805, %v2798, %v2802
      %v2807 = vand.u32 2147483647, %v2542
      %vm2808 = vcmp.eq.f32.partialorder %v2807, 8.507059e+37
      %v2809 = vand.u32 %v2542, 2147483648
      %v2810 = vor.u32 1.1754944e-38, %v2809
      %v2811 = vsel %vm2808, %v2810, %v2806
      %v2812 = vmul.f32 1.0, %v2811
      %v2813 = vrcp.pop %v2543
      %v2814 = vmul.f32 %v2543, %v2813
      %v2815 = vsub.f32 1.0, %v2814
      %v2816 = vmul.f32 %v2813, %v2815
      %v2817 = vadd.f32 %v2813, %v2816
      %vm2818 = vweird.f32 %v2543
      %vm2819 = vweird.f32 %v2813
      %vm2820 = vmor %vm2818, %vm2819
      %v2821 = vsel %vm2820, %v2813, %v2817
      %v2822 = vand.u32 2147483647, %v2543
      %vm2823 = vcmp.eq.f32.partialorder %v2822, 8.507059e+37
      %v2824 = vand.u32 %v2543, 2147483648
      %v2825 = vor.u32 1.1754944e-38, %v2824
      %v2826 = vsel %vm2823, %v2825, %v2821
      %v2827 = vmul.f32 1.0, %v2826
      %v2828 = vrcp.pop %v2544
      %v2829 = vmul.f32 %v2544, %v2828
      %v2830 = vsub.f32 1.0, %v2829
      %v2831 = vmul.f32 %v2828, %v2830
      %v2832 = vadd.f32 %v2828, %v2831
      %vm2833 = vweird.f32 %v2544
      %vm2834 = vweird.f32 %v2828
      %vm2835 = vmor %vm2833, %vm2834
      %v2836 = vsel %vm2835, %v2828, %v2832
      %v2837 = vand.u32 2147483647, %v2544
      %vm2838 = vcmp.eq.f32.partialorder %v2837, 8.507059e+37
      %v2839 = vand.u32 %v2544, 2147483648
      %v2840 = vor.u32 1.1754944e-38, %v2839
      %v2841 = vsel %vm2838, %v2840, %v2836
      %v2842 = vmul.f32 1.0, %v2841
      %v2843 = vrcp.pop %v2545
      %v2844 = vmul.f32 %v2545, %v2843
      %v2845 = vsub.f32 1.0, %v2844
      %v2846 = vmul.f32 %v2843, %v2845
      %v2847 = vadd.f32 %v2843, %v2846
      %vm2848 = vweird.f32 %v2545
      %vm2849 = vweird.f32 %v2843
      %vm2850 = vmor %vm2848, %vm2849
      %v2851 = vsel %vm2850, %v2843, %v2847
      %v2852 = vand.u32 2147483647, %v2545
      %vm2853 = vcmp.eq.f32.partialorder %v2852, 8.507059e+37
      %v2854 = vand.u32 %v2545, 2147483648
      %v2855 = vor.u32 1.1754944e-38, %v2854
      %v2856 = vsel %vm2853, %v2855, %v2851
      %v2857 = vmul.f32 1.0, %v2856
      %v2858 = vrcp.pop %v2546
      %v2859 = vmul.f32 %v2546, %v2858
      %v2860 = vsub.f32 1.0, %v2859
      %v2861 = vmul.f32 %v2858, %v2860
      %v2862 = vadd.f32 %v2858, %v2861
      %vm2863 = vweird.f32 %v2546
      %vm2864 = vweird.f32 %v2858
      %vm2865 = vmor %vm2863, %vm2864
      %v2866 = vsel %vm2865, %v2858, %v2862
      %v2867 = vand.u32 2147483647, %v2546
      %vm2868 = vcmp.eq.f32.partialorder %v2867, 8.507059e+37
      %v2869 = vand.u32 %v2546, 2147483648
      %v2870 = vor.u32 1.1754944e-38, %v2869
      %v2871 = vsel %vm2868, %v2870, %v2866
      %v2872 = vmul.f32 1.0, %v2871
      %v2873 = vrcp.pop %v2547
      %v2874 = vmul.f32 %v2547, %v2873
      %v2875 = vsub.f32 1.0, %v2874
      %v2876 = vmul.f32 %v2873, %v2875
      %v2877 = vadd.f32 %v2873, %v2876
      %vm2878 = vweird.f32 %v2547
      %vm2879 = vweird.f32 %v2873
      %vm2880 = vmor %vm2878, %vm2879
      %v2881 = vsel %vm2880, %v2873, %v2877
      %v2882 = vand.u32 2147483647, %v2547
      %vm2883 = vcmp.eq.f32.partialorder %v2882, 8.507059e+37
      %v2884 = vand.u32 %v2547, 2147483648
      %v2885 = vor.u32 1.1754944e-38, %v2884
      %v2886 = vsel %vm2883, %v2885, %v2881
      %v2887 = vmul.f32 1.0, %v2886
      %v2888 = vrcp.pop %v2548
      %v2889 = vmul.f32 %v2548, %v2888
      %v2890 = vsub.f32 1.0, %v2889
      %v2891 = vmul.f32 %v2888, %v2890
      %v2892 = vadd.f32 %v2888, %v2891
      %vm2893 = vweird.f32 %v2548
      %vm2894 = vweird.f32 %v2888
      %vm2895 = vmor %vm2893, %vm2894
      %v2896 = vsel %vm2895, %v2888, %v2892
      %v2897 = vand.u32 2147483647, %v2548
      %vm2898 = vcmp.eq.f32.partialorder %v2897, 8.507059e+37
      %v2899 = vand.u32 %v2548, 2147483648
      %v2900 = vor.u32 1.1754944e-38, %v2899
      %v2901 = vsel %vm2898, %v2900, %v2896
      %v2902 = vmul.f32 1.0, %v2901
      %v2903 = vrcp.pop %v2549
      %v2904 = vmul.f32 %v2549, %v2903
      %v2905 = vsub.f32 1.0, %v2904
      %v2906 = vmul.f32 %v2903, %v2905
      %v2907 = vadd.f32 %v2903, %v2906
      %vm2908 = vweird.f32 %v2549
      %vm2909 = vweird.f32 %v2903
      %vm2910 = vmor %vm2908, %vm2909
      %v2911 = vsel %vm2910, %v2903, %v2907
      %v2912 = vand.u32 2147483647, %v2549
      %vm2913 = vcmp.eq.f32.partialorder %v2912, 8.507059e+37
      %v2914 = vand.u32 %v2549, 2147483648
      %v2915 = vor.u32 1.1754944e-38, %v2914
      %v2916 = vsel %vm2913, %v2915, %v2911
      %v2917 = vmul.f32 1.0, %v2916
      %v2918 = vrcp.pop %v2550
      %v2919 = vmul.f32 %v2550, %v2918
      %v2920 = vsub.f32 1.0, %v2919
      %v2921 = vmul.f32 %v2918, %v2920
      %v2922 = vadd.f32 %v2918, %v2921
      %vm2923 = vweird.f32 %v2550
      %vm2924 = vweird.f32 %v2918
      %vm2925 = vmor %vm2923, %vm2924
      %v2926 = vsel %vm2925, %v2918, %v2922
      %v2927 = vand.u32 2147483647, %v2550
      %vm2928 = vcmp.eq.f32.partialorder %v2927, 8.507059e+37
      %v2929 = vand.u32 %v2550, 2147483648
      %v2930 = vor.u32 1.1754944e-38, %v2929
      %v2931 = vsel %vm2928, %v2930, %v2926
      %v2932 = vmul.f32 1.0, %v2931
      %v2933 = vrcp.pop %v2551
      %v2934 = vmul.f32 %v2551, %v2933
      %v2935 = vsub.f32 1.0, %v2934
      %v2936 = vmul.f32 %v2933, %v2935
      %v2937 = vadd.f32 %v2933, %v2936
      %vm2938 = vweird.f32 %v2551
      %vm2939 = vweird.f32 %v2933
      %vm2940 = vmor %vm2938, %vm2939
      %v2941 = vsel %vm2940, %v2933, %v2937
      %v2942 = vand.u32 2147483647, %v2551
      %vm2943 = vcmp.eq.f32.partialorder %v2942, 8.507059e+37
      %v2944 = vand.u32 %v2551, 2147483648
      %v2945 = vor.u32 1.1754944e-38, %v2944
      %v2946 = vsel %vm2943, %v2945, %v2941
      %v2947 = vmul.f32 1.0, %v2946
      %v2948 = vrcp.pop %v2552
      %v2949 = vmul.f32 %v2552, %v2948
      %v2950 = vsub.f32 1.0, %v2949
      %v2951 = vmul.f32 %v2948, %v2950
      %v2952 = vadd.f32 %v2948, %v2951
      %vm2953 = vweird.f32 %v2552
      %vm2954 = vweird.f32 %v2948
      %vm2955 = vmor %vm2953, %vm2954
      %v2956 = vsel %vm2955, %v2948, %v2952
      %v2957 = vand.u32 2147483647, %v2552
      %vm2958 = vcmp.eq.f32.partialorder %v2957, 8.507059e+37
      %v2959 = vand.u32 %v2552, 2147483648
      %v2960 = vor.u32 1.1754944e-38, %v2959
      %v2961 = vsel %vm2958, %v2960, %v2956
      %v2962 = vmul.f32 1.0, %v2961
      %v2963 = vrcp.pop %v2553
      %v2964 = vmul.f32 %v2553, %v2963
      %v2965 = vsub.f32 1.0, %v2964
      %v2966 = vmul.f32 %v2963, %v2965
      %v2967 = vadd.f32 %v2963, %v2966
      %vm2968 = vweird.f32 %v2553
      %vm2969 = vweird.f32 %v2963
      %vm2970 = vmor %vm2968, %vm2969
      %v2971 = vsel %vm2970, %v2963, %v2967
      %v2972 = vand.u32 2147483647, %v2553
      %vm2973 = vcmp.eq.f32.partialorder %v2972, 8.507059e+37
      %v2974 = vand.u32 %v2553, 2147483648
      %v2975 = vor.u32 1.1754944e-38, %v2974
      %v2976 = vsel %vm2973, %v2975, %v2971
      %v2977 = vmul.f32 1.0, %v2976
      %v2978 = vrcp.pop %v2554
      %v2979 = vmul.f32 %v2554, %v2978
      %v2980 = vsub.f32 1.0, %v2979
      %v2981 = vmul.f32 %v2978, %v2980
      %v2982 = vadd.f32 %v2978, %v2981
      %vm2983 = vweird.f32 %v2554
      %vm2984 = vweird.f32 %v2978
      %vm2985 = vmor %vm2983, %vm2984
      %v2986 = vsel %vm2985, %v2978, %v2982
      %v2987 = vand.u32 2147483647, %v2554
      %vm2988 = vcmp.eq.f32.partialorder %v2987, 8.507059e+37
      %v2989 = vand.u32 %v2554, 2147483648
      %v2990 = vor.u32 1.1754944e-38, %v2989
      %v2991 = vsel %vm2988, %v2990, %v2986
      %v2992 = vmul.f32 1.0, %v2991
      %v2993 = vrcp.pop %v2555
      %v2994 = vmul.f32 %v2555, %v2993
      %v2995 = vsub.f32 1.0, %v2994
      %v2996 = vmul.f32 %v2993, %v2995
      %v2997 = vadd.f32 %v2993, %v2996
      %vm2998 = vweird.f32 %v2555
      %vm2999 = vweird.f32 %v2993
      %vm3000 = vmor %vm2998, %vm2999
      %v3001 = vsel %vm3000, %v2993, %v2997
      %v3002 = vand.u32 2147483647, %v2555
      %vm3003 = vcmp.eq.f32.partialorder %v3002, 8.507059e+37
      %v3004 = vand.u32 %v2555, 2147483648
      %v3005 = vor.u32 1.1754944e-38, %v3004
      %v3006 = vsel %vm3003, %v3005, %v3001
      %v3007 = vmul.f32 1.0, %v3006
      %v3008 = vrcp.pop %v2556
      %v3009 = vmul.f32 %v2556, %v3008
      %v3010 = vsub.f32 1.0, %v3009
      %v3011 = vmul.f32 %v3008, %v3010
      %v3012 = vadd.f32 %v3008, %v3011
      %vm3013 = vweird.f32 %v2556
      %vm3014 = vweird.f32 %v3008
      %vm3015 = vmor %vm3013, %vm3014
      %v3016 = vsel %vm3015, %v3008, %v3012
      %v3017 = vand.u32 2147483647, %v2556
      %vm3018 = vcmp.eq.f32.partialorder %v3017, 8.507059e+37
      %v3019 = vand.u32 %v2556, 2147483648
      %v3020 = vor.u32 1.1754944e-38, %v3019
      %v3021 = vsel %vm3018, %v3020, %v3016
      %v3022 = vmul.f32 1.0, %v3021
      %v3023 = vrcp.pop %v2557
      %v3024 = vmul.f32 %v2557, %v3023
      %v3025 = vsub.f32 1.0, %v3024
      %v3026 = vmul.f32 %v3023, %v3025
      %v3027 = vadd.f32 %v3023, %v3026
      %vm3028 = vweird.f32 %v2557
      %vm3029 = vweird.f32 %v3023
      %vm3030 = vmor %vm3028, %vm3029
      %v3031 = vsel %vm3030, %v3023, %v3027
      %v3032 = vand.u32 2147483647, %v2557
      %vm3033 = vcmp.eq.f32.partialorder %v3032, 8.507059e+37
      %v3034 = vand.u32 %v2557, 2147483648
      %v3035 = vor.u32 1.1754944e-38, %v3034
      %v3036 = vsel %vm3033, %v3035, %v3031
      %v3037 = vmul.f32 1.0, %v3036
      %3038 = vst.msk [vmem:[%s445 + $0x1] sm:$0xff] %vm361, %v2572
      %3039 = vst.msk [vmem:[%s445 + $0x9] sm:$0xff] %vm361, %v2587
      %3040 = vst.msk [vmem:[%s445 + $0x19] sm:$0xff] %vm361, %v2602
      %3041 = vst.msk [vmem:[%s445 + $0x21] sm:$0xff] %vm361, %v2617
      %3042 = vst.msk [vmem:[%s445 + $0x31] sm:$0xff] %vm361, %v2632
      %3043 = vst.msk [vmem:[%s445 + $0x39] sm:$0xff] %vm361, %v2647
      %3044 = vst.msk [vmem:[%s445 + $0x49] sm:$0xff] %vm361, %v2662
      %3045 = vst.msk [vmem:[%s445 + $0x51] sm:$0xff] %vm361, %v2677
      %3046 = vst.msk [vmem:[%s445 + $0x61] sm:$0xff] %vm361, %v2692
      %3047 = vst.msk [vmem:[%s445 + $0x69] sm:$0xff] %vm361, %v2707
      %3048 = vst.msk [vmem:[%s445 + $0x79] sm:$0xff] %vm361, %v2722
      %3049 = vst.msk [vmem:[%s445 + $0x81] sm:$0xff] %vm361, %v2737
      %3050 = vst.msk [vmem:[%s445 + $0x91] sm:$0xff] %vm361, %v2752
      %3051 = vst.msk [vmem:[%s445 + $0x99] sm:$0xff] %vm361, %v2767
      %3052 = vst.msk [vmem:[%s445 + $0xa9] sm:$0xff] %vm361, %v2782
      %3053 = vst.msk [vmem:[%s445 + $0xb1] sm:$0xff] %vm361, %v2797
      %3054 = vst.msk [vmem:[%s445 + $0xc1] sm:$0xff] %vm361, %v2812
      %3055 = vst.msk [vmem:[%s445 + $0xc9] sm:$0xff] %vm361, %v2827
      %3056 = vst.msk [vmem:[%s445 + $0xd9] sm:$0xff] %vm361, %v2842
      %3057 = vst.msk [vmem:[%s445 + $0xe1] sm:$0xff] %vm361, %v2857
      %3058 = vst.msk [vmem:[%s445 + $0xf1] sm:$0xff] %vm361, %v2872
      %3059 = vst.msk [vmem:[%s445 + $0xf9] sm:$0xff] %vm361, %v2887
      %3060 = vst.msk [vmem:[%s445 + $0x109] sm:$0xff] %vm361, %v2902
      %3061 = vst.msk [vmem:[%s445 + $0x111] sm:$0xff] %vm361, %v2917
      %3062 = vst.msk [vmem:[%s445 + $0x121] sm:$0xff] %vm361, %v2932
      %3063 = vst.msk [vmem:[%s445 + $0x129] sm:$0xff] %vm361, %v2947
      %3064 = vst.msk [vmem:[%s445 + $0x139] sm:$0xff] %vm361, %v2962
      %3065 = vst.msk [vmem:[%s445 + $0x141] sm:$0xff] %vm361, %v2977
      %3066 = vst.msk [vmem:[%s445 + $0x151] sm:$0xff] %vm361, %v2992
      %3067 = vst.msk [vmem:[%s445 + $0x159] sm:$0xff] %vm361, %v3007
      %3068 = vst.msk [vmem:[%s445 + $0x169] sm:$0xff] %vm361, %v3022
      %3069 = vst.msk [vmem:[%s445 + $0x171] sm:$0xff] %vm361, %v3037
      %v3070 = vld [vmem:[#allocation2] sm:$0xff]
      %v3071 = vld [vmem:[#allocation2 + $0x8] sm:$0xff]
      %v3072 = vld [vmem:[#allocation2 + $0x18] sm:$0xff]
      %v3073 = vld [vmem:[#allocation2 + $0x20] sm:$0xff]
      %v3074 = vld [vmem:[#allocation2 + $0x30] sm:$0xff]
      %v3075 = vld [vmem:[#allocation2 + $0x38] sm:$0xff]
      %v3076 = vld [vmem:[#allocation2 + $0x48] sm:$0xff]
      %v3077 = vld [vmem:[#allocation2 + $0x50] sm:$0xff]
      %v3078 = vld [vmem:[#allocation2 + $0x60] sm:$0xff]
      %v3079 = vld [vmem:[#allocation2 + $0x68] sm:$0xff]
      %v3080 = vld [vmem:[#allocation2 + $0x78] sm:$0xff]
      %v3081 = vld [vmem:[#allocation2 + $0x80] sm:$0xff]
      %v3082 = vld [vmem:[#allocation2 + $0x90] sm:$0xff]
      %v3083 = vld [vmem:[#allocation2 + $0x98] sm:$0xff]
      %v3084 = vld [vmem:[#allocation2 + $0xa8] sm:$0xff]
      %v3085 = vld [vmem:[#allocation2 + $0xb0] sm:$0xff]
      %v3086 = vld [vmem:[#allocation2 + $0xc0] sm:$0xff]
      %v3087 = vld [vmem:[#allocation2 + $0xc8] sm:$0xff]
      %v3088 = vld [vmem:[#allocation2 + $0xd8] sm:$0xff]
      %v3089 = vld [vmem:[#allocation2 + $0xe0] sm:$0xff]
      %v3090 = vld [vmem:[#allocation2 + $0xf0] sm:$0xff]
      %v3091 = vld [vmem:[#allocation2 + $0xf8] sm:$0xff]
      %v3092 = vld [vmem:[#allocation2 + $0x108] sm:$0xff]
      %v3093 = vld [vmem:[#allocation2 + $0x110] sm:$0xff]
      %v3094 = vld [vmem:[#allocation2 + $0x120] sm:$0xff]
      %v3095 = vld [vmem:[#allocation2 + $0x128] sm:$0xff]
      %v3096 = vld [vmem:[#allocation2 + $0x138] sm:$0xff]
      %v3097 = vld [vmem:[#allocation2 + $0x140] sm:$0xff]
      %v3098 = vld [vmem:[#allocation2 + $0x150] sm:$0xff]
      %v3099 = vld [vmem:[#allocation2 + $0x158] sm:$0xff]
      %v3100 = vld [vmem:[#allocation2 + $0x168] sm:$0xff]
      %v3101 = vld [vmem:[#allocation2 + $0x170] sm:$0xff]
      %v3102 = vld [vmem:[#allocation2 + $0x1] sm:$0xff]
      %v3103 = vld [vmem:[#allocation2 + $0x9] sm:$0xff]
      %v3104 = vld [vmem:[#allocation2 + $0x19] sm:$0xff]
      %v3105 = vld [vmem:[#allocation2 + $0x21] sm:$0xff]
      %v3106 = vld [vmem:[#allocation2 + $0x31] sm:$0xff]
      %v3107 = vld [vmem:[#allocation2 + $0x39] sm:$0xff]
      %v3108 = vld [vmem:[#allocation2 + $0x49] sm:$0xff]
      %v3109 = vld [vmem:[#allocation2 + $0x51] sm:$0xff]
      %v3110 = vld [vmem:[#allocation2 + $0x61] sm:$0xff]
      %v3111 = vld [vmem:[#allocation2 + $0x69] sm:$0xff]
      %v3112 = vld [vmem:[#allocation2 + $0x79] sm:$0xff]
      %v3113 = vld [vmem:[#allocation2 + $0x81] sm:$0xff]
      %v3114 = vld [vmem:[#allocation2 + $0x91] sm:$0xff]
      %v3115 = vld [vmem:[#allocation2 + $0x99] sm:$0xff]
      %v3116 = vld [vmem:[#allocation2 + $0xa9] sm:$0xff]
      %v3117 = vld [vmem:[#allocation2 + $0xb1] sm:$0xff]
      %v3118 = vld [vmem:[#allocation2 + $0xc1] sm:$0xff]
      %v3119 = vld [vmem:[#allocation2 + $0xc9] sm:$0xff]
      %v3120 = vld [vmem:[#allocation2 + $0xd9] sm:$0xff]
      %v3121 = vld [vmem:[#allocation2 + $0xe1] sm:$0xff]
      %v3122 = vld [vmem:[#allocation2 + $0xf1] sm:$0xff]
      %v3123 = vld [vmem:[#allocation2 + $0xf9] sm:$0xff]
      %v3124 = vld [vmem:[#allocation2 + $0x109] sm:$0xff]
      %v3125 = vld [vmem:[#allocation2 + $0x111] sm:$0xff]
      %v3126 = vld [vmem:[#allocation2 + $0x121] sm:$0xff]
      %v3127 = vld [vmem:[#allocation2 + $0x129] sm:$0xff]
      %v3128 = vld [vmem:[#allocation2 + $0x139] sm:$0xff]
      %v3129 = vld [vmem:[#allocation2 + $0x141] sm:$0xff]
      %v3130 = vld [vmem:[#allocation2 + $0x151] sm:$0xff]
      %v3131 = vld [vmem:[#allocation2 + $0x159] sm:$0xff]
      %v3132 = vld [vmem:[#allocation2 + $0x169] sm:$0xff]
      %v3133 = vld [vmem:[#allocation2 + $0x171] sm:$0xff]
      %v3134 = vld [vmem:[#allocation2 + $0x2] sm:$0xff]
      %v3135 = vld [vmem:[#allocation2 + $0xa] sm:$0xff]
      %v3136 = vld [vmem:[#allocation2 + $0x1a] sm:$0xff]
      %v3137 = vld [vmem:[#allocation2 + $0x22] sm:$0xff]
      %v3138 = vld [vmem:[#allocation2 + $0x32] sm:$0xff]
      %v3139 = vld [vmem:[#allocation2 + $0x3a] sm:$0xff]
      %v3140 = vld [vmem:[#allocation2 + $0x4a] sm:$0xff]
      %v3141 = vld [vmem:[#allocation2 + $0x52] sm:$0xff]
      %v3142 = vld [vmem:[#allocation2 + $0x62] sm:$0xff]
      %v3143 = vld [vmem:[#allocation2 + $0x6a] sm:$0xff]
      %v3144 = vld [vmem:[#allocation2 + $0x7a] sm:$0xff]
      %v3145 = vld [vmem:[#allocation2 + $0x82] sm:$0xff]
      %v3146 = vld [vmem:[#allocation2 + $0x92] sm:$0xff]
      %v3147 = vld [vmem:[#allocation2 + $0x9a] sm:$0xff]
      %v3148 = vld [vmem:[#allocation2 + $0xaa] sm:$0xff]
      %v3149 = vld [vmem:[#allocation2 + $0xb2] sm:$0xff]
      %v3150 = vld [vmem:[#allocation2 + $0xc2] sm:$0xff]
      %v3151 = vld [vmem:[#allocation2 + $0xca] sm:$0xff]
      %v3152 = vld [vmem:[#allocation2 + $0xda] sm:$0xff]
      %v3153 = vld [vmem:[#allocation2 + $0xe2] sm:$0xff]
      %v3154 = vld [vmem:[#allocation2 + $0xf2] sm:$0xff]
      %v3155 = vld [vmem:[#allocation2 + $0xfa] sm:$0xff]
      %v3156 = vld [vmem:[#allocation2 + $0x10a] sm:$0xff]
      %v3157 = vld [vmem:[#allocation2 + $0x112] sm:$0xff]
      %v3158 = vld [vmem:[#allocation2 + $0x122] sm:$0xff]
      %v3159 = vld [vmem:[#allocation2 + $0x12a] sm:$0xff]
      %v3160 = vld [vmem:[#allocation2 + $0x13a] sm:$0xff]
      %v3161 = vld [vmem:[#allocation2 + $0x142] sm:$0xff]
      %v3162 = vld [vmem:[#allocation2 + $0x152] sm:$0xff]
      %v3163 = vld [vmem:[#allocation2 + $0x15a] sm:$0xff]
      %v3164 = vld [vmem:[#allocation2 + $0x16a] sm:$0xff]
      %v3165 = vld [vmem:[#allocation2 + $0x172] sm:$0xff]
      %v3166 = vld [vmem:[%s445] sm:$0xff]
      %v3167 = vld [vmem:[%s445 + $0x8] sm:$0xff]
      %v3168 = vld [vmem:[%s445 + $0x18] sm:$0xff]
      %v3169 = vld [vmem:[%s445 + $0x20] sm:$0xff]
      %v3170 = vld [vmem:[%s445 + $0x30] sm:$0xff]
      %v3171 = vld [vmem:[%s445 + $0x38] sm:$0xff]
      %v3172 = vld [vmem:[%s445 + $0x48] sm:$0xff]
      %v3173 = vld [vmem:[%s445 + $0x50] sm:$0xff]
      %v3174 = vld [vmem:[%s445 + $0x60] sm:$0xff]
      %v3175 = vld [vmem:[%s445 + $0x68] sm:$0xff]
      %v3176 = vld [vmem:[%s445 + $0x78] sm:$0xff]
      %v3177 = vld [vmem:[%s445 + $0x80] sm:$0xff]
      %v3178 = vld [vmem:[%s445 + $0x90] sm:$0xff]
      %v3179 = vld [vmem:[%s445 + $0x98] sm:$0xff]
      %v3180 = vld [vmem:[%s445 + $0xa8] sm:$0xff]
      %v3181 = vld [vmem:[%s445 + $0xb0] sm:$0xff]
      %v3182 = vld [vmem:[%s445 + $0xc0] sm:$0xff]
      %v3183 = vld [vmem:[%s445 + $0xc8] sm:$0xff]
      %v3184 = vld [vmem:[%s445 + $0xd8] sm:$0xff]
      %v3185 = vld [vmem:[%s445 + $0xe0] sm:$0xff]
      %v3186 = vld [vmem:[%s445 + $0xf0] sm:$0xff]
      %v3187 = vld [vmem:[%s445 + $0xf8] sm:$0xff]
      %v3188 = vld [vmem:[%s445 + $0x108] sm:$0xff]
      %v3189 = vld [vmem:[%s445 + $0x110] sm:$0xff]
      %v3190 = vld [vmem:[%s445 + $0x120] sm:$0xff]
      %v3191 = vld [vmem:[%s445 + $0x128] sm:$0xff]
      %v3192 = vld [vmem:[%s445 + $0x138] sm:$0xff]
      %v3193 = vld [vmem:[%s445 + $0x140] sm:$0xff]
      %v3194 = vld [vmem:[%s445 + $0x150] sm:$0xff]
      %v3195 = vld [vmem:[%s445 + $0x158] sm:$0xff]
      %v3196 = vld [vmem:[%s445 + $0x168] sm:$0xff]
      %v3197 = vld [vmem:[%s445 + $0x170] sm:$0xff]
      %v3198 = vld [vmem:[%s445 + $0x1] sm:$0xff]
      %v3199 = vld [vmem:[%s445 + $0x9] sm:$0xff]
      %v3200 = vld [vmem:[%s445 + $0x19] sm:$0xff]
      %v3201 = vld [vmem:[%s445 + $0x21] sm:$0xff]
      %v3202 = vld [vmem:[%s445 + $0x31] sm:$0xff]
      %v3203 = vld [vmem:[%s445 + $0x39] sm:$0xff]
      %v3204 = vld [vmem:[%s445 + $0x49] sm:$0xff]
      %v3205 = vld [vmem:[%s445 + $0x51] sm:$0xff]
      %v3206 = vld [vmem:[%s445 + $0x61] sm:$0xff]
      %v3207 = vld [vmem:[%s445 + $0x69] sm:$0xff]
      %v3208 = vld [vmem:[%s445 + $0x79] sm:$0xff]
      %v3209 = vld [vmem:[%s445 + $0x81] sm:$0xff]
      %v3210 = vld [vmem:[%s445 + $0x91] sm:$0xff]
      %v3211 = vld [vmem:[%s445 + $0x99] sm:$0xff]
      %v3212 = vld [vmem:[%s445 + $0xa9] sm:$0xff]
      %v3213 = vld [vmem:[%s445 + $0xb1] sm:$0xff]
      %v3214 = vld [vmem:[%s445 + $0xc1] sm:$0xff]
      %v3215 = vld [vmem:[%s445 + $0xc9] sm:$0xff]
      %v3216 = vld [vmem:[%s445 + $0xd9] sm:$0xff]
      %v3217 = vld [vmem:[%s445 + $0xe1] sm:$0xff]
      %v3218 = vld [vmem:[%s445 + $0xf1] sm:$0xff]
      %v3219 = vld [vmem:[%s445 + $0xf9] sm:$0xff]
      %v3220 = vld [vmem:[%s445 + $0x109] sm:$0xff]
      %v3221 = vld [vmem:[%s445 + $0x111] sm:$0xff]
      %v3222 = vld [vmem:[%s445 + $0x121] sm:$0xff]
      %v3223 = vld [vmem:[%s445 + $0x129] sm:$0xff]
      %v3224 = vld [vmem:[%s445 + $0x139] sm:$0xff]
      %v3225 = vld [vmem:[%s445 + $0x141] sm:$0xff]
      %v3226 = vld [vmem:[%s445 + $0x151] sm:$0xff]
      %v3227 = vld [vmem:[%s445 + $0x159] sm:$0xff]
      %v3228 = vld [vmem:[%s445 + $0x169] sm:$0xff]
      %v3229 = vld [vmem:[%s445 + $0x171] sm:$0xff]
      %v3230 = vld [vmem:[%s445 + $0x2] sm:$0xff]
      %v3231 = vld [vmem:[%s445 + $0xa] sm:$0xff]
      %v3232 = vld [vmem:[%s445 + $0x1a] sm:$0xff]
      %v3233 = vld [vmem:[%s445 + $0x22] sm:$0xff]
      %v3234 = vld [vmem:[%s445 + $0x32] sm:$0xff]
      %v3235 = vld [vmem:[%s445 + $0x3a] sm:$0xff]
      %v3236 = vld [vmem:[%s445 + $0x4a] sm:$0xff]
      %v3237 = vld [vmem:[%s445 + $0x52] sm:$0xff]
      %v3238 = vld [vmem:[%s445 + $0x62] sm:$0xff]
      %v3239 = vld [vmem:[%s445 + $0x6a] sm:$0xff]
      %v3240 = vld [vmem:[%s445 + $0x7a] sm:$0xff]
      %v3241 = vld [vmem:[%s445 + $0x82] sm:$0xff]
      %v3242 = vld [vmem:[%s445 + $0x92] sm:$0xff]
      %v3243 = vld [vmem:[%s445 + $0x9a] sm:$0xff]
      %v3244 = vld [vmem:[%s445 + $0xaa] sm:$0xff]
      %v3245 = vld [vmem:[%s445 + $0xb2] sm:$0xff]
      %v3246 = vld [vmem:[%s445 + $0xc2] sm:$0xff]
      %v3247 = vld [vmem:[%s445 + $0xca] sm:$0xff]
      %v3248 = vld [vmem:[%s445 + $0xda] sm:$0xff]
      %v3249 = vld [vmem:[%s445 + $0xe2] sm:$0xff]
      %v3250 = vld [vmem:[%s445 + $0xf2] sm:$0xff]
      %v3251 = vld [vmem:[%s445 + $0xfa] sm:$0xff]
      %v3252 = vld [vmem:[%s445 + $0x10a] sm:$0xff]
      %v3253 = vld [vmem:[%s445 + $0x112] sm:$0xff]
      %v3254 = vld [vmem:[%s445 + $0x122] sm:$0xff]
      %v3255 = vld [vmem:[%s445 + $0x12a] sm:$0xff]
      %v3256 = vld [vmem:[%s445 + $0x13a] sm:$0xff]
      %v3257 = vld [vmem:[%s445 + $0x142] sm:$0xff]
      %v3258 = vld [vmem:[%s445 + $0x152] sm:$0xff]
      %v3259 = vld [vmem:[%s445 + $0x15a] sm:$0xff]
      %v3260 = vld [vmem:[%s445 + $0x16a] sm:$0xff]
      %v3261 = vld [vmem:[%s445 + $0x172] sm:$0xff]
      %v3262 = vld [vmem:[%s670] sm:$0xff]
      %v3263 = vld [vmem:[%s670 + $0x8] sm:$0xff]
      %v3264 = vld [vmem:[%s670 + $0x18] sm:$0xff]
      %v3265 = vld [vmem:[%s670 + $0x20] sm:$0xff]
      %v3266 = vld [vmem:[%s670 + $0x30] sm:$0xff]
      %v3267 = vld [vmem:[%s670 + $0x38] sm:$0xff]
      %v3268 = vld [vmem:[%s670 + $0x48] sm:$0xff]
      %v3269 = vld [vmem:[%s670 + $0x50] sm:$0xff]
      %v3270 = vld [vmem:[%s670 + $0x60] sm:$0xff]
      %v3271 = vld [vmem:[%s670 + $0x68] sm:$0xff]
      %v3272 = vld [vmem:[%s670 + $0x78] sm:$0xff]
      %v3273 = vld [vmem:[%s670 + $0x80] sm:$0xff]
      %v3274 = vld [vmem:[%s670 + $0x90] sm:$0xff]
      %v3275 = vld [vmem:[%s670 + $0x98] sm:$0xff]
      %v3276 = vld [vmem:[%s670 + $0xa8] sm:$0xff]
      %v3277 = vld [vmem:[%s670 + $0xb0] sm:$0xff]
      %v3278 = vld [vmem:[%s670 + $0xc0] sm:$0xff]
      %v3279 = vld [vmem:[%s670 + $0xc8] sm:$0xff]
      %v3280 = vld [vmem:[%s670 + $0xd8] sm:$0xff]
      %v3281 = vld [vmem:[%s670 + $0xe0] sm:$0xff]
      %v3282 = vld [vmem:[%s670 + $0xf0] sm:$0xff]
      %v3283 = vld [vmem:[%s670 + $0xf8] sm:$0xff]
      %v3284 = vld [vmem:[%s670 + $0x108] sm:$0xff]
      %v3285 = vld [vmem:[%s670 + $0x110] sm:$0xff]
      %v3286 = vld [vmem:[%s670 + $0x120] sm:$0xff]
      %v3287 = vld [vmem:[%s670 + $0x128] sm:$0xff]
      %v3288 = vld [vmem:[%s670 + $0x138] sm:$0xff]
      %v3289 = vld [vmem:[%s670 + $0x140] sm:$0xff]
      %v3290 = vld [vmem:[%s670 + $0x150] sm:$0xff]
      %v3291 = vld [vmem:[%s670 + $0x158] sm:$0xff]
      %v3292 = vld [vmem:[%s670 + $0x168] sm:$0xff]
      %v3293 = vld [vmem:[%s670 + $0x170] sm:$0xff]
      %v3294 = vld [vmem:[%s670 + $0x1] sm:$0xff]
      %v3295 = vld [vmem:[%s670 + $0x9] sm:$0xff]
      %v3296 = vld [vmem:[%s670 + $0x19] sm:$0xff]
      %v3297 = vld [vmem:[%s670 + $0x21] sm:$0xff]
      %v3298 = vld [vmem:[%s670 + $0x31] sm:$0xff]
      %v3299 = vld [vmem:[%s670 + $0x39] sm:$0xff]
      %v3300 = vld [vmem:[%s670 + $0x49] sm:$0xff]
      %v3301 = vld [vmem:[%s670 + $0x51] sm:$0xff]
      %v3302 = vld [vmem:[%s670 + $0x61] sm:$0xff]
      %v3303 = vld [vmem:[%s670 + $0x69] sm:$0xff]
      %v3304 = vld [vmem:[%s670 + $0x79] sm:$0xff]
      %v3305 = vld [vmem:[%s670 + $0x81] sm:$0xff]
      %v3306 = vld [vmem:[%s670 + $0x91] sm:$0xff]
      %v3307 = vld [vmem:[%s670 + $0x99] sm:$0xff]
      %v3308 = vld [vmem:[%s670 + $0xa9] sm:$0xff]
      %v3309 = vld [vmem:[%s670 + $0xb1] sm:$0xff]
      %v3310 = vld [vmem:[%s670 + $0xc1] sm:$0xff]
      %v3311 = vld [vmem:[%s670 + $0xc9] sm:$0xff]
      %v3312 = vld [vmem:[%s670 + $0xd9] sm:$0xff]
      %v3313 = vld [vmem:[%s670 + $0xe1] sm:$0xff]
      %v3314 = vld [vmem:[%s670 + $0xf1] sm:$0xff]
      %v3315 = vld [vmem:[%s670 + $0xf9] sm:$0xff]
      %v3316 = vld [vmem:[%s670 + $0x109] sm:$0xff]
      %v3317 = vld [vmem:[%s670 + $0x111] sm:$0xff]
      %v3318 = vld [vmem:[%s670 + $0x121] sm:$0xff]
      %v3319 = vld [vmem:[%s670 + $0x129] sm:$0xff]
      %v3320 = vld [vmem:[%s670 + $0x139] sm:$0xff]
      %v3321 = vld [vmem:[%s670 + $0x141] sm:$0xff]
      %v3322 = vld [vmem:[%s670 + $0x151] sm:$0xff]
      %v3323 = vld [vmem:[%s670 + $0x159] sm:$0xff]
      %v3324 = vld [vmem:[%s670 + $0x169] sm:$0xff]
      %v3325 = vld [vmem:[%s670 + $0x171] sm:$0xff]
      %v3326 = vld [vmem:[%s670 + $0x2] sm:$0xff]
      %v3327 = vld [vmem:[%s670 + $0xa] sm:$0xff]
      %v3328 = vld [vmem:[%s670 + $0x1a] sm:$0xff]
      %v3329 = vld [vmem:[%s670 + $0x22] sm:$0xff]
      %v3330 = vld [vmem:[%s670 + $0x32] sm:$0xff]
      %v3331 = vld [vmem:[%s670 + $0x3a] sm:$0xff]
      %v3332 = vld [vmem:[%s670 + $0x4a] sm:$0xff]
      %v3333 = vld [vmem:[%s670 + $0x52] sm:$0xff]
      %v3334 = vld [vmem:[%s670 + $0x62] sm:$0xff]
      %v3335 = vld [vmem:[%s670 + $0x6a] sm:$0xff]
      %v3336 = vld [vmem:[%s670 + $0x7a] sm:$0xff]
      %v3337 = vld [vmem:[%s670 + $0x82] sm:$0xff]
      %v3338 = vld [vmem:[%s670 + $0x92] sm:$0xff]
      %v3339 = vld [vmem:[%s670 + $0x9a] sm:$0xff]
      %v3340 = vld [vmem:[%s670 + $0xaa] sm:$0xff]
      %v3341 = vld [vmem:[%s670 + $0xb2] sm:$0xff]
      %v3342 = vld [vmem:[%s670 + $0xc2] sm:$0xff]
      %v3343 = vld [vmem:[%s670 + $0xca] sm:$0xff]
      %v3344 = vld [vmem:[%s670 + $0xda] sm:$0xff]
      %v3345 = vld [vmem:[%s670 + $0xe2] sm:$0xff]
      %v3346 = vld [vmem:[%s670 + $0xf2] sm:$0xff]
      %v3347 = vld [vmem:[%s670 + $0xfa] sm:$0xff]
      %v3348 = vld [vmem:[%s670 + $0x10a] sm:$0xff]
      %v3349 = vld [vmem:[%s670 + $0x112] sm:$0xff]
      %v3350 = vld [vmem:[%s670 + $0x122] sm:$0xff]
      %v3351 = vld [vmem:[%s670 + $0x12a] sm:$0xff]
      %v3352 = vld [vmem:[%s670 + $0x13a] sm:$0xff]
      %v3353 = vld [vmem:[%s670 + $0x142] sm:$0xff]
      %v3354 = vld [vmem:[%s670 + $0x152] sm:$0xff]
      %v3355 = vld [vmem:[%s670 + $0x15a] sm:$0xff]
      %v3356 = vld [vmem:[%s670 + $0x16a] sm:$0xff]
      %v3357 = vld [vmem:[%s670 + $0x172] sm:$0xff]
      %3390 = vrot.lane.b32.xlu0 %v3102, 4
      %v3391 = vpop.permute.xlu0 %3390
      %3392 = vrot.lane.b32.xlu0 %v3103, 4
      %v3393 = vpop.permute.xlu0 %3392
      %3394 = vrot.lane.b32.xlu0 %v3104, 4
      %v3395 = vpop.permute.xlu0 %3394
      %3396 = vrot.lane.b32.xlu0 %v3105, 4
      %v3397 = vpop.permute.xlu0 %3396
      %3398 = vrot.lane.b32.xlu0 %v3106, 4
      %v3399 = vpop.permute.xlu0 %3398
      %3400 = vrot.lane.b32.xlu0 %v3107, 4
      %v3401 = vpop.permute.xlu0 %3400
      %3402 = vrot.lane.b32.xlu0 %v3108, 4
      %v3403 = vpop.permute.xlu0 %3402
      %3404 = vrot.lane.b32.xlu0 %v3109, 4
      %v3405 = vpop.permute.xlu0 %3404
      %3406 = vrot.lane.b32.xlu0 %v3110, 4
      %v3407 = vpop.permute.xlu0 %3406
      %3408 = vrot.lane.b32.xlu0 %v3111, 4
      %v3409 = vpop.permute.xlu0 %3408
      %3410 = vrot.lane.b32.xlu0 %v3112, 4
      %v3411 = vpop.permute.xlu0 %3410
      %3412 = vrot.lane.b32.xlu0 %v3113, 4
      %v3413 = vpop.permute.xlu0 %3412
      %3414 = vrot.lane.b32.xlu0 %v3114, 4
      %v3415 = vpop.permute.xlu0 %3414
      %3416 = vrot.lane.b32.xlu0 %v3115, 4
      %v3417 = vpop.permute.xlu0 %3416
      %3418 = vrot.lane.b32.xlu0 %v3116, 4
      %v3419 = vpop.permute.xlu0 %3418
      %3420 = vrot.lane.b32.xlu0 %v3117, 4
      %v3421 = vpop.permute.xlu0 %3420
      %3422 = vrot.lane.b32.xlu0 %v3118, 4
      %v3423 = vpop.permute.xlu0 %3422
      %3424 = vrot.lane.b32.xlu0 %v3119, 4
      %v3425 = vpop.permute.xlu0 %3424
      %3426 = vrot.lane.b32.xlu0 %v3120, 4
      %v3427 = vpop.permute.xlu0 %3426
      %3428 = vrot.lane.b32.xlu0 %v3121, 4
      %v3429 = vpop.permute.xlu0 %3428
      %3430 = vrot.lane.b32.xlu0 %v3122, 4
      %v3431 = vpop.permute.xlu0 %3430
      %3432 = vrot.lane.b32.xlu0 %v3123, 4
      %v3433 = vpop.permute.xlu0 %3432
      %3434 = vrot.lane.b32.xlu0 %v3124, 4
      %v3435 = vpop.permute.xlu0 %3434
      %3436 = vrot.lane.b32.xlu0 %v3125, 4
      %v3437 = vpop.permute.xlu0 %3436
      %3438 = vrot.lane.b32.xlu0 %v3126, 4
      %v3439 = vpop.permute.xlu0 %3438
      %3440 = vrot.lane.b32.xlu0 %v3127, 4
      %v3441 = vpop.permute.xlu0 %3440
      %3442 = vrot.lane.b32.xlu0 %v3128, 4
      %v3443 = vpop.permute.xlu0 %3442
      %3444 = vrot.lane.b32.xlu0 %v3129, 4
      %v3445 = vpop.permute.xlu0 %3444
      %3446 = vrot.lane.b32.xlu0 %v3130, 4
      %v3447 = vpop.permute.xlu0 %3446
      %3448 = vrot.lane.b32.xlu0 %v3131, 4
      %v3449 = vpop.permute.xlu0 %3448
      %3450 = vrot.lane.b32.xlu0 %v3132, 4
      %v3451 = vpop.permute.xlu0 %3450
      %3452 = vrot.lane.b32.xlu0 %v3133, 4
      %v3453 = vpop.permute.xlu0 %3452
      %3518 = vrot.lane.b32.xlu0 %v3134, 8
      %v3519 = vpop.permute.xlu0 %3518
      %3520 = vrot.lane.b32.xlu0 %v3135, 8
      %v3521 = vpop.permute.xlu0 %3520
      %3522 = vrot.lane.b32.xlu0 %v3136, 8
      %v3523 = vpop.permute.xlu0 %3522
      %3524 = vrot.lane.b32.xlu0 %v3137, 8
      %v3525 = vpop.permute.xlu0 %3524
      %3526 = vrot.lane.b32.xlu0 %v3138, 8
      %v3527 = vpop.permute.xlu0 %3526
      %3528 = vrot.lane.b32.xlu0 %v3139, 8
      %v3529 = vpop.permute.xlu0 %3528
      %3530 = vrot.lane.b32.xlu0 %v3140, 8
      %v3531 = vpop.permute.xlu0 %3530
      %3532 = vrot.lane.b32.xlu0 %v3141, 8
      %v3533 = vpop.permute.xlu0 %3532
      %3534 = vrot.lane.b32.xlu0 %v3142, 8
      %v3535 = vpop.permute.xlu0 %3534
      %3536 = vrot.lane.b32.xlu0 %v3143, 8
      %v3537 = vpop.permute.xlu0 %3536
      %3538 = vrot.lane.b32.xlu0 %v3144, 8
      %v3539 = vpop.permute.xlu0 %3538
      %3540 = vrot.lane.b32.xlu0 %v3145, 8
      %v3541 = vpop.permute.xlu0 %3540
      %3542 = vrot.lane.b32.xlu0 %v3146, 8
      %v3543 = vpop.permute.xlu0 %3542
      %3544 = vrot.lane.b32.xlu0 %v3147, 8
      %v3545 = vpop.permute.xlu0 %3544
      %3546 = vrot.lane.b32.xlu0 %v3148, 8
      %v3547 = vpop.permute.xlu0 %3546
      %3548 = vrot.lane.b32.xlu0 %v3149, 8
      %v3549 = vpop.permute.xlu0 %3548
      %3550 = vrot.lane.b32.xlu0 %v3150, 8
      %v3551 = vpop.permute.xlu0 %3550
      %3552 = vrot.lane.b32.xlu0 %v3151, 8
      %v3553 = vpop.permute.xlu0 %3552
      %3554 = vrot.lane.b32.xlu0 %v3152, 8
      %v3555 = vpop.permute.xlu0 %3554
      %3556 = vrot.lane.b32.xlu0 %v3153, 8
      %v3557 = vpop.permute.xlu0 %3556
      %3558 = vrot.lane.b32.xlu0 %v3154, 8
      %v3559 = vpop.permute.xlu0 %3558
      %3560 = vrot.lane.b32.xlu0 %v3155, 8
      %v3561 = vpop.permute.xlu0 %3560
      %3562 = vrot.lane.b32.xlu0 %v3156, 8
      %v3563 = vpop.permute.xlu0 %3562
      %3564 = vrot.lane.b32.xlu0 %v3157, 8
      %v3565 = vpop.permute.xlu0 %3564
      %3566 = vrot.lane.b32.xlu0 %v3158, 8
      %v3567 = vpop.permute.xlu0 %3566
      %3568 = vrot.lane.b32.xlu0 %v3159, 8
      %v3569 = vpop.permute.xlu0 %3568
      %3570 = vrot.lane.b32.xlu0 %v3160, 8
      %v3571 = vpop.permute.xlu0 %3570
      %3572 = vrot.lane.b32.xlu0 %v3161, 8
      %v3573 = vpop.permute.xlu0 %3572
      %3574 = vrot.lane.b32.xlu0 %v3162, 8
      %v3575 = vpop.permute.xlu0 %3574
      %3576 = vrot.lane.b32.xlu0 %v3163, 8
      %v3577 = vpop.permute.xlu0 %3576
      %3578 = vrot.lane.b32.xlu0 %v3164, 8
      %v3579 = vpop.permute.xlu0 %3578
      %3580 = vrot.lane.b32.xlu0 %v3165, 8
      %v3581 = vpop.permute.xlu0 %3580
      %3646 = vrot.lane.b32.xlu0 %v3166, 12
      %v3647 = vpop.permute.xlu0 %3646
      %3648 = vrot.lane.b32.xlu0 %v3167, 12
      %v3649 = vpop.permute.xlu0 %3648
      %3650 = vrot.lane.b32.xlu0 %v3168, 12
      %v3651 = vpop.permute.xlu0 %3650
      %3652 = vrot.lane.b32.xlu0 %v3169, 12
      %v3653 = vpop.permute.xlu0 %3652
      %3654 = vrot.lane.b32.xlu0 %v3170, 12
      %v3655 = vpop.permute.xlu0 %3654
      %3656 = vrot.lane.b32.xlu0 %v3171, 12
      %v3657 = vpop.permute.xlu0 %3656
      %3658 = vrot.lane.b32.xlu0 %v3172, 12
      %v3659 = vpop.permute.xlu0 %3658
      %3660 = vrot.lane.b32.xlu0 %v3173, 12
      %v3661 = vpop.permute.xlu0 %3660
      %3662 = vrot.lane.b32.xlu0 %v3174, 12
      %v3663 = vpop.permute.xlu0 %3662
      %3664 = vrot.lane.b32.xlu0 %v3175, 12
      %v3665 = vpop.permute.xlu0 %3664
      %3666 = vrot.lane.b32.xlu0 %v3176, 12
      %v3667 = vpop.permute.xlu0 %3666
      %3668 = vrot.lane.b32.xlu0 %v3177, 12
      %v3669 = vpop.permute.xlu0 %3668
      %3670 = vrot.lane.b32.xlu0 %v3178, 12
      %v3671 = vpop.permute.xlu0 %3670
      %3672 = vrot.lane.b32.xlu0 %v3179, 12
      %v3673 = vpop.permute.xlu0 %3672
      %3674 = vrot.lane.b32.xlu0 %v3180, 12
      %v3675 = vpop.permute.xlu0 %3674
      %3676 = vrot.lane.b32.xlu0 %v3181, 12
      %v3677 = vpop.permute.xlu0 %3676
      %3678 = vrot.lane.b32.xlu0 %v3182, 12
      %v3679 = vpop.permute.xlu0 %3678
      %3680 = vrot.lane.b32.xlu0 %v3183, 12
      %v3681 = vpop.permute.xlu0 %3680
      %3682 = vrot.lane.b32.xlu0 %v3184, 12
      %v3683 = vpop.permute.xlu0 %3682
      %3684 = vrot.lane.b32.xlu0 %v3185, 12
      %v3685 = vpop.permute.xlu0 %3684
      %3686 = vrot.lane.b32.xlu0 %v3186, 12
      %v3687 = vpop.permute.xlu0 %3686
      %3688 = vrot.lane.b32.xlu0 %v3187, 12
      %v3689 = vpop.permute.xlu0 %3688
      %3690 = vrot.lane.b32.xlu0 %v3188, 12
      %v3691 = vpop.permute.xlu0 %3690
      %3692 = vrot.lane.b32.xlu0 %v3189, 12
      %v3693 = vpop.permute.xlu0 %3692
      %3694 = vrot.lane.b32.xlu0 %v3190, 12
      %v3695 = vpop.permute.xlu0 %3694
      %3696 = vrot.lane.b32.xlu0 %v3191, 12
      %v3697 = vpop.permute.xlu0 %3696
      %3698 = vrot.lane.b32.xlu0 %v3192, 12
      %v3699 = vpop.permute.xlu0 %3698
      %3700 = vrot.lane.b32.xlu0 %v3193, 12
      %v3701 = vpop.permute.xlu0 %3700
      %3702 = vrot.lane.b32.xlu0 %v3194, 12
      %v3703 = vpop.permute.xlu0 %3702
      %3704 = vrot.lane.b32.xlu0 %v3195, 12
      %v3705 = vpop.permute.xlu0 %3704
      %3706 = vrot.lane.b32.xlu0 %v3196, 12
      %v3707 = vpop.permute.xlu0 %3706
      %3708 = vrot.lane.b32.xlu0 %v3197, 12
      %v3709 = vpop.permute.xlu0 %3708
      %3774 = vrot.lane.b32.xlu0 %v3198, 16
      %v3775 = vpop.permute.xlu0 %3774
      %3776 = vrot.lane.b32.xlu0 %v3199, 16
      %v3777 = vpop.permute.xlu0 %3776
      %3778 = vrot.lane.b32.xlu0 %v3200, 16
      %v3779 = vpop.permute.xlu0 %3778
      %3780 = vrot.lane.b32.xlu0 %v3201, 16
      %v3781 = vpop.permute.xlu0 %3780
      %3782 = vrot.lane.b32.xlu0 %v3202, 16
      %v3783 = vpop.permute.xlu0 %3782
      %3784 = vrot.lane.b32.xlu0 %v3203, 16
      %v3785 = vpop.permute.xlu0 %3784
      %3786 = vrot.lane.b32.xlu0 %v3204, 16
      %v3787 = vpop.permute.xlu0 %3786
      %3788 = vrot.lane.b32.xlu0 %v3205, 16
      %v3789 = vpop.permute.xlu0 %3788
      %3790 = vrot.lane.b32.xlu0 %v3206, 16
      %v3791 = vpop.permute.xlu0 %3790
      %3792 = vrot.lane.b32.xlu0 %v3207, 16
      %v3793 = vpop.permute.xlu0 %3792
      %3794 = vrot.lane.b32.xlu0 %v3208, 16
      %v3795 = vpop.permute.xlu0 %3794
      %3796 = vrot.lane.b32.xlu0 %v3209, 16
      %v3797 = vpop.permute.xlu0 %3796
      %3798 = vrot.lane.b32.xlu0 %v3210, 16
      %v3799 = vpop.permute.xlu0 %3798
      %3800 = vrot.lane.b32.xlu0 %v3211, 16
      %v3801 = vpop.permute.xlu0 %3800
      %3802 = vrot.lane.b32.xlu0 %v3212, 16
      %v3803 = vpop.permute.xlu0 %3802
      %3804 = vrot.lane.b32.xlu0 %v3213, 16
      %v3805 = vpop.permute.xlu0 %3804
      %3806 = vrot.lane.b32.xlu0 %v3214, 16
      %v3807 = vpop.permute.xlu0 %3806
      %3808 = vrot.lane.b32.xlu0 %v3215, 16
      %v3809 = vpop.permute.xlu0 %3808
      %3810 = vrot.lane.b32.xlu0 %v3216, 16
      %v3811 = vpop.permute.xlu0 %3810
      %3812 = vrot.lane.b32.xlu0 %v3217, 16
      %v3813 = vpop.permute.xlu0 %3812
      %3814 = vrot.lane.b32.xlu0 %v3218, 16
      %v3815 = vpop.permute.xlu0 %3814
      %3816 = vrot.lane.b32.xlu0 %v3219, 16
      %v3817 = vpop.permute.xlu0 %3816
      %3818 = vrot.lane.b32.xlu0 %v3220, 16
      %v3819 = vpop.permute.xlu0 %3818
      %3820 = vrot.lane.b32.xlu0 %v3221, 16
      %v3821 = vpop.permute.xlu0 %3820
      %3822 = vrot.lane.b32.xlu0 %v3222, 16
      %v3823 = vpop.permute.xlu0 %3822
      %3824 = vrot.lane.b32.xlu0 %v3223, 16
      %v3825 = vpop.permute.xlu0 %3824
      %3826 = vrot.lane.b32.xlu0 %v3224, 16
      %v3827 = vpop.permute.xlu0 %3826
      %3828 = vrot.lane.b32.xlu0 %v3225, 16
      %v3829 = vpop.permute.xlu0 %3828
      %3830 = vrot.lane.b32.xlu0 %v3226, 16
      %v3831 = vpop.permute.xlu0 %3830
      %3832 = vrot.lane.b32.xlu0 %v3227, 16
      %v3833 = vpop.permute.xlu0 %3832
      %3834 = vrot.lane.b32.xlu0 %v3228, 16
      %v3835 = vpop.permute.xlu0 %3834
      %3836 = vrot.lane.b32.xlu0 %v3229, 16
      %v3837 = vpop.permute.xlu0 %3836
      %3902 = vrot.lane.b32.xlu0 %v3230, 20
      %v3903 = vpop.permute.xlu0 %3902
      %3904 = vrot.lane.b32.xlu0 %v3231, 20
      %v3905 = vpop.permute.xlu0 %3904
      %3906 = vrot.lane.b32.xlu0 %v3232, 20
      %v3907 = vpop.permute.xlu0 %3906
      %3908 = vrot.lane.b32.xlu0 %v3233, 20
      %v3909 = vpop.permute.xlu0 %3908
      %3910 = vrot.lane.b32.xlu0 %v3234, 20
      %v3911 = vpop.permute.xlu0 %3910
      %3912 = vrot.lane.b32.xlu0 %v3235, 20
      %v3913 = vpop.permute.xlu0 %3912
      %3914 = vrot.lane.b32.xlu0 %v3236, 20
      %v3915 = vpop.permute.xlu0 %3914
      %3916 = vrot.lane.b32.xlu0 %v3237, 20
      %v3917 = vpop.permute.xlu0 %3916
      %3918 = vrot.lane.b32.xlu0 %v3238, 20
      %v3919 = vpop.permute.xlu0 %3918
      %3920 = vrot.lane.b32.xlu0 %v3239, 20
      %v3921 = vpop.permute.xlu0 %3920
      %3922 = vrot.lane.b32.xlu0 %v3240, 20
      %v3923 = vpop.permute.xlu0 %3922
      %3924 = vrot.lane.b32.xlu0 %v3241, 20
      %v3925 = vpop.permute.xlu0 %3924
      %3926 = vrot.lane.b32.xlu0 %v3242, 20
      %v3927 = vpop.permute.xlu0 %3926
      %3928 = vrot.lane.b32.xlu0 %v3243, 20
      %v3929 = vpop.permute.xlu0 %3928
      %3930 = vrot.lane.b32.xlu0 %v3244, 20
      %v3931 = vpop.permute.xlu0 %3930
      %3932 = vrot.lane.b32.xlu0 %v3245, 20
      %v3933 = vpop.permute.xlu0 %3932
      %3934 = vrot.lane.b32.xlu0 %v3246, 20
      %v3935 = vpop.permute.xlu0 %3934
      %3936 = vrot.lane.b32.xlu0 %v3247, 20
      %v3937 = vpop.permute.xlu0 %3936
      %3938 = vrot.lane.b32.xlu0 %v3248, 20
      %v3939 = vpop.permute.xlu0 %3938
      %3940 = vrot.lane.b32.xlu0 %v3249, 20
      %v3941 = vpop.permute.xlu0 %3940
      %3942 = vrot.lane.b32.xlu0 %v3250, 20
      %v3943 = vpop.permute.xlu0 %3942
      %3944 = vrot.lane.b32.xlu0 %v3251, 20
      %v3945 = vpop.permute.xlu0 %3944
      %3946 = vrot.lane.b32.xlu0 %v3252, 20
      %v3947 = vpop.permute.xlu0 %3946
      %3948 = vrot.lane.b32.xlu0 %v3253, 20
      %v3949 = vpop.permute.xlu0 %3948
      %3950 = vrot.lane.b32.xlu0 %v3254, 20
      %v3951 = vpop.permute.xlu0 %3950
      %3952 = vrot.lane.b32.xlu0 %v3255, 20
      %v3953 = vpop.permute.xlu0 %3952
      %3954 = vrot.lane.b32.xlu0 %v3256, 20
      %v3955 = vpop.permute.xlu0 %3954
      %3956 = vrot.lane.b32.xlu0 %v3257, 20
      %v3957 = vpop.permute.xlu0 %3956
      %3958 = vrot.lane.b32.xlu0 %v3258, 20
      %v3959 = vpop.permute.xlu0 %3958
      %3960 = vrot.lane.b32.xlu0 %v3259, 20
      %v3961 = vpop.permute.xlu0 %3960
      %3962 = vrot.lane.b32.xlu0 %v3260, 20
      %v3963 = vpop.permute.xlu0 %3962
      %3964 = vrot.lane.b32.xlu0 %v3261, 20
      %v3965 = vpop.permute.xlu0 %3964
      %4030 = vrot.lane.b32.xlu0 %v3262, 24
      %v4031 = vpop.permute.xlu0 %4030
      %4032 = vrot.lane.b32.xlu0 %v3263, 24
      %v4033 = vpop.permute.xlu0 %4032
      %4034 = vrot.lane.b32.xlu0 %v3264, 24
      %v4035 = vpop.permute.xlu0 %4034
      %4036 = vrot.lane.b32.xlu0 %v3265, 24
      %v4037 = vpop.permute.xlu0 %4036
      %4038 = vrot.lane.b32.xlu0 %v3266, 24
      %v4039 = vpop.permute.xlu0 %4038
      %4040 = vrot.lane.b32.xlu0 %v3267, 24
      %v4041 = vpop.permute.xlu0 %4040
      %4042 = vrot.lane.b32.xlu0 %v3268, 24
      %v4043 = vpop.permute.xlu0 %4042
      %4044 = vrot.lane.b32.xlu0 %v3269, 24
      %v4045 = vpop.permute.xlu0 %4044
      %4046 = vrot.lane.b32.xlu0 %v3270, 24
      %v4047 = vpop.permute.xlu0 %4046
      %4048 = vrot.lane.b32.xlu0 %v3271, 24
      %v4049 = vpop.permute.xlu0 %4048
      %4050 = vrot.lane.b32.xlu0 %v3272, 24
      %v4051 = vpop.permute.xlu0 %4050
      %4052 = vrot.lane.b32.xlu0 %v3273, 24
      %v4053 = vpop.permute.xlu0 %4052
      %4054 = vrot.lane.b32.xlu0 %v3274, 24
      %v4055 = vpop.permute.xlu0 %4054
      %4056 = vrot.lane.b32.xlu0 %v3275, 24
      %v4057 = vpop.permute.xlu0 %4056
      %4058 = vrot.lane.b32.xlu0 %v3276, 24
      %v4059 = vpop.permute.xlu0 %4058
      %4060 = vrot.lane.b32.xlu0 %v3277, 24
      %v4061 = vpop.permute.xlu0 %4060
      %4062 = vrot.lane.b32.xlu0 %v3278, 24
      %v4063 = vpop.permute.xlu0 %4062
      %4064 = vrot.lane.b32.xlu0 %v3279, 24
      %v4065 = vpop.permute.xlu0 %4064
      %4066 = vrot.lane.b32.xlu0 %v3280, 24
      %v4067 = vpop.permute.xlu0 %4066
      %4068 = vrot.lane.b32.xlu0 %v3281, 24
      %v4069 = vpop.permute.xlu0 %4068
      %4070 = vrot.lane.b32.xlu0 %v3282, 24
      %v4071 = vpop.permute.xlu0 %4070
      %4072 = vrot.lane.b32.xlu0 %v3283, 24
      %v4073 = vpop.permute.xlu0 %4072
      %4074 = vrot.lane.b32.xlu0 %v3284, 24
      %v4075 = vpop.permute.xlu0 %4074
      %4076 = vrot.lane.b32.xlu0 %v3285, 24
      %v4077 = vpop.permute.xlu0 %4076
      %4078 = vrot.lane.b32.xlu0 %v3286, 24
      %v4079 = vpop.permute.xlu0 %4078
      %4080 = vrot.lane.b32.xlu0 %v3287, 24
      %v4081 = vpop.permute.xlu0 %4080
      %4082 = vrot.lane.b32.xlu0 %v3288, 24
      %v4083 = vpop.permute.xlu0 %4082
      %4084 = vrot.lane.b32.xlu0 %v3289, 24
      %v4085 = vpop.permute.xlu0 %4084
      %4086 = vrot.lane.b32.xlu0 %v3290, 24
      %v4087 = vpop.permute.xlu0 %4086
      %4088 = vrot.lane.b32.xlu0 %v3291, 24
      %v4089 = vpop.permute.xlu0 %4088
      %4090 = vrot.lane.b32.xlu0 %v3292, 24
      %v4091 = vpop.permute.xlu0 %4090
      %4092 = vrot.lane.b32.xlu0 %v3293, 24
      %v4093 = vpop.permute.xlu0 %4092
      %4158 = vrot.lane.b32.xlu0 %v3294, 28
      %v4159 = vpop.permute.xlu0 %4158
      %4160 = vrot.lane.b32.xlu0 %v3295, 28
      %v4161 = vpop.permute.xlu0 %4160
      %4162 = vrot.lane.b32.xlu0 %v3296, 28
      %v4163 = vpop.permute.xlu0 %4162
      %4164 = vrot.lane.b32.xlu0 %v3297, 28
      %v4165 = vpop.permute.xlu0 %4164
      %4166 = vrot.lane.b32.xlu0 %v3298, 28
      %v4167 = vpop.permute.xlu0 %4166
      %4168 = vrot.lane.b32.xlu0 %v3299, 28
      %v4169 = vpop.permute.xlu0 %4168
      %4170 = vrot.lane.b32.xlu0 %v3300, 28
      %v4171 = vpop.permute.xlu0 %4170
      %4172 = vrot.lane.b32.xlu0 %v3301, 28
      %v4173 = vpop.permute.xlu0 %4172
      %4174 = vrot.lane.b32.xlu0 %v3302, 28
      %v4175 = vpop.permute.xlu0 %4174
      %4176 = vrot.lane.b32.xlu0 %v3303, 28
      %v4177 = vpop.permute.xlu0 %4176
      %4178 = vrot.lane.b32.xlu0 %v3304, 28
      %v4179 = vpop.permute.xlu0 %4178
      %4180 = vrot.lane.b32.xlu0 %v3305, 28
      %v4181 = vpop.permute.xlu0 %4180
      %4182 = vrot.lane.b32.xlu0 %v3306, 28
      %v4183 = vpop.permute.xlu0 %4182
      %4184 = vrot.lane.b32.xlu0 %v3307, 28
      %v4185 = vpop.permute.xlu0 %4184
      %4186 = vrot.lane.b32.xlu0 %v3308, 28
      %v4187 = vpop.permute.xlu0 %4186
      %4188 = vrot.lane.b32.xlu0 %v3309, 28
      %v4189 = vpop.permute.xlu0 %4188
      %4190 = vrot.lane.b32.xlu0 %v3310, 28
      %v4191 = vpop.permute.xlu0 %4190
      %4192 = vrot.lane.b32.xlu0 %v3311, 28
      %v4193 = vpop.permute.xlu0 %4192
      %4194 = vrot.lane.b32.xlu0 %v3312, 28
      %v4195 = vpop.permute.xlu0 %4194
      %4196 = vrot.lane.b32.xlu0 %v3313, 28
      %v4197 = vpop.permute.xlu0 %4196
      %4198 = vrot.lane.b32.xlu0 %v3314, 28
      %v4199 = vpop.permute.xlu0 %4198
      %4200 = vrot.lane.b32.xlu0 %v3315, 28
      %v4201 = vpop.permute.xlu0 %4200
      %4202 = vrot.lane.b32.xlu0 %v3316, 28
      %v4203 = vpop.permute.xlu0 %4202
      %4204 = vrot.lane.b32.xlu0 %v3317, 28
      %v4205 = vpop.permute.xlu0 %4204
      %4206 = vrot.lane.b32.xlu0 %v3318, 28
      %v4207 = vpop.permute.xlu0 %4206
      %4208 = vrot.lane.b32.xlu0 %v3319, 28
      %v4209 = vpop.permute.xlu0 %4208
      %4210 = vrot.lane.b32.xlu0 %v3320, 28
      %v4211 = vpop.permute.xlu0 %4210
      %4212 = vrot.lane.b32.xlu0 %v3321, 28
      %v4213 = vpop.permute.xlu0 %4212
      %4214 = vrot.lane.b32.xlu0 %v3322, 28
      %v4215 = vpop.permute.xlu0 %4214
      %4216 = vrot.lane.b32.xlu0 %v3323, 28
      %v4217 = vpop.permute.xlu0 %4216
      %4218 = vrot.lane.b32.xlu0 %v3324, 28
      %v4219 = vpop.permute.xlu0 %4218
      %4220 = vrot.lane.b32.xlu0 %v3325, 28
      %v4221 = vpop.permute.xlu0 %4220
      %4286 = vrot.lane.b32.xlu0 %v3326, 32
      %v4287 = vpop.permute.xlu0 %4286
      %4288 = vrot.lane.b32.xlu0 %v3327, 32
      %v4289 = vpop.permute.xlu0 %4288
      %4290 = vrot.lane.b32.xlu0 %v3328, 32
      %v4291 = vpop.permute.xlu0 %4290
      %4292 = vrot.lane.b32.xlu0 %v3329, 32
      %v4293 = vpop.permute.xlu0 %4292
      %4294 = vrot.lane.b32.xlu0 %v3330, 32
      %v4295 = vpop.permute.xlu0 %4294
      %4296 = vrot.lane.b32.xlu0 %v3331, 32
      %v4297 = vpop.permute.xlu0 %4296
      %4298 = vrot.lane.b32.xlu0 %v3332, 32
      %v4299 = vpop.permute.xlu0 %4298
      %4300 = vrot.lane.b32.xlu0 %v3333, 32
      %v4301 = vpop.permute.xlu0 %4300
      %4302 = vrot.lane.b32.xlu0 %v3334, 32
      %v4303 = vpop.permute.xlu0 %4302
      %4304 = vrot.lane.b32.xlu0 %v3335, 32
      %v4305 = vpop.permute.xlu0 %4304
      %4306 = vrot.lane.b32.xlu0 %v3336, 32
      %v4307 = vpop.permute.xlu0 %4306
      %4308 = vrot.lane.b32.xlu0 %v3337, 32
      %v4309 = vpop.permute.xlu0 %4308
      %4310 = vrot.lane.b32.xlu0 %v3338, 32
      %v4311 = vpop.permute.xlu0 %4310
      %4312 = vrot.lane.b32.xlu0 %v3339, 32
      %v4313 = vpop.permute.xlu0 %4312
      %4314 = vrot.lane.b32.xlu0 %v3340, 32
      %v4315 = vpop.permute.xlu0 %4314
      %4316 = vrot.lane.b32.xlu0 %v3341, 32
      %v4317 = vpop.permute.xlu0 %4316
      %4318 = vrot.lane.b32.xlu0 %v3342, 32
      %v4319 = vpop.permute.xlu0 %4318
      %4320 = vrot.lane.b32.xlu0 %v3343, 32
      %v4321 = vpop.permute.xlu0 %4320
      %4322 = vrot.lane.b32.xlu0 %v3344, 32
      %v4323 = vpop.permute.xlu0 %4322
      %4324 = vrot.lane.b32.xlu0 %v3345, 32
      %v4325 = vpop.permute.xlu0 %4324
      %4326 = vrot.lane.b32.xlu0 %v3346, 32
      %v4327 = vpop.permute.xlu0 %4326
      %4328 = vrot.lane.b32.xlu0 %v3347, 32
      %v4329 = vpop.permute.xlu0 %4328
      %4330 = vrot.lane.b32.xlu0 %v3348, 32
      %v4331 = vpop.permute.xlu0 %4330
      %4332 = vrot.lane.b32.xlu0 %v3349, 32
      %v4333 = vpop.permute.xlu0 %4332
      %4334 = vrot.lane.b32.xlu0 %v3350, 32
      %v4335 = vpop.permute.xlu0 %4334
      %4336 = vrot.lane.b32.xlu0 %v3351, 32
      %v4337 = vpop.permute.xlu0 %4336
      %4338 = vrot.lane.b32.xlu0 %v3352, 32
      %v4339 = vpop.permute.xlu0 %4338
      %4340 = vrot.lane.b32.xlu0 %v3353, 32
      %v4341 = vpop.permute.xlu0 %4340
      %4342 = vrot.lane.b32.xlu0 %v3354, 32
      %v4343 = vpop.permute.xlu0 %4342
      %4344 = vrot.lane.b32.xlu0 %v3355, 32
      %v4345 = vpop.permute.xlu0 %4344
      %4346 = vrot.lane.b32.xlu0 %v3356, 32
      %v4347 = vpop.permute.xlu0 %4346
      %4348 = vrot.lane.b32.xlu0 %v3357, 32
      %v4349 = vpop.permute.xlu0 %4348
      %v4382 = vsel %vm361, %v3070, %v3391
      %v4383 = vsel %vm361, %v3071, %v3393
      %v4384 = vsel %vm361, %v3072, %v3395
      %v4385 = vsel %vm361, %v3073, %v3397
      %v4386 = vsel %vm361, %v3074, %v3399
      %v4387 = vsel %vm361, %v3075, %v3401
      %v4388 = vsel %vm361, %v3076, %v3403
      %v4389 = vsel %vm361, %v3077, %v3405
      %v4390 = vsel %vm361, %v3078, %v3407
      %v4391 = vsel %vm361, %v3079, %v3409
      %v4392 = vsel %vm361, %v3080, %v3411
      %v4393 = vsel %vm361, %v3081, %v3413
      %v4394 = vsel %vm361, %v3082, %v3415
      %v4395 = vsel %vm361, %v3083, %v3417
      %v4396 = vsel %vm361, %v3084, %v3419
      %v4397 = vsel %vm361, %v3085, %v3421
      %v4398 = vsel %vm361, %v3086, %v3423
      %v4399 = vsel %vm361, %v3087, %v3425
      %v4400 = vsel %vm361, %v3088, %v3427
      %v4401 = vsel %vm361, %v3089, %v3429
      %v4402 = vsel %vm361, %v3090, %v3431
      %v4403 = vsel %vm361, %v3091, %v3433
      %v4404 = vsel %vm361, %v3092, %v3435
      %v4405 = vsel %vm361, %v3093, %v3437
      %v4406 = vsel %vm361, %v3094, %v3439
      %v4407 = vsel %vm361, %v3095, %v3441
      %v4408 = vsel %vm361, %v3096, %v3443
      %v4409 = vsel %vm361, %v3097, %v3445
      %v4410 = vsel %vm361, %v3098, %v3447
      %v4411 = vsel %vm361, %v3099, %v3449
      %v4412 = vsel %vm361, %v3100, %v3451
      %v4413 = vsel %vm361, %v3101, %v3453
      %v4414 = vsel %vm1823, %v4382, %v3519
      %v4415 = vsel %vm1823, %v4383, %v3521
      %v4416 = vsel %vm1823, %v4384, %v3523
      %v4417 = vsel %vm1823, %v4385, %v3525
      %v4418 = vsel %vm1823, %v4386, %v3527
      %v4419 = vsel %vm1823, %v4387, %v3529
      %v4420 = vsel %vm1823, %v4388, %v3531
      %v4421 = vsel %vm1823, %v4389, %v3533
      %v4422 = vsel %vm1823, %v4390, %v3535
      %v4423 = vsel %vm1823, %v4391, %v3537
      %v4424 = vsel %vm1823, %v4392, %v3539
      %v4425 = vsel %vm1823, %v4393, %v3541
      %v4426 = vsel %vm1823, %v4394, %v3543
      %v4427 = vsel %vm1823, %v4395, %v3545
      %v4428 = vsel %vm1823, %v4396, %v3547
      %v4429 = vsel %vm1823, %v4397, %v3549
      %v4430 = vsel %vm1823, %v4398, %v3551
      %v4431 = vsel %vm1823, %v4399, %v3553
      %v4432 = vsel %vm1823, %v4400, %v3555
      %v4433 = vsel %vm1823, %v4401, %v3557
      %v4434 = vsel %vm1823, %v4402, %v3559
      %v4435 = vsel %vm1823, %v4403, %v3561
      %v4436 = vsel %vm1823, %v4404, %v3563
      %v4437 = vsel %vm1823, %v4405, %v3565
      %v4438 = vsel %vm1823, %v4406, %v3567
      %v4439 = vsel %vm1823, %v4407, %v3569
      %v4440 = vsel %vm1823, %v4408, %v3571
      %v4441 = vsel %vm1823, %v4409, %v3573
      %v4442 = vsel %vm1823, %v4410, %v3575
      %v4443 = vsel %vm1823, %v4411, %v3577
      %v4444 = vsel %vm1823, %v4412, %v3579
      %v4445 = vsel %vm1823, %v4413, %v3581
      %v4446 = vsel %vm1856, %v4414, %v3647
      %v4447 = vsel %vm1856, %v4415, %v3649
      %v4448 = vsel %vm1856, %v4416, %v3651
      %v4449 = vsel %vm1856, %v4417, %v3653
      %v4450 = vsel %vm1856, %v4418, %v3655
      %v4451 = vsel %vm1856, %v4419, %v3657
      %v4452 = vsel %vm1856, %v4420, %v3659
      %v4453 = vsel %vm1856, %v4421, %v3661
      %v4454 = vsel %vm1856, %v4422, %v3663
      %v4455 = vsel %vm1856, %v4423, %v3665
      %v4456 = vsel %vm1856, %v4424, %v3667
      %v4457 = vsel %vm1856, %v4425, %v3669
      %v4458 = vsel %vm1856, %v4426, %v3671
      %v4459 = vsel %vm1856, %v4427, %v3673
      %v4460 = vsel %vm1856, %v4428, %v3675
      %v4461 = vsel %vm1856, %v4429, %v3677
      %v4462 = vsel %vm1856, %v4430, %v3679
      %v4463 = vsel %vm1856, %v4431, %v3681
      %v4464 = vsel %vm1856, %v4432, %v3683
      %v4465 = vsel %vm1856, %v4433, %v3685
      %v4466 = vsel %vm1856, %v4434, %v3687
      %v4467 = vsel %vm1856, %v4435, %v3689
      %v4468 = vsel %vm1856, %v4436, %v3691
      %v4469 = vsel %vm1856, %v4437, %v3693
      %v4470 = vsel %vm1856, %v4438, %v3695
      %v4471 = vsel %vm1856, %v4439, %v3697
      %v4472 = vsel %vm1856, %v4440, %v3699
      %v4473 = vsel %vm1856, %v4441, %v3701
      %v4474 = vsel %vm1856, %v4442, %v3703
      %v4475 = vsel %vm1856, %v4443, %v3705
      %v4476 = vsel %vm1856, %v4444, %v3707
      %v4477 = vsel %vm1856, %v4445, %v3709
      %v4478 = vsel %vm1889, %v4446, %v3775
      %v4479 = vsel %vm1889, %v4447, %v3777
      %v4480 = vsel %vm1889, %v4448, %v3779
      %v4481 = vsel %vm1889, %v4449, %v3781
      %v4482 = vsel %vm1889, %v4450, %v3783
      %v4483 = vsel %vm1889, %v4451, %v3785
      %v4484 = vsel %vm1889, %v4452, %v3787
      %v4485 = vsel %vm1889, %v4453, %v3789
      %v4486 = vsel %vm1889, %v4454, %v3791
      %v4487 = vsel %vm1889, %v4455, %v3793
      %v4488 = vsel %vm1889, %v4456, %v3795
      %v4489 = vsel %vm1889, %v4457, %v3797
      %v4490 = vsel %vm1889, %v4458, %v3799
      %v4491 = vsel %vm1889, %v4459, %v3801
      %v4492 = vsel %vm1889, %v4460, %v3803
      %v4493 = vsel %vm1889, %v4461, %v3805
      %v4494 = vsel %vm1889, %v4462, %v3807
      %v4495 = vsel %vm1889, %v4463, %v3809
      %v4496 = vsel %vm1889, %v4464, %v3811
      %v4497 = vsel %vm1889, %v4465, %v3813
      %v4498 = vsel %vm1889, %v4466, %v3815
      %v4499 = vsel %vm1889, %v4467, %v3817
      %v4500 = vsel %vm1889, %v4468, %v3819
      %v4501 = vsel %vm1889, %v4469, %v3821
      %v4502 = vsel %vm1889, %v4470, %v3823
      %v4503 = vsel %vm1889, %v4471, %v3825
      %v4504 = vsel %vm1889, %v4472, %v3827
      %v4505 = vsel %vm1889, %v4473, %v3829
      %v4506 = vsel %vm1889, %v4474, %v3831
      %v4507 = vsel %vm1889, %v4475, %v3833
      %v4508 = vsel %vm1889, %v4476, %v3835
      %v4509 = vsel %vm1889, %v4477, %v3837
      %v4510 = vsel %vm1922, %v4478, %v3903
      %v4511 = vsel %vm1922, %v4479, %v3905
      %v4512 = vsel %vm1922, %v4480, %v3907
      %v4513 = vsel %vm1922, %v4481, %v3909
      %v4514 = vsel %vm1922, %v4482, %v3911
      %v4515 = vsel %vm1922, %v4483, %v3913
      %v4516 = vsel %vm1922, %v4484, %v3915
      %v4517 = vsel %vm1922, %v4485, %v3917
      %v4518 = vsel %vm1922, %v4486, %v3919
      %v4519 = vsel %vm1922, %v4487, %v3921
      %v4520 = vsel %vm1922, %v4488, %v3923
      %v4521 = vsel %vm1922, %v4489, %v3925
      %v4522 = vsel %vm1922, %v4490, %v3927
      %v4523 = vsel %vm1922, %v4491, %v3929
      %v4524 = vsel %vm1922, %v4492, %v3931
      %v4525 = vsel %vm1922, %v4493, %v3933
      %v4526 = vsel %vm1922, %v4494, %v3935
      %v4527 = vsel %vm1922, %v4495, %v3937
      %v4528 = vsel %vm1922, %v4496, %v3939
      %v4529 = vsel %vm1922, %v4497, %v3941
      %v4530 = vsel %vm1922, %v4498, %v3943
      %v4531 = vsel %vm1922, %v4499, %v3945
      %v4532 = vsel %vm1922, %v4500, %v3947
      %v4533 = vsel %vm1922, %v4501, %v3949
      %v4534 = vsel %vm1922, %v4502, %v3951
      %v4535 = vsel %vm1922, %v4503, %v3953
      %v4536 = vsel %vm1922, %v4504, %v3955
      %v4537 = vsel %vm1922, %v4505, %v3957
      %v4538 = vsel %vm1922, %v4506, %v3959
      %v4539 = vsel %vm1922, %v4507, %v3961
      %v4540 = vsel %vm1922, %v4508, %v3963
      %v4541 = vsel %vm1922, %v4509, %v3965
      %v4542 = vsel %vm1955, %v4510, %v4031
      %v4543 = vsel %vm1955, %v4511, %v4033
      %v4544 = vsel %vm1955, %v4512, %v4035
      %v4545 = vsel %vm1955, %v4513, %v4037
      %v4546 = vsel %vm1955, %v4514, %v4039
      %v4547 = vsel %vm1955, %v4515, %v4041
      %v4548 = vsel %vm1955, %v4516, %v4043
      %v4549 = vsel %vm1955, %v4517, %v4045
      %v4550 = vsel %vm1955, %v4518, %v4047
      %v4551 = vsel %vm1955, %v4519, %v4049
      %v4552 = vsel %vm1955, %v4520, %v4051
      %v4553 = vsel %vm1955, %v4521, %v4053
      %v4554 = vsel %vm1955, %v4522, %v4055
      %v4555 = vsel %vm1955, %v4523, %v4057
      %v4556 = vsel %vm1955, %v4524, %v4059
      %v4557 = vsel %vm1955, %v4525, %v4061
      %v4558 = vsel %vm1955, %v4526, %v4063
      %v4559 = vsel %vm1955, %v4527, %v4065
      %v4560 = vsel %vm1955, %v4528, %v4067
      %v4561 = vsel %vm1955, %v4529, %v4069
      %v4562 = vsel %vm1955, %v4530, %v4071
      %v4563 = vsel %vm1955, %v4531, %v4073
      %v4564 = vsel %vm1955, %v4532, %v4075
      %v4565 = vsel %vm1955, %v4533, %v4077
      %v4566 = vsel %vm1955, %v4534, %v4079
      %v4567 = vsel %vm1955, %v4535, %v4081
      %v4568 = vsel %vm1955, %v4536, %v4083
      %v4569 = vsel %vm1955, %v4537, %v4085
      %v4570 = vsel %vm1955, %v4538, %v4087
      %v4571 = vsel %vm1955, %v4539, %v4089
      %v4572 = vsel %vm1955, %v4540, %v4091
      %v4573 = vsel %vm1955, %v4541, %v4093
      %v4574 = vsel %vm1988, %v4542, %v4159
      %v4575 = vsel %vm1988, %v4543, %v4161
      %v4576 = vsel %vm1988, %v4544, %v4163
      %v4577 = vsel %vm1988, %v4545, %v4165
      %v4578 = vsel %vm1988, %v4546, %v4167
      %v4579 = vsel %vm1988, %v4547, %v4169
      %v4580 = vsel %vm1988, %v4548, %v4171
      %v4581 = vsel %vm1988, %v4549, %v4173
      %v4582 = vsel %vm1988, %v4550, %v4175
      %v4583 = vsel %vm1988, %v4551, %v4177
      %v4584 = vsel %vm1988, %v4552, %v4179
      %v4585 = vsel %vm1988, %v4553, %v4181
      %v4586 = vsel %vm1988, %v4554, %v4183
      %v4587 = vsel %vm1988, %v4555, %v4185
      %v4588 = vsel %vm1988, %v4556, %v4187
      %v4589 = vsel %vm1988, %v4557, %v4189
      %v4590 = vsel %vm1988, %v4558, %v4191
      %v4591 = vsel %vm1988, %v4559, %v4193
      %v4592 = vsel %vm1988, %v4560, %v4195
      %v4593 = vsel %vm1988, %v4561, %v4197
      %v4594 = vsel %vm1988, %v4562, %v4199
      %v4595 = vsel %vm1988, %v4563, %v4201
      %v4596 = vsel %vm1988, %v4564, %v4203
      %v4597 = vsel %vm1988, %v4565, %v4205
      %v4598 = vsel %vm1988, %v4566, %v4207
      %v4599 = vsel %vm1988, %v4567, %v4209
      %v4600 = vsel %vm1988, %v4568, %v4211
      %v4601 = vsel %vm1988, %v4569, %v4213
      %v4602 = vsel %vm1988, %v4570, %v4215
      %v4603 = vsel %vm1988, %v4571, %v4217
      %v4604 = vsel %vm1988, %v4572, %v4219
      %v4605 = vsel %vm1988, %v4573, %v4221
      %v4606 = vsel %vm2021, %v4574, %v4287
      %v4607 = vsel %vm2021, %v4575, %v4289
      %v4608 = vsel %vm2021, %v4576, %v4291
      %v4609 = vsel %vm2021, %v4577, %v4293
      %v4610 = vsel %vm2021, %v4578, %v4295
      %v4611 = vsel %vm2021, %v4579, %v4297
      %v4612 = vsel %vm2021, %v4580, %v4299
      %v4613 = vsel %vm2021, %v4581, %v4301
      %v4614 = vsel %vm2021, %v4582, %v4303
      %v4615 = vsel %vm2021, %v4583, %v4305
      %v4616 = vsel %vm2021, %v4584, %v4307
      %v4617 = vsel %vm2021, %v4585, %v4309
      %v4618 = vsel %vm2021, %v4586, %v4311
      %v4619 = vsel %vm2021, %v4587, %v4313
      %v4620 = vsel %vm2021, %v4588, %v4315
      %v4621 = vsel %vm2021, %v4589, %v4317
      %v4622 = vsel %vm2021, %v4590, %v4319
      %v4623 = vsel %vm2021, %v4591, %v4321
      %v4624 = vsel %vm2021, %v4592, %v4323
      %v4625 = vsel %vm2021, %v4593, %v4325
      %v4626 = vsel %vm2021, %v4594, %v4327
      %v4627 = vsel %vm2021, %v4595, %v4329
      %v4628 = vsel %vm2021, %v4596, %v4331
      %v4629 = vsel %vm2021, %v4597, %v4333
      %v4630 = vsel %vm2021, %v4598, %v4335
      %v4631 = vsel %vm2021, %v4599, %v4337
      %v4632 = vsel %vm2021, %v4600, %v4339
      %v4633 = vsel %vm2021, %v4601, %v4341
      %v4634 = vsel %vm2021, %v4602, %v4343
      %v4635 = vsel %vm2021, %v4603, %v4345
      %v4636 = vsel %vm2021, %v4604, %v4347
      %v4637 = vsel %vm2021, %v4605, %v4349
      %v4638 = vpack.c.bf16 %v4606, %v4606
      %v4639 = vpack.c.bf16 %v4607, %v4607
      %v4640 = vpack.c.bf16 %v4608, %v4608
      %v4641 = vpack.c.bf16 %v4609, %v4609
      %v4642 = vpack.c.bf16 %v4610, %v4610
      %v4643 = vpack.c.bf16 %v4611, %v4611
      %v4644 = vpack.c.bf16 %v4612, %v4612
      %v4645 = vpack.c.bf16 %v4613, %v4613
      %v4646 = vpack.c.bf16 %v4614, %v4614
      %v4647 = vpack.c.bf16 %v4615, %v4615
      %v4648 = vpack.c.bf16 %v4616, %v4616
      %v4649 = vpack.c.bf16 %v4617, %v4617
      %v4650 = vpack.c.bf16 %v4618, %v4618
      %v4651 = vpack.c.bf16 %v4619, %v4619
      %v4652 = vpack.c.bf16 %v4620, %v4620
      %v4653 = vpack.c.bf16 %v4621, %v4621
      %v4654 = vpack.c.bf16 %v4622, %v4622
      %v4655 = vpack.c.bf16 %v4623, %v4623
      %v4656 = vpack.c.bf16 %v4624, %v4624
      %v4657 = vpack.c.bf16 %v4625, %v4625
      %v4658 = vpack.c.bf16 %v4626, %v4626
      %v4659 = vpack.c.bf16 %v4627, %v4627
      %v4660 = vpack.c.bf16 %v4628, %v4628
      %v4661 = vpack.c.bf16 %v4629, %v4629
      %v4662 = vpack.c.bf16 %v4630, %v4630
      %v4663 = vpack.c.bf16 %v4631, %v4631
      %v4664 = vpack.c.bf16 %v4632, %v4632
      %v4665 = vpack.c.bf16 %v4633, %v4633
      %v4666 = vpack.c.bf16 %v4634, %v4634
      %v4667 = vpack.c.bf16 %v4635, %v4635
      %v4668 = vpack.c.bf16 %v4636, %v4636
      %v4669 = vpack.c.bf16 %v4637, %v4637
      %v4670 = vld [vmem:[%s4] sm:$0xf]
      %v4671 = vld [vmem:[%s4 + $0x4] sm:$0xf]
      %v4672 = vld [vmem:[%s4 + $0x8] sm:$0xf]
      %v4673 = vld [vmem:[%s4 + $0xc] sm:$0xf]
      %v4674 = vld [vmem:[%s4 + $0x10] sm:$0x3]
      %v4707 = vunpack.c.l.b16 %v4638
      %v4708 = vunpack.c.l.b16 %v4639
      %v4709 = vunpack.c.l.b16 %v4640
      %v4710 = vunpack.c.l.b16 %v4641
      %v4711 = vunpack.c.l.b16 %v4642
      %v4712 = vunpack.c.l.b16 %v4643
      %v4713 = vunpack.c.l.b16 %v4644
      %v4714 = vunpack.c.l.b16 %v4645
      %v4715 = vunpack.c.l.b16 %v4646
      %v4716 = vunpack.c.l.b16 %v4647
      %v4717 = vunpack.c.l.b16 %v4648
      %v4718 = vunpack.c.l.b16 %v4649
      %v4719 = vunpack.c.l.b16 %v4650
      %v4720 = vunpack.c.l.b16 %v4651
      %v4721 = vunpack.c.l.b16 %v4652
      %v4722 = vunpack.c.l.b16 %v4653
      %v4723 = vunpack.c.l.b16 %v4654
      %v4724 = vunpack.c.l.b16 %v4655
      %v4725 = vunpack.c.l.b16 %v4656
      %v4726 = vunpack.c.l.b16 %v4657
      %v4727 = vunpack.c.l.b16 %v4658
      %v4728 = vunpack.c.l.b16 %v4659
      %v4729 = vunpack.c.l.b16 %v4660
      %v4730 = vunpack.c.l.b16 %v4661
      %v4731 = vunpack.c.l.b16 %v4662
      %v4732 = vunpack.c.l.b16 %v4663
      %v4733 = vunpack.c.l.b16 %v4664
      %v4734 = vunpack.c.l.b16 %v4665
      %v4735 = vunpack.c.l.b16 %v4666
      %v4736 = vunpack.c.l.b16 %v4667
      %v4737 = vunpack.c.l.b16 %v4668
      %v4738 = vunpack.c.l.b16 %v4669
      %v4739 = vpack.c.b16 %v4708, %v4707
      %v4740 = vpack.c.b16 %v4710, %v4709
      %v4741 = vpack.c.b16 %v4712, %v4711
      %v4742 = vpack.c.b16 %v4714, %v4713
      %v4743 = vpack.c.b16 %v4716, %v4715
      %v4744 = vpack.c.b16 %v4718, %v4717
      %v4745 = vpack.c.b16 %v4720, %v4719
      %v4746 = vpack.c.b16 %v4722, %v4721
      %v4747 = vpack.c.b16 %v4724, %v4723
      %v4748 = vpack.c.b16 %v4726, %v4725
      %v4749 = vpack.c.b16 %v4728, %v4727
      %v4750 = vpack.c.b16 %v4730, %v4729
      %v4751 = vpack.c.b16 %v4732, %v4731
      %v4752 = vpack.c.b16 %v4734, %v4733
      %v4753 = vpack.c.b16 %v4736, %v4735
      %v4754 = vpack.c.b16 %v4738, %v4737
      %v4760 = vunpack.c.l.b16 %v4670
      %v4761 = vunpack.c.l.b16 %v4671
      %v4762 = vunpack.c.l.b16 %v4672
      %v4763 = vunpack.c.l.b16 %v4673
      %v4764 = vunpack.c.l.b16 %v4674
      %v4765 = vpack.c.b16 %v4761, %v4760
      %v4766 = vpack.c.b16 %v4763, %v4762
      %v4767 = vpack.c.b16 %v4764, %v4764
      %v4771 = vsel %vm2186, %v4739, 0
      %v4774 = vsel %vm2186, %v4740, 0
      %v4777 = vsel %vm2186, %v4741, 0
      %v4780 = vsel %vm2186, %v4742, 0
      %v4783 = vsel %vm2186, %v4743, 0
      %v4786 = vsel %vm2186, %v4744, 0
      %v4789 = vsel %vm2186, %v4745, 0
      %v4792 = vsel %vm2186, %v4746, 0
      %v4795 = vsel %vm2186, %v4747, 0
      %v4798 = vsel %vm2186, %v4748, 0
      %v4801 = vsel %vm2186, %v4749, 0
      %v4804 = vsel %vm2186, %v4750, 0
      %v4807 = vsel %vm2186, %v4751, 0
      %v4810 = vsel %vm2186, %v4752, 0
      %v4813 = vsel %vm2186, %v4753, 0
      %v4816 = vsel %vm2186, %v4754, 0
      %v4819 = vsel %vm2235, %v4767, 0
      %4821 = vmatpush.bf16.msra.mxu0 0
      %4822 = vmatpush.bf16.msra.mxu0 0
      %4823 = vmatpush.bf16.msra.mxu0 0
      %4824 = vmatpush.bf16.msra.mxu0 0
      %4825 = vmatpush.bf16.msra.mxu0 0
      %4826 = vmatpush.bf16.msra.mxu0 %v4819
      %4827 = vmatpush.bf16.msra.mxu0 %v4766
      %4828 = vmatpush.bf16.msra.mxu0 %v4765
      %4829 = vmatmul.bf16.gmra.mxu0 %v4771
      %v4830 = vpop.f32.mrf.mxu0
      %v4831 = vadd.f32 0.0, %v4830
      %v4832 = vpop.f32.mrf.mxu0
      %v4833 = vadd.f32 0.0, %v4832
      %4834 = vmatmul.bf16.gmra.mxu0 %v4774
      %v4835 = vpop.f32.mrf.mxu0
      %v4836 = vadd.f32 0.0, %v4835
      %v4837 = vpop.f32.mrf.mxu0
      %v4838 = vadd.f32 0.0, %v4837
      %4839 = vmatmul.bf16.gmra.mxu0 %v4777
      %v4840 = vpop.f32.mrf.mxu0
      %v4841 = vadd.f32 0.0, %v4840
      %v4842 = vpop.f32.mrf.mxu0
      %v4843 = vadd.f32 0.0, %v4842
      %4844 = vmatmul.bf16.gmra.mxu0 %v4780
      %v4845 = vpop.f32.mrf.mxu0
      %v4846 = vadd.f32 0.0, %v4845
      %v4847 = vpop.f32.mrf.mxu0
      %v4848 = vadd.f32 0.0, %v4847
      %4849 = vmatmul.bf16.gmra.mxu0 %v4783
      %v4850 = vpop.f32.mrf.mxu0
      %v4851 = vadd.f32 0.0, %v4850
      %v4852 = vpop.f32.mrf.mxu0
      %v4853 = vadd.f32 0.0, %v4852
      %4854 = vmatmul.bf16.gmra.mxu0 %v4786
      %v4855 = vpop.f32.mrf.mxu0
      %v4856 = vadd.f32 0.0, %v4855
      %v4857 = vpop.f32.mrf.mxu0
      %v4858 = vadd.f32 0.0, %v4857
      %4859 = vmatmul.bf16.gmra.mxu0 %v4789
      %v4860 = vpop.f32.mrf.mxu0
      %v4861 = vadd.f32 0.0, %v4860
      %v4862 = vpop.f32.mrf.mxu0
      %v4863 = vadd.f32 0.0, %v4862
      %4864 = vmatmul.bf16.gmra.mxu0 %v4792
      %v4865 = vpop.f32.mrf.mxu0
      %v4866 = vadd.f32 0.0, %v4865
      %v4867 = vpop.f32.mrf.mxu0
      %v4868 = vadd.f32 0.0, %v4867
      %4869 = vmatmul.bf16.gmra.mxu0 %v4795
      %v4870 = vpop.f32.mrf.mxu0
      %v4871 = vadd.f32 0.0, %v4870
      %v4872 = vpop.f32.mrf.mxu0
      %v4873 = vadd.f32 0.0, %v4872
      %4874 = vmatmul.bf16.gmra.mxu0 %v4798
      %v4875 = vpop.f32.mrf.mxu0
      %v4876 = vadd.f32 0.0, %v4875
      %v4877 = vpop.f32.mrf.mxu0
      %v4878 = vadd.f32 0.0, %v4877
      %4879 = vmatmul.bf16.gmra.mxu0 %v4801
      %v4880 = vpop.f32.mrf.mxu0
      %v4881 = vadd.f32 0.0, %v4880
      %v4882 = vpop.f32.mrf.mxu0
      %v4883 = vadd.f32 0.0, %v4882
      %4884 = vmatmul.bf16.gmra.mxu0 %v4804
      %v4885 = vpop.f32.mrf.mxu0
      %v4886 = vadd.f32 0.0, %v4885
      %v4887 = vpop.f32.mrf.mxu0
      %v4888 = vadd.f32 0.0, %v4887
      %4889 = vmatmul.bf16.gmra.mxu0 %v4807
      %v4890 = vpop.f32.mrf.mxu0
      %v4891 = vadd.f32 0.0, %v4890
      %v4892 = vpop.f32.mrf.mxu0
      %v4893 = vadd.f32 0.0, %v4892
      %4894 = vmatmul.bf16.gmra.mxu0 %v4810
      %v4895 = vpop.f32.mrf.mxu0
      %v4896 = vadd.f32 0.0, %v4895
      %v4897 = vpop.f32.mrf.mxu0
      %v4898 = vadd.f32 0.0, %v4897
      %4899 = vmatmul.bf16.gmra.mxu0 %v4813
      %v4900 = vpop.f32.mrf.mxu0
      %v4901 = vadd.f32 0.0, %v4900
      %v4902 = vpop.f32.mrf.mxu0
      %v4903 = vadd.f32 0.0, %v4902
      %4904 = vmatmul.bf16.gmra.mxu0 %v4816
      %v4905 = vpop.f32.mrf.mxu0
      %v4906 = vadd.f32 0.0, %v4905
      %v4907 = vpop.f32.mrf.mxu0
      %v4908 = vadd.f32 0.0, %v4907
      %4909 = vdwg.mxu0
      %v4911 = vperm.slane %v409, 0
      %v4913 = vmul.f32 %v4831, %v4911
      %v4914 = vmul.f32 %v4833, %v4911
      %v4915 = vmul.f32 %v4836, %v4911
      %v4916 = vmul.f32 %v4838, %v4911
      %v4917 = vmul.f32 %v4841, %v4911
      %v4918 = vmul.f32 %v4843, %v4911
      %v4919 = vmul.f32 %v4846, %v4911
      %v4920 = vmul.f32 %v4848, %v4911
      %v4921 = vmul.f32 %v4851, %v4911
      %v4922 = vmul.f32 %v4853, %v4911
      %v4923 = vmul.f32 %v4856, %v4911
      %v4924 = vmul.f32 %v4858, %v4911
      %v4925 = vmul.f32 %v4861, %v4911
      %v4926 = vmul.f32 %v4863, %v4911
      %v4927 = vmul.f32 %v4866, %v4911
      %v4928 = vmul.f32 %v4868, %v4911
      %v4929 = vmul.f32 %v4871, %v4911
      %v4930 = vmul.f32 %v4873, %v4911
      %v4931 = vmul.f32 %v4876, %v4911
      %v4932 = vmul.f32 %v4878, %v4911
      %v4933 = vmul.f32 %v4881, %v4911
      %v4934 = vmul.f32 %v4883, %v4911
      %v4935 = vmul.f32 %v4886, %v4911
      %v4936 = vmul.f32 %v4888, %v4911
      %v4937 = vmul.f32 %v4891, %v4911
      %v4938 = vmul.f32 %v4893, %v4911
      %v4939 = vmul.f32 %v4896, %v4911
      %v4940 = vmul.f32 %v4898, %v4911
      %v4941 = vmul.f32 %v4901, %v4911
      %v4942 = vmul.f32 %v4903, %v4911
      %v4943 = vmul.f32 %v4906, %v4911
      %v4944 = vmul.f32 %v4908, %v4911
      %v4946 = vperm.slane %v410, 0
      %v4948 = vadd.f32 %v4913, %v4946
      %v4949 = vadd.f32 %v4914, %v4946
      %v4950 = vadd.f32 %v4915, %v4946
      %v4951 = vadd.f32 %v4916, %v4946
      %v4952 = vadd.f32 %v4917, %v4946
      %v4953 = vadd.f32 %v4918, %v4946
      %v4954 = vadd.f32 %v4919, %v4946
      %v4955 = vadd.f32 %v4920, %v4946
      %v4956 = vadd.f32 %v4921, %v4946
      %v4957 = vadd.f32 %v4922, %v4946
      %v4958 = vadd.f32 %v4923, %v4946
      %v4959 = vadd.f32 %v4924, %v4946
      %v4960 = vadd.f32 %v4925, %v4946
      %v4961 = vadd.f32 %v4926, %v4946
      %v4962 = vadd.f32 %v4927, %v4946
      %v4963 = vadd.f32 %v4928, %v4946
      %v4964 = vadd.f32 %v4929, %v4946
      %v4965 = vadd.f32 %v4930, %v4946
      %v4966 = vadd.f32 %v4931, %v4946
      %v4967 = vadd.f32 %v4932, %v4946
      %v4968 = vadd.f32 %v4933, %v4946
      %v4969 = vadd.f32 %v4934, %v4946
      %v4970 = vadd.f32 %v4935, %v4946
      %v4971 = vadd.f32 %v4936, %v4946
      %v4972 = vadd.f32 %v4937, %v4946
      %v4973 = vadd.f32 %v4938, %v4946
      %v4974 = vadd.f32 %v4939, %v4946
      %v4975 = vadd.f32 %v4940, %v4946
      %v4976 = vadd.f32 %v4941, %v4946
      %v4977 = vadd.f32 %v4942, %v4946
      %v4978 = vadd.f32 %v4943, %v4946
      %v4979 = vadd.f32 %v4944, %v4946
      %v4980 = vmul.f32 %v4948, %v2572
      %v4981 = vmul.f32 %v4949, %v2587
      %v4982 = vmul.f32 %v4950, %v2602
      %v4983 = vmul.f32 %v4951, %v2617
      %v4984 = vmul.f32 %v4952, %v2632
      %v4985 = vmul.f32 %v4953, %v2647
      %v4986 = vmul.f32 %v4954, %v2662
      %v4987 = vmul.f32 %v4955, %v2677
      %v4988 = vmul.f32 %v4956, %v2692
      %v4989 = vmul.f32 %v4957, %v2707
      %v4990 = vmul.f32 %v4958, %v2722
      %v4991 = vmul.f32 %v4959, %v2737
      %v4992 = vmul.f32 %v4960, %v2752
      %v4993 = vmul.f32 %v4961, %v2767
      %v4994 = vmul.f32 %v4962, %v2782
      %v4995 = vmul.f32 %v4963, %v2797
      %v4996 = vmul.f32 %v4964, %v2812
      %v4997 = vmul.f32 %v4965, %v2827
      %v4998 = vmul.f32 %v4966, %v2842
      %v4999 = vmul.f32 %v4967, %v2857
      %v5000 = vmul.f32 %v4968, %v2872
      %v5001 = vmul.f32 %v4969, %v2887
      %v5002 = vmul.f32 %v4970, %v2902
      %v5003 = vmul.f32 %v4971, %v2917
      %v5004 = vmul.f32 %v4972, %v2932
      %v5005 = vmul.f32 %v4973, %v2947
      %v5006 = vmul.f32 %v4974, %v2962
      %v5007 = vmul.f32 %v4975, %v2977
      %v5008 = vmul.f32 %v4976, %v2992
      %v5009 = vmul.f32 %v4977, %v3007
      %v5010 = vmul.f32 %v4978, %v3022
      %v5011 = vmul.f32 %v4979, %v3037
      %5012 = vst.msk [vmem:[%s445 + $0x1] sm:$0xff] %vm361, %v4980
      %5013 = vst.msk [vmem:[%s445 + $0x9] sm:$0xff] %vm361, %v4981
      %5014 = vst.msk [vmem:[%s445 + $0x19] sm:$0xff] %vm361, %v4982
      %5015 = vst.msk [vmem:[%s445 + $0x21] sm:$0xff] %vm361, %v4983
      %5016 = vst.msk [vmem:[%s445 + $0x31] sm:$0xff] %vm361, %v4984
      %5017 = vst.msk [vmem:[%s445 + $0x39] sm:$0xff] %vm361, %v4985
      %5018 = vst.msk [vmem:[%s445 + $0x49] sm:$0xff] %vm361, %v4986
      %5019 = vst.msk [vmem:[%s445 + $0x51] sm:$0xff] %vm361, %v4987
      %5020 = vst.msk [vmem:[%s445 + $0x61] sm:$0xff] %vm361, %v4988
      %5021 = vst.msk [vmem:[%s445 + $0x69] sm:$0xff] %vm361, %v4989
      %5022 = vst.msk [vmem:[%s445 + $0x79] sm:$0xff] %vm361, %v4990
      %5023 = vst.msk [vmem:[%s445 + $0x81] sm:$0xff] %vm361, %v4991
      %5024 = vst.msk [vmem:[%s445 + $0x91] sm:$0xff] %vm361, %v4992
      %5025 = vst.msk [vmem:[%s445 + $0x99] sm:$0xff] %vm361, %v4993
      %5026 = vst.msk [vmem:[%s445 + $0xa9] sm:$0xff] %vm361, %v4994
      %5027 = vst.msk [vmem:[%s445 + $0xb1] sm:$0xff] %vm361, %v4995
      %5028 = vst.msk [vmem:[%s445 + $0xc1] sm:$0xff] %vm361, %v4996
      %5029 = vst.msk [vmem:[%s445 + $0xc9] sm:$0xff] %vm361, %v4997
      %5030 = vst.msk [vmem:[%s445 + $0xd9] sm:$0xff] %vm361, %v4998
      %5031 = vst.msk [vmem:[%s445 + $0xe1] sm:$0xff] %vm361, %v4999
      %5032 = vst.msk [vmem:[%s445 + $0xf1] sm:$0xff] %vm361, %v5000
      %5033 = vst.msk [vmem:[%s445 + $0xf9] sm:$0xff] %vm361, %v5001
      %5034 = vst.msk [vmem:[%s445 + $0x109] sm:$0xff] %vm361, %v5002
      %5035 = vst.msk [vmem:[%s445 + $0x111] sm:$0xff] %vm361, %v5003
      %5036 = vst.msk [vmem:[%s445 + $0x121] sm:$0xff] %vm361, %v5004
      %5037 = vst.msk [vmem:[%s445 + $0x129] sm:$0xff] %vm361, %v5005
      %5038 = vst.msk [vmem:[%s445 + $0x139] sm:$0xff] %vm361, %v5006
      %5039 = vst.msk [vmem:[%s445 + $0x141] sm:$0xff] %vm361, %v5007
      %5040 = vst.msk [vmem:[%s445 + $0x151] sm:$0xff] %vm361, %v5008
      %5041 = vst.msk [vmem:[%s445 + $0x159] sm:$0xff] %vm361, %v5009
      %5042 = vst.msk [vmem:[%s445 + $0x169] sm:$0xff] %vm361, %v5010
      %5043 = vst.msk [vmem:[%s445 + $0x171] sm:$0xff] %vm361, %v5011
      %v5044 = vld [vmem:[#allocation2] ss:$2 sm:$0xff]
      %s5045 = scalar_lea.vmem [#allocation2], 48
      %v5046 = vld [vmem:[%s5045] ss:$2 sm:$0xff]
      %s5047 = scalar_lea.vmem [#allocation2], 96
      %v5048 = vld [vmem:[%s5047] ss:$2 sm:$0xff]
      %s5049 = scalar_lea.vmem [#allocation2], 144
      %v5050 = vld [vmem:[%s5049] ss:$2 sm:$0xff]
      %s5051 = scalar_lea.vmem [#allocation2], 192
      %v5052 = vld [vmem:[%s5051] ss:$2 sm:$0xff]
      %s5053 = scalar_lea.vmem [#allocation2], 240
      %v5054 = vld [vmem:[%s5053] ss:$2 sm:$0xff]
      %s5055 = scalar_lea.vmem [#allocation2], 288
      %v5056 = vld [vmem:[%s5055] ss:$2 sm:$0xff]
      %s5057 = scalar_lea.vmem [#allocation2], 336
      %v5058 = vld [vmem:[%s5057] ss:$2 sm:$0xff]
      %s5059 = scalar_lea.vmem [#allocation2], 1
      %v5060 = vld [vmem:[%s5059] ss:$2 sm:$0xff]
      %s5061 = scalar_lea.vmem [#allocation2], 49
      %v5062 = vld [vmem:[%s5061] ss:$2 sm:$0xff]
      %s5063 = scalar_lea.vmem [#allocation2], 97
      %v5064 = vld [vmem:[%s5063] ss:$2 sm:$0xff]
      %s5065 = scalar_lea.vmem [#allocation2], 145
      %v5066 = vld [vmem:[%s5065] ss:$2 sm:$0xff]
      %s5067 = scalar_lea.vmem [#allocation2], 193
      %v5068 = vld [vmem:[%s5067] ss:$2 sm:$0xff]
      %s5069 = scalar_lea.vmem [#allocation2], 241
      %v5070 = vld [vmem:[%s5069] ss:$2 sm:$0xff]
      %s5071 = scalar_lea.vmem [#allocation2], 289
      %v5072 = vld [vmem:[%s5071] ss:$2 sm:$0xff]
      %s5073 = scalar_lea.vmem [#allocation2], 337
      %v5074 = vld [vmem:[%s5073] ss:$2 sm:$0xff]
      %s5075 = scalar_lea.vmem [#allocation2], 2
      %v5076 = vld [vmem:[%s5075] ss:$2 sm:$0xff]
      %s5077 = scalar_lea.vmem [#allocation2], 50
      %v5078 = vld [vmem:[%s5077] ss:$2 sm:$0xff]
      %s5079 = scalar_lea.vmem [#allocation2], 98
      %v5080 = vld [vmem:[%s5079] ss:$2 sm:$0xff]
      %s5081 = scalar_lea.vmem [#allocation2], 146
      %v5082 = vld [vmem:[%s5081] ss:$2 sm:$0xff]
      %s5083 = scalar_lea.vmem [#allocation2], 194
      %v5084 = vld [vmem:[%s5083] ss:$2 sm:$0xff]
      %s5085 = scalar_lea.vmem [#allocation2], 242
      %v5086 = vld [vmem:[%s5085] ss:$2 sm:$0xff]
      %s5087 = scalar_lea.vmem [#allocation2], 290
      %v5088 = vld [vmem:[%s5087] ss:$2 sm:$0xff]
      %s5089 = scalar_lea.vmem [#allocation2], 338
      %v5090 = vld [vmem:[%s5089] ss:$2 sm:$0xff]
      %v5091 = vld [vmem:[%s445] ss:$2 sm:$0xff]
      %s5092 = scalar_lea.vmem %s445, 48 [#allocation2]
      %v5093 = vld [vmem:[%s5092] ss:$2 sm:$0xff]
      %s5094 = scalar_lea.vmem %s445, 96 [#allocation2]
      %v5095 = vld [vmem:[%s5094] ss:$2 sm:$0xff]
      %s5096 = scalar_lea.vmem %s445, 144 [#allocation2]
      %v5097 = vld [vmem:[%s5096] ss:$2 sm:$0xff]
      %s5098 = scalar_lea.vmem %s445, 192 [#allocation2]
      %v5099 = vld [vmem:[%s5098] ss:$2 sm:$0xff]
      %s5100 = scalar_lea.vmem %s445, 240 [#allocation2]
      %v5101 = vld [vmem:[%s5100] ss:$2 sm:$0xff]
      %s5102 = scalar_lea.vmem %s445, 288 [#allocation2]
      %v5103 = vld [vmem:[%s5102] ss:$2 sm:$0xff]
      %s5104 = scalar_lea.vmem %s445, 336 [#allocation2]
      %v5105 = vld [vmem:[%s5104] ss:$2 sm:$0xff]
      %s5106 = scalar_lea.vmem %s445, 1 [#allocation2]
      %v5107 = vld [vmem:[%s5106] ss:$2 sm:$0xff]
      %s5108 = scalar_lea.vmem %s445, 49 [#allocation2]
      %v5109 = vld [vmem:[%s5108] ss:$2 sm:$0xff]
      %s5110 = scalar_lea.vmem %s445, 97 [#allocation2]
      %v5111 = vld [vmem:[%s5110] ss:$2 sm:$0xff]
      %s5112 = scalar_lea.vmem %s445, 145 [#allocation2]
      %v5113 = vld [vmem:[%s5112] ss:$2 sm:$0xff]
      %s5114 = scalar_lea.vmem %s445, 193 [#allocation2]
      %v5115 = vld [vmem:[%s5114] ss:$2 sm:$0xff]
      %s5116 = scalar_lea.vmem %s445, 241 [#allocation2]
      %v5117 = vld [vmem:[%s5116] ss:$2 sm:$0xff]
      %s5118 = scalar_lea.vmem %s445, 289 [#allocation2]
      %v5119 = vld [vmem:[%s5118] ss:$2 sm:$0xff]
      %s5120 = scalar_lea.vmem %s445, 337 [#allocation2]
      %v5121 = vld [vmem:[%s5120] ss:$2 sm:$0xff]
      %s5122 = scalar_lea.vmem %s445, 2 [#allocation2]
      %v5123 = vld [vmem:[%s5122] ss:$2 sm:$0xff]
      %s5124 = scalar_lea.vmem %s445, 50 [#allocation2]
      %v5125 = vld [vmem:[%s5124] ss:$2 sm:$0xff]
      %s5126 = scalar_lea.vmem %s445, 98 [#allocation2]
      %v5127 = vld [vmem:[%s5126] ss:$2 sm:$0xff]
      %s5128 = scalar_lea.vmem %s445, 146 [#allocation2]
      %v5129 = vld [vmem:[%s5128] ss:$2 sm:$0xff]
      %s5130 = scalar_lea.vmem %s445, 194 [#allocation2]
      %v5131 = vld [vmem:[%s5130] ss:$2 sm:$0xff]
      %s5132 = scalar_lea.vmem %s445, 242 [#allocation2]
      %v5133 = vld [vmem:[%s5132] ss:$2 sm:$0xff]
      %s5134 = scalar_lea.vmem %s445, 290 [#allocation2]
      %v5135 = vld [vmem:[%s5134] ss:$2 sm:$0xff]
      %s5136 = scalar_lea.vmem %s445, 338 [#allocation2]
      %v5137 = vld [vmem:[%s5136] ss:$2 sm:$0xff]
      %v5138 = vld [vmem:[%s670] ss:$2 sm:$0xff]
      %s5139 = scalar_lea.vmem %s670, 48 [#allocation2]
      %v5140 = vld [vmem:[%s5139] ss:$2 sm:$0xff]
      %s5141 = scalar_lea.vmem %s670, 96 [#allocation2]
      %v5142 = vld [vmem:[%s5141] ss:$2 sm:$0xff]
      %s5143 = scalar_lea.vmem %s670, 144 [#allocation2]
      %v5144 = vld [vmem:[%s5143] ss:$2 sm:$0xff]
      %s5145 = scalar_lea.vmem %s670, 192 [#allocation2]
      %v5146 = vld [vmem:[%s5145] ss:$2 sm:$0xff]
      %s5147 = scalar_lea.vmem %s670, 240 [#allocation2]
      %v5148 = vld [vmem:[%s5147] ss:$2 sm:$0xff]
      %s5149 = scalar_lea.vmem %s670, 288 [#allocation2]
      %v5150 = vld [vmem:[%s5149] ss:$2 sm:$0xff]
      %s5151 = scalar_lea.vmem %s670, 336 [#allocation2]
      %v5152 = vld [vmem:[%s5151] ss:$2 sm:$0xff]
      %s5153 = scalar_lea.vmem %s670, 1 [#allocation2]
      %v5154 = vld [vmem:[%s5153] ss:$2 sm:$0xff]
      %s5155 = scalar_lea.vmem %s670, 49 [#allocation2]
      %v5156 = vld [vmem:[%s5155] ss:$2 sm:$0xff]
      %s5157 = scalar_lea.vmem %s670, 97 [#allocation2]
      %v5158 = vld [vmem:[%s5157] ss:$2 sm:$0xff]
      %s5159 = scalar_lea.vmem %s670, 145 [#allocation2]
      %v5160 = vld [vmem:[%s5159] ss:$2 sm:$0xff]
      %s5161 = scalar_lea.vmem %s670, 193 [#allocation2]
      %v5162 = vld [vmem:[%s5161] ss:$2 sm:$0xff]
      %s5163 = scalar_lea.vmem %s670, 241 [#allocation2]
      %v5164 = vld [vmem:[%s5163] ss:$2 sm:$0xff]
      %s5165 = scalar_lea.vmem %s670, 289 [#allocation2]
      %v5166 = vld [vmem:[%s5165] ss:$2 sm:$0xff]
      %s5167 = scalar_lea.vmem %s670, 337 [#allocation2]
      %v5168 = vld [vmem:[%s5167] ss:$2 sm:$0xff]
      %s5169 = scalar_lea.vmem %s670, 2 [#allocation2]
      %v5170 = vld [vmem:[%s5169] ss:$2 sm:$0xff]
      %s5171 = scalar_lea.vmem %s670, 50 [#allocation2]
      %v5172 = vld [vmem:[%s5171] ss:$2 sm:$0xff]
      %s5173 = scalar_lea.vmem %s670, 98 [#allocation2]
      %v5174 = vld [vmem:[%s5173] ss:$2 sm:$0xff]
      %s5175 = scalar_lea.vmem %s670, 146 [#allocation2]
      %v5176 = vld [vmem:[%s5175] ss:$2 sm:$0xff]
      %s5177 = scalar_lea.vmem %s670, 194 [#allocation2]
      %v5178 = vld [vmem:[%s5177] ss:$2 sm:$0xff]
      %s5179 = scalar_lea.vmem %s670, 242 [#allocation2]
      %v5180 = vld [vmem:[%s5179] ss:$2 sm:$0xff]
      %s5181 = scalar_lea.vmem %s670, 290 [#allocation2]
      %v5182 = vld [vmem:[%s5181] ss:$2 sm:$0xff]
      %s5183 = scalar_lea.vmem %s670, 338 [#allocation2]
      %v5184 = vld [vmem:[%s5183] ss:$2 sm:$0xff]
      %5193 = vrot.lane.b32.xlu0 %v5060, 4
      %v5194 = vpop.permute.xlu0 %5193
      %5195 = vrot.lane.b32.xlu0 %v5062, 4
      %v5196 = vpop.permute.xlu0 %5195
      %5197 = vrot.lane.b32.xlu0 %v5064, 4
      %v5198 = vpop.permute.xlu0 %5197
      %5199 = vrot.lane.b32.xlu0 %v5066, 4
      %v5200 = vpop.permute.xlu0 %5199
      %5201 = vrot.lane.b32.xlu0 %v5068, 4
      %v5202 = vpop.permute.xlu0 %5201
      %5203 = vrot.lane.b32.xlu0 %v5070, 4
      %v5204 = vpop.permute.xlu0 %5203
      %5205 = vrot.lane.b32.xlu0 %v5072, 4
      %v5206 = vpop.permute.xlu0 %5205
      %5207 = vrot.lane.b32.xlu0 %v5074, 4
      %v5208 = vpop.permute.xlu0 %5207
      %5225 = vrot.lane.b32.xlu0 %v5076, 8
      %v5226 = vpop.permute.xlu0 %5225
      %5227 = vrot.lane.b32.xlu0 %v5078, 8
      %v5228 = vpop.permute.xlu0 %5227
      %5229 = vrot.lane.b32.xlu0 %v5080, 8
      %v5230 = vpop.permute.xlu0 %5229
      %5231 = vrot.lane.b32.xlu0 %v5082, 8
      %v5232 = vpop.permute.xlu0 %5231
      %5233 = vrot.lane.b32.xlu0 %v5084, 8
      %v5234 = vpop.permute.xlu0 %5233
      %5235 = vrot.lane.b32.xlu0 %v5086, 8
      %v5236 = vpop.permute.xlu0 %5235
      %5237 = vrot.lane.b32.xlu0 %v5088, 8
      %v5238 = vpop.permute.xlu0 %5237
      %5239 = vrot.lane.b32.xlu0 %v5090, 8
      %v5240 = vpop.permute.xlu0 %5239
      %5257 = vrot.lane.b32.xlu0 %v5091, 12
      %v5258 = vpop.permute.xlu0 %5257
      %5259 = vrot.lane.b32.xlu0 %v5093, 12
      %v5260 = vpop.permute.xlu0 %5259
      %5261 = vrot.lane.b32.xlu0 %v5095, 12
      %v5262 = vpop.permute.xlu0 %5261
      %5263 = vrot.lane.b32.xlu0 %v5097, 12
      %v5264 = vpop.permute.xlu0 %5263
      %5265 = vrot.lane.b32.xlu0 %v5099, 12
      %v5266 = vpop.permute.xlu0 %5265
      %5267 = vrot.lane.b32.xlu0 %v5101, 12
      %v5268 = vpop.permute.xlu0 %5267
      %5269 = vrot.lane.b32.xlu0 %v5103, 12
      %v5270 = vpop.permute.xlu0 %5269
      %5271 = vrot.lane.b32.xlu0 %v5105, 12
      %v5272 = vpop.permute.xlu0 %5271
      %5289 = vrot.lane.b32.xlu0 %v5107, 16
      %v5290 = vpop.permute.xlu0 %5289
      %5291 = vrot.lane.b32.xlu0 %v5109, 16
      %v5292 = vpop.permute.xlu0 %5291
      %5293 = vrot.lane.b32.xlu0 %v5111, 16
      %v5294 = vpop.permute.xlu0 %5293
      %5295 = vrot.lane.b32.xlu0 %v5113, 16
      %v5296 = vpop.permute.xlu0 %5295
      %5297 = vrot.lane.b32.xlu0 %v5115, 16
      %v5298 = vpop.permute.xlu0 %5297
      %5299 = vrot.lane.b32.xlu0 %v5117, 16
      %v5300 = vpop.permute.xlu0 %5299
      %5301 = vrot.lane.b32.xlu0 %v5119, 16
      %v5302 = vpop.permute.xlu0 %5301
      %5303 = vrot.lane.b32.xlu0 %v5121, 16
      %v5304 = vpop.permute.xlu0 %5303
      %5321 = vrot.lane.b32.xlu0 %v5123, 20
      %v5322 = vpop.permute.xlu0 %5321
      %5323 = vrot.lane.b32.xlu0 %v5125, 20
      %v5324 = vpop.permute.xlu0 %5323
      %5325 = vrot.lane.b32.xlu0 %v5127, 20
      %v5326 = vpop.permute.xlu0 %5325
      %5327 = vrot.lane.b32.xlu0 %v5129, 20
      %v5328 = vpop.permute.xlu0 %5327
      %5329 = vrot.lane.b32.xlu0 %v5131, 20
      %v5330 = vpop.permute.xlu0 %5329
      %5331 = vrot.lane.b32.xlu0 %v5133, 20
      %v5332 = vpop.permute.xlu0 %5331
      %5333 = vrot.lane.b32.xlu0 %v5135, 20
      %v5334 = vpop.permute.xlu0 %5333
      %5335 = vrot.lane.b32.xlu0 %v5137, 20
      %v5336 = vpop.permute.xlu0 %5335
      %5353 = vrot.lane.b32.xlu0 %v5138, 24
      %v5354 = vpop.permute.xlu0 %5353
      %5355 = vrot.lane.b32.xlu0 %v5140, 24
      %v5356 = vpop.permute.xlu0 %5355
      %5357 = vrot.lane.b32.xlu0 %v5142, 24
      %v5358 = vpop.permute.xlu0 %5357
      %5359 = vrot.lane.b32.xlu0 %v5144, 24
      %v5360 = vpop.permute.xlu0 %5359
      %5361 = vrot.lane.b32.xlu0 %v5146, 24
      %v5362 = vpop.permute.xlu0 %5361
      %5363 = vrot.lane.b32.xlu0 %v5148, 24
      %v5364 = vpop.permute.xlu0 %5363
      %5365 = vrot.lane.b32.xlu0 %v5150, 24
      %v5366 = vpop.permute.xlu0 %5365
      %5367 = vrot.lane.b32.xlu0 %v5152, 24
      %v5368 = vpop.permute.xlu0 %5367
      %5385 = vrot.lane.b32.xlu0 %v5154, 28
      %v5386 = vpop.permute.xlu0 %5385
      %5387 = vrot.lane.b32.xlu0 %v5156, 28
      %v5388 = vpop.permute.xlu0 %5387
      %5389 = vrot.lane.b32.xlu0 %v5158, 28
      %v5390 = vpop.permute.xlu0 %5389
      %5391 = vrot.lane.b32.xlu0 %v5160, 28
      %v5392 = vpop.permute.xlu0 %5391
      %5393 = vrot.lane.b32.xlu0 %v5162, 28
      %v5394 = vpop.permute.xlu0 %5393
      %5395 = vrot.lane.b32.xlu0 %v5164, 28
      %v5396 = vpop.permute.xlu0 %5395
      %5397 = vrot.lane.b32.xlu0 %v5166, 28
      %v5398 = vpop.permute.xlu0 %5397
      %5399 = vrot.lane.b32.xlu0 %v5168, 28
      %v5400 = vpop.permute.xlu0 %5399
      %5417 = vrot.lane.b32.xlu0 %v5170, 32
      %v5418 = vpop.permute.xlu0 %5417
      %5419 = vrot.lane.b32.xlu0 %v5172, 32
      %v5420 = vpop.permute.xlu0 %5419
      %5421 = vrot.lane.b32.xlu0 %v5174, 32
      %v5422 = vpop.permute.xlu0 %5421
      %5423 = vrot.lane.b32.xlu0 %v5176, 32
      %v5424 = vpop.permute.xlu0 %5423
      %5425 = vrot.lane.b32.xlu0 %v5178, 32
      %v5426 = vpop.permute.xlu0 %5425
      %5427 = vrot.lane.b32.xlu0 %v5180, 32
      %v5428 = vpop.permute.xlu0 %5427
      %5429 = vrot.lane.b32.xlu0 %v5182, 32
      %v5430 = vpop.permute.xlu0 %5429
      %5431 = vrot.lane.b32.xlu0 %v5184, 32
      %v5432 = vpop.permute.xlu0 %5431
      %v5441 = vsel %vm361, %v5044, %v5194
      %v5442 = vsel %vm361, %v5046, %v5196
      %v5443 = vsel %vm361, %v5048, %v5198
      %v5444 = vsel %vm361, %v5050, %v5200
      %v5445 = vsel %vm361, %v5052, %v5202
      %v5446 = vsel %vm361, %v5054, %v5204
      %v5447 = vsel %vm361, %v5056, %v5206
      %v5448 = vsel %vm361, %v5058, %v5208
      %v5449 = vsel %vm1823, %v5441, %v5226
      %v5450 = vsel %vm1823, %v5442, %v5228
      %v5451 = vsel %vm1823, %v5443, %v5230
      %v5452 = vsel %vm1823, %v5444, %v5232
      %v5453 = vsel %vm1823, %v5445, %v5234
      %v5454 = vsel %vm1823, %v5446, %v5236
      %v5455 = vsel %vm1823, %v5447, %v5238
      %v5456 = vsel %vm1823, %v5448, %v5240
      %v5457 = vsel %vm1856, %v5449, %v5258
      %v5458 = vsel %vm1856, %v5450, %v5260
      %v5459 = vsel %vm1856, %v5451, %v5262
      %v5460 = vsel %vm1856, %v5452, %v5264
      %v5461 = vsel %vm1856, %v5453, %v5266
      %v5462 = vsel %vm1856, %v5454, %v5268
      %v5463 = vsel %vm1856, %v5455, %v5270
      %v5464 = vsel %vm1856, %v5456, %v5272
      %v5465 = vsel %vm1889, %v5457, %v5290
      %v5466 = vsel %vm1889, %v5458, %v5292
      %v5467 = vsel %vm1889, %v5459, %v5294
      %v5468 = vsel %vm1889, %v5460, %v5296
      %v5469 = vsel %vm1889, %v5461, %v5298
      %v5470 = vsel %vm1889, %v5462, %v5300
      %v5471 = vsel %vm1889, %v5463, %v5302
      %v5472 = vsel %vm1889, %v5464, %v5304
      %v5473 = vsel %vm1922, %v5465, %v5322
      %v5474 = vsel %vm1922, %v5466, %v5324
      %v5475 = vsel %vm1922, %v5467, %v5326
      %v5476 = vsel %vm1922, %v5468, %v5328
      %v5477 = vsel %vm1922, %v5469, %v5330
      %v5478 = vsel %vm1922, %v5470, %v5332
      %v5479 = vsel %vm1922, %v5471, %v5334
      %v5480 = vsel %vm1922, %v5472, %v5336
      %v5481 = vsel %vm1955, %v5473, %v5354
      %v5482 = vsel %vm1955, %v5474, %v5356
      %v5483 = vsel %vm1955, %v5475, %v5358
      %v5484 = vsel %vm1955, %v5476, %v5360
      %v5485 = vsel %vm1955, %v5477, %v5362
      %v5486 = vsel %vm1955, %v5478, %v5364
      %v5487 = vsel %vm1955, %v5479, %v5366
      %v5488 = vsel %vm1955, %v5480, %v5368
      %v5489 = vsel %vm1988, %v5481, %v5386
      %v5490 = vsel %vm1988, %v5482, %v5388
      %v5491 = vsel %vm1988, %v5483, %v5390
      %v5492 = vsel %vm1988, %v5484, %v5392
      %v5493 = vsel %vm1988, %v5485, %v5394
      %v5494 = vsel %vm1988, %v5486, %v5396
      %v5495 = vsel %vm1988, %v5487, %v5398
      %v5496 = vsel %vm1988, %v5488, %v5400
      %v5497 = vsel %vm2021, %v5489, %v5418
      %v5498 = vsel %vm2021, %v5490, %v5420
      %v5499 = vsel %vm2021, %v5491, %v5422
      %v5500 = vsel %vm2021, %v5492, %v5424
      %v5501 = vsel %vm2021, %v5493, %v5426
      %v5502 = vsel %vm2021, %v5494, %v5428
      %v5503 = vsel %vm2021, %v5495, %v5430
      %v5504 = vsel %vm2021, %v5496, %v5432
      %v5505 = vpack.c.bf16 %v5497, %v5497
      %v5506 = vpack.c.bf16 %v5498, %v5498
      %v5507 = vpack.c.bf16 %v5499, %v5499
      %v5508 = vpack.c.bf16 %v5500, %v5500
      %v5509 = vpack.c.bf16 %v5501, %v5501
      %v5510 = vpack.c.bf16 %v5502, %v5502
      %v5511 = vpack.c.bf16 %v5503, %v5503
      %v5512 = vpack.c.bf16 %v5504, %v5504
      %v5513 = vld [vmem:[%s7] sm:$0xf]
      %v5514 = vld [vmem:[%s7 + $0x4] sm:$0xf]
      %v5515 = vld [vmem:[%s7 + $0x8] sm:$0xf]
      %v5516 = vld [vmem:[%s7 + $0xc] sm:$0xf]
      %v5517 = vld [vmem:[%s7 + $0x10] sm:$0x3]
      %v5526 = vunpack.c.l.b16 %v5505
      %v5527 = vunpack.c.l.b16 %v5506
      %v5528 = vunpack.c.l.b16 %v5507
      %v5529 = vunpack.c.l.b16 %v5508
      %v5530 = vunpack.c.l.b16 %v5509
      %v5531 = vunpack.c.l.b16 %v5510
      %v5532 = vunpack.c.l.b16 %v5511
      %v5533 = vunpack.c.l.b16 %v5512
      %v5534 = vpack.c.b16 %v5527, %v5526
      %v5535 = vpack.c.b16 %v5529, %v5528
      %v5536 = vpack.c.b16 %v5531, %v5530
      %v5537 = vpack.c.b16 %v5533, %v5532
      %v5543 = vunpack.c.l.b16 %v5513
      %v5544 = vunpack.c.l.b16 %v5514
      %v5545 = vunpack.c.l.b16 %v5515
      %v5546 = vunpack.c.l.b16 %v5516
      %v5547 = vunpack.c.l.b16 %v5517
      %v5548 = vpack.c.b16 %v5544, %v5543
      %v5549 = vpack.c.b16 %v5546, %v5545
      %v5550 = vpack.c.b16 %v5547, %v5547
      %v5554 = vsel %vm2186, %v5534, 0
      %v5557 = vsel %vm2186, %v5535, 0
      %v5560 = vsel %vm2186, %v5536, 0
      %v5563 = vsel %vm2186, %v5537, 0
      %v5566 = vsel %vm2235, %v5550, 0
      %5568 = vmatpush.bf16.msra.mxu0 0
      %5569 = vmatpush.bf16.msra.mxu0 0
      %5570 = vmatpush.bf16.msra.mxu0 0
      %5571 = vmatpush.bf16.msra.mxu0 0
      %5572 = vmatpush.bf16.msra.mxu0 0
      %5573 = vmatpush.bf16.msra.mxu0 %v5566
      %5574 = vmatpush.bf16.msra.mxu0 %v5549
      %5575 = vmatpush.bf16.msra.mxu0 %v5548
      %5576 = vmatmul.bf16.gmra.mxu0 %v5554
      %v5577 = vpop.f32.mrf.mxu0
      %v5578 = vadd.f32 0.0, %v5577
      %v5579 = vpop.f32.mrf.mxu0
      %v5580 = vadd.f32 0.0, %v5579
      %5581 = vmatmul.bf16.gmra.mxu0 %v5557
      %v5582 = vpop.f32.mrf.mxu0
      %v5583 = vadd.f32 0.0, %v5582
      %v5584 = vpop.f32.mrf.mxu0
      %v5585 = vadd.f32 0.0, %v5584
      %5586 = vmatmul.bf16.gmra.mxu0 %v5560
      %v5587 = vpop.f32.mrf.mxu0
      %v5588 = vadd.f32 0.0, %v5587
      %v5589 = vpop.f32.mrf.mxu0
      %v5590 = vadd.f32 0.0, %v5589
      %5591 = vmatmul.bf16.gmra.mxu0 %v5563
      %v5592 = vpop.f32.mrf.mxu0
      %v5593 = vadd.f32 0.0, %v5592
      %v5594 = vpop.f32.mrf.mxu0
      %v5595 = vadd.f32 0.0, %v5594
      %5596 = vdwg.mxu0
      %v5598 = vperm.slane %v411, 0
      %v5600 = vmul.f32 %v5578, %v5598
      %v5601 = vmul.f32 %v5580, %v5598
      %v5602 = vmul.f32 %v5583, %v5598
      %v5603 = vmul.f32 %v5585, %v5598
      %v5604 = vmul.f32 %v5588, %v5598
      %v5605 = vmul.f32 %v5590, %v5598
      %v5606 = vmul.f32 %v5593, %v5598
      %v5607 = vmul.f32 %v5595, %v5598
      %v5609 = vperm.slane %v412, 0
      %v5611 = vadd.f32 %v5600, %v5609
      %v5612 = vadd.f32 %v5601, %v5609
      %v5613 = vadd.f32 %v5602, %v5609
      %v5614 = vadd.f32 %v5603, %v5609
      %v5615 = vadd.f32 %v5604, %v5609
      %v5616 = vadd.f32 %v5605, %v5609
      %v5617 = vadd.f32 %v5606, %v5609
      %v5618 = vadd.f32 %v5607, %v5609
      %5619 = vst.msk [vmem:[%s359] sm:$0xff] %vm361, %v5611
      %5620 = vst.msk [vmem:[%s359 + $0x8] sm:$0xff] %vm361, %v5612
      %5621 = vst.msk [vmem:[%s359 + $0x10] sm:$0xff] %vm361, %v5613
      %5622 = vst.msk [vmem:[%s359 + $0x18] sm:$0xff] %vm361, %v5614
      %5623 = vst.msk [vmem:[%s359 + $0x20] sm:$0xff] %vm361, %v5615
      %5624 = vst.msk [vmem:[%s359 + $0x28] sm:$0xff] %vm361, %v5616
      %5625 = vst.msk [vmem:[%s359 + $0x30] sm:$0xff] %vm361, %v5617
      %5626 = vst.msk [vmem:[%s359 + $0x38] sm:$0xff] %vm361, %v5618
      %p5627 = scmp.lt.s32.totalorder %s21, 1
      %s5628 = scalar_select %p5627, %s21, 1
      %s5629 = smul.addr %s5628, 8
      %s5630 = smul.addr %s5629, 8
      %s5631 = scalar_lea.vmem %s10, %s5630
      // Predicated region
      $region61: #{conv3_forward.1} parent=59 // pred_check
        %p5632 = pneg %p254
      $region62: #{conv3_forward.1} parent=59 // pred_check_branch
        %5634 = sbr.rel (%p5632) target = $region64
      $region63: #{conv3_forward.1} parent=59 // pred_region
        _
      $region64: #{conv3_forward.1} parent=59 // pred_fallthru
        _
    $region60: #{conv3_forward.1} parent=5 // pred_fallthru
      _
    %p5635 = scmp.le.s32.totalorder 2, %s16
    // Predicated region
    $region65: #{conv3_forward.1} parent=5 // pred_check
      %p5636 = pneg %p5635
    $region66: #{conv3_forward.1} parent=5 // pred_check_branch
      %5638 = sbr.rel (%p5636) target = $region68
    $region67: #{conv3_forward.1} parent=5 // pred_region
      %s5639 = ssub.s32 %s16, 2
      // Predicated region
      $region69: #{conv3_forward.1} parent=67 // pred_check
        %p5640 = pneg %p260
      $region70: #{conv3_forward.1} parent=67 // pred_check_branch
        %5642 = sbr.rel (%p5640) target = $region72
      $region71: #{conv3_forward.1} parent=67 // pred_region
        %p5643 = scmp.lt.s32.totalorder %s22, 1
        %s5644 = scalar_select %p5643, %s22, 1
        %s5645 = smul.addr %s5644, 8
        %s5646 = smul.addr %s5645, 8
        %s5647 = scalar_lea.vmem %s10, %s5646
      $region72: #{conv3_forward.1} parent=67 // pred_fallthru
        _
    $region68: #{conv3_forward.1} parent=5 // pred_fallthru
      _
  $region6: #{conv3_forward.1} parent=0 // loop_footer
    %s20 = sadd.s32 1, %s16
  $region7: #{conv3_forward.1} parent=0 // loop_footer_branch
    %15 = sbr.rel target = $region3
  $region8: #{conv3_forward.1} parent=0 // loop_exit
    _

</llo_original>
